<compile_context>
chip_gen: v5e
topology: v5e:2x2
jax: 0.10.0
libtpu: 0.0.40
codegen_flags: <defaults>
</compile_context>

<pallas_src>
import math

import jax
import jax.numpy as jnp
from jax.experimental import pallas as pl
from jax.experimental.pallas import tpu as pltpu


# ---------------------- first Linear + ReLU ----------------------
def _linear_relu_kernel(x_ref, w_ref, b_ref, o_ref):
    y = jnp.dot(x_ref[...].astype(jnp.bfloat16), w_ref[...],
                preferred_element_type=jnp.float32)
    o_ref[...] = jnp.maximum(y + b_ref[...], 0.0)


def linear_relu(x, w, b):
    B = x.shape[0]
    N = w.shape[1]
    return pl.pallas_call(
        _linear_relu_kernel,
        out_shape=jax.ShapeDtypeStruct((B, N), jnp.float32),
    )(x, w, b)


# ---------------- GRU (batch_first) with fused output ReLU ----------------
def _gru_kernel(x_ref, wir_ref, wiz_ref, win_ref, whr_ref, whz_ref, whn_ref,
                br_ref, bz_ref, bin_ref, bhn_ref, o_ref,
                gxr_sc, gxz_sc, gxn_sc):
    # Per batch element (grid over B).  x_ref: (L, In); o_ref: (L, H).
    # Gate order r, z, n (PyTorch).  br/bz are (b_ih + b_hh) pre-summed; the n
    # gate keeps b_in / b_hn separate (PyTorch GRU semantics).
    L, In = x_ref.shape
    H = whr_ref.shape[0]

    # ---- hoisted input projection: one matmul per gate, biases folded in ----
    if In == 1:  # degenerate contraction -> broadcast multiply (hoisted too)
        xf = x_ref[...].astype(jnp.float32)                          # (L, 1)
        gxr_sc[...] = xf * wir_ref[...].astype(jnp.float32) + br_ref[...]
        gxz_sc[...] = xf * wiz_ref[...].astype(jnp.float32) + bz_ref[...]
        gxn_sc[...] = xf * win_ref[...].astype(jnp.float32) + bin_ref[...]
    else:
        xb = x_ref[...].astype(jnp.bfloat16)                         # (L, In)
        gxr_sc[...] = jnp.dot(xb, wir_ref[...],
                              preferred_element_type=jnp.float32) + br_ref[...]
        gxz_sc[...] = jnp.dot(xb, wiz_ref[...],
                              preferred_element_type=jnp.float32) + bz_ref[...]
        gxn_sc[...] = jnp.dot(xb, win_ref[...],
                              preferred_element_type=jnp.float32) + bin_ref[...]

    # loop-invariant recurrence weights, loaded once (bf16: half the footprint)
    whr = whr_ref[...]
    whz = whz_ref[...]
    whn = whn_ref[...]
    bhn = bhn_ref[...]

    def step(t, h):
        hb = h.astype(jnp.bfloat16)                                  # (1, H)
        ghr = jnp.dot(hb, whr, preferred_element_type=jnp.float32)
        ghz = jnp.dot(hb, whz, preferred_element_type=jnp.float32)
        ghn = jnp.dot(hb, whn, preferred_element_type=jnp.float32)
        r = jax.nn.sigmoid(gxr_sc[pl.ds(t, 1), :] + ghr)
        z = jax.nn.sigmoid(gxz_sc[pl.ds(t, 1), :] + ghz)
        n = jnp.tanh(gxn_sc[pl.ds(t, 1), :] + r * (ghn + bhn))
        h_new = (1.0 - z) * n + z * h
        # act1 applies to the GRU *output*; the carried state stays pre-ReLU.
        o_ref[pl.ds(t, 1), :] = jnp.maximum(h_new, 0.0)
        return h_new

    h = jnp.zeros((1, H), jnp.float32)
    if L <= 32:                      # short static trip count -> full unroll
        for t in range(L):
            h = step(t, h)
    else:
        jax.lax.fori_loop(0, L, step, h, unroll=True)


def gru_relu(x, p):
    """x: (B, L, In) f32 -> ReLU(GRU(x)): (B, L, H) f32.  Grid over B."""
    B, L, In = x.shape
    H = p["whh_r"].shape[0]
    wih_spec = pl.BlockSpec((In, H), lambda b: (0, 0))
    whh_spec = pl.BlockSpec((H, H), lambda b: (0, 0))
    bias_spec = pl.BlockSpec((1, H), lambda b: (0, 0))
    return pl.pallas_call(
        _gru_kernel,
        out_shape=jax.ShapeDtypeStruct((B, L, H), jnp.float32),
        grid=(B,),
        in_specs=[pl.BlockSpec((None, L, In), lambda b: (b, 0, 0)),
                  wih_spec, wih_spec, wih_spec,
                  whh_spec, whh_spec, whh_spec,
                  bias_spec, bias_spec, bias_spec, bias_spec],
        out_specs=pl.BlockSpec((None, L, H), lambda b: (b, 0, 0)),
        scratch_shapes=[pltpu.VMEM((L, H), jnp.float32),
                        pltpu.VMEM((L, H), jnp.float32),
                        pltpu.VMEM((L, H), jnp.float32)],
        compiler_params=pltpu.CompilerParams(
            dimension_semantics=("parallel",)),
    )(x, p["wih_r"], p["wih_z"], p["wih_n"],
      p["whh_r"], p["whh_z"], p["whh_n"],
      p["b_r"], p["b_z"], p["b_in"], p["b_hn"])


# -------- ConvTranspose1d (polyphase) + ReLU, optional fused final 1x1 conv --------
def _make_convtr_kernel(S, P, L_in, nq, fuse_final):
    # Polyphase ConvTranspose1d with kernel_size = 2*S.  Output row n = q*S + r
    # gets exactly two taps:
    #   y[q*S + r] = x[q + d_r] @ W[c_r] + x[q + d_r - 1] @ W[c_r + S] + bias
    # with c_r = (r + P) % S, d_r = (r + P) // S; out-of-range x rows are zero.
    # Phase results are concatenated on the lane axis; the (nq, S*C) block is a
    # free row-major reshape away from the (L_out, C) output.
    def kernel(*refs):
        if fuse_final:
            x_ref, w_ref, b_ref, fw_ref, fb_ref, o_ref = refs
        else:
            x_ref, w_ref, b_ref, o_ref = refs
        C_in = x_ref.shape[-1]
        xv = x_ref[...]                                        # (L_in, C_in) f32
        zhead = jnp.zeros((1, C_in), xv.dtype)
        ztail = jnp.zeros((nq + 1 - L_in, C_in), xv.dtype)
        xp = jnp.concatenate([zhead, xv, ztail], axis=0)       # (nq + 2, C_in)

        bias = b_ref[...]
        if fuse_final:
            fw = fw_ref[...]
            fb = fb_ref[...]

        cols = []
        for r in range(S):                                     # static phase loop
            c = (r + P) % S
            d = (r + P) // S
            xa = xp[1 + d:1 + d + nq, :].astype(jnp.bfloat16)  # x[q + d]
            xb = xp[d:d + nq, :].astype(jnp.bfloat16)          # x[q + d - 1]
            acc = jnp.dot(xa, w_ref[c], preferred_element_type=jnp.float32)
            acc = acc + jnp.dot(xb, w_ref[c + S],
                                preferred_element_type=jnp.float32)
            y = jnp.maximum(acc + bias, 0.0)                   # act2 (ReLU)
            if fuse_final:                                     # final 1x1 Conv1d
                y = jnp.dot(y.astype(jnp.bfloat16), fw,
                            preferred_element_type=jnp.float32) + fb
            cols.append(y)
        o_ref[...] = jnp.concatenate(cols, axis=-1)            # (nq, S * C_fin)
    return kernel


def conv_transpose1d_relu(x, p, *, stride, kernel_size, padding, final=None):
    B, L_in, C_in = x.shape
    S, Pd, K = stride, padding, kernel_size
    assert K == 2 * S, "polyphase kernel assumes kernel_size == 2 * stride"
    C_out = p["w"].shape[-1]
    L_out = (L_in - 1) * S - 2 * Pd + K
    nq = -(-L_out // S)                                        # rows per phase
    C_fin = final["w"].shape[-1] if final is not None else C_out

    in_specs = [pl.BlockSpec((None, L_in, C_in), lambda b: (b, 0, 0)),
                pl.BlockSpec((K, C_in, C_out), lambda b: (0, 0, 0)),
                pl.BlockSpec((1, C_out), lambda b: (0, 0))]
    args = [x, p["w"], p["b"]]
    if final is not None:
        in_specs += [pl.BlockSpec((C_out, C_fin), lambda b: (0, 0)),
                     pl.BlockSpec((1, C_fin), lambda b: (0, 0))]
        args += [final["w"], final["b"]]

    y = pl.pallas_call(
        _make_convtr_kernel(S, Pd, L_in, nq, final is not None),
        out_shape=jax.ShapeDtypeStruct((B, nq, S * C_fin), jnp.float32),
        grid=(B,),
        in_specs=in_specs,
        out_specs=pl.BlockSpec((None, nq, S * C_fin), lambda b: (b, 0, 0)),
        compiler_params=pltpu.CompilerParams(
            dimension_semantics=("parallel",)),
    )(*args)
    y = y.reshape(B, nq * S, C_fin)        # free row-major reshape -> (B, L', C)
    if nq * S != L_out:                    # odd-factor ragged tail
        y = y[:, :L_out, :]
    return y


# ---------------------- parameter construction ----------------------
def init_generator_params(key, latent_dim, seq_dim, start_len, factor, target_len):
    assert target_len % factor == 0 and factor > 0 and start_len < target_len

    keys = iter(jax.random.split(key, 256))

    def nrm(shape, dtype=jnp.float32, scale=0.1):
        v = scale * jax.random.normal(next(keys), shape, dtype=jnp.float32)
        return v.astype(dtype)

    K = 2 * factor
    params = {
        "first_w": nrm((latent_dim, start_len), jnp.bfloat16),  # Linear as (in, out)
        "first_b": nrm((1, start_len)),
    }

    def gru_params(in_dim, hid):
        # Per-gate layout: wih_g == weight_ih_l0[g].T (in_dim, hid), same for whh.
        # b_r / b_z are the pre-summed (b_ih + b_hh); n gate keeps both biases.
        return {
            "wih_r": nrm((in_dim, hid), jnp.bfloat16),
            "wih_z": nrm((in_dim, hid), jnp.bfloat16),
            "wih_n": nrm((in_dim, hid), jnp.bfloat16),
            "whh_r": nrm((hid, hid), jnp.bfloat16),
            "whh_z": nrm((hid, hid), jnp.bfloat16),
            "whh_n": nrm((hid, hid), jnp.bfloat16),
            "b_r": nrm((1, hid)),
            "b_z": nrm((1, hid)),
            "b_in": nrm((1, hid)),
            "b_hn": nrm((1, hid)),
        }

    def convtr_params(c_in, c_out):
        # Tap-major layout: w[k] == PyTorch ConvTranspose1d weight[:, :, k] (C_in, C_out).
        return {"w": nrm((K, c_in, c_out), jnp.bfloat16), "b": nrm((1, c_out))}

    grus, ups = [], []
    tmp_dim = target_len * seq_dim
    cur_len = start_len
    grus.append(gru_params(1, tmp_dim))
    n_stages = int(math.log(target_len // start_len, factor))
    for _ in range(n_stages):
        ups.append(convtr_params(tmp_dim, tmp_dim // factor))
        tmp_dim //= factor
        cur_len *= factor
        if cur_len < target_len:
            grus.append(gru_params(tmp_dim, tmp_dim))

    params["grus"] = grus
    params["ups"] = ups
    params["final_w"] = nrm((tmp_dim, seq_dim), jnp.bfloat16)  # 1x1 Conv1d as (C_in, C_out)
    params["final_b"] = nrm((1, seq_dim))
    return params


# ---------------------- full forward ----------------------
def generator_forward(params, x, *, start_len, factor):
    B = x.shape[0]
    S, K, Pd = factor, 2 * factor, factor // 2
    h = linear_relu(x, params["first_w"], params["first_b"])   # first_lay + first_act
    y = h.reshape(B, start_len, 1)                             # x.view(B, -1, 1)
    n_stages = len(params["ups"])
    for i in range(n_stages):
        y = gru_relu(y, params["grus"][i])                     # rnn + act1
        final = ({"w": params["final_w"], "b": params["final_b"]}
                 if i == n_stages - 1 else None)               # fuse final 1x1 conv
        y = conv_transpose1d_relu(y, params["ups"][i],
                                  stride=S, kernel_size=K, padding=Pd,
                                  final=final)                 # ups + act2 (+ final_lay)
    return y


if __name__ == "__main__":
    latent_dim, seq_dim, start_len, factor, target_len = 32, 4, 4, 2, 16
    batch = 2
    key = jax.random.PRNGKey(0)
    pkey, xkey = jax.random.split(key)
    params = init_generator_params(pkey, latent_dim, seq_dim, start_len,
                                   factor, target_len)
    x = jax.random.normal(xkey, (batch, latent_dim), dtype=jnp.float32)

    fwd = jax.jit(generator_forward, static_argnames=("start_len", "factor"))
    out = jax.block_until_ready(fwd(params, x, start_len=start_len, factor=factor))

    assert out.shape == (batch, target_len, seq_dim), out.shape
    assert bool(jnp.all(jnp.isfinite(out)))
    print("KERNEL_OK")
</pallas_src>

<mosaic_0001>
module attributes {stable_mosaic.version = 11 : i64} {
  func.func @_linear_relu_kernel(%arg0: memref<2x32xf32, #tpu.memory_space<vmem>>, %arg1: memref<32x4xbf16, #tpu.memory_space<vmem>>, %arg2: memref<1x4xf32, #tpu.memory_space<vmem>>, %arg3: memref<2x4xf32, #tpu.memory_space<vmem>>) attributes {dimension_semantics = [], scalar_prefetch = 0 : i64, scratch_operands = 0 : i64, tpu.core_type = #tpu.core_type<tc>} {
    %c0 = arith.constant 0 : index
    %c0_0 = arith.constant 0 : index
    %0 = vector.load %arg0[%c0, %c0_0] : memref<2x32xf32, #tpu.memory_space<vmem>>, vector<2x32xf32>
    %1 = arith.truncf %0 : vector<2x32xf32> to vector<2x32xbf16>
    %c0_1 = arith.constant 0 : index
    %c0_2 = arith.constant 0 : index
    %2 = vector.load %arg1[%c0_1, %c0_2] : memref<32x4xbf16, #tpu.memory_space<vmem>>, vector<32x4xbf16>
    %cst = arith.constant dense<0.000000e+00> : vector<2x4xf32>
    %3 = tpu.matmul %1, %2, %cst {dimension_numbers = #tpu.dot_dimension_numbers<[1], [0], [0], [1], [0, 0, 1, 1], [], []>} : vector<2x32xbf16>, vector<32x4xbf16>, vector<2x4xf32> -> vector<2x4xf32>
    %c0_3 = arith.constant 0 : index
    %c0_4 = arith.constant 0 : index
    %4 = vector.load %arg2[%c0_3, %c0_4] : memref<1x4xf32, #tpu.memory_space<vmem>>, vector<1x4xf32>
    %5 = vector.broadcast %4 : vector<1x4xf32> to vector<2x4xf32>
    %6 = arith.addf %3, %5 : vector<2x4xf32>
    %cst_5 = arith.constant 0.000000e+00 : f32
    %7 = vector.broadcast %cst_5 : f32 to vector<2x4xf32>
    %8 = arith.maximumf %6, %7 : vector<2x4xf32>
    %c0_6 = arith.constant 0 : index
    %c0_7 = arith.constant 0 : index
    %9 = vector.load %arg3[%c0_6, %c0_7] : memref<2x4xf32, #tpu.memory_space<vmem>>, vector<2x4xf32>
    tpu.vector_store %arg3[%c0_6, %c0_7], %8 {strides = array<i32>} : memref<2x4xf32, #tpu.memory_space<vmem>>, vector<2x4xf32>,
    return
  }
}

module attributes {stable_mosaic.version = 11 : i64} {
  func.func @_gru_kernel(%arg0: i32, %arg1: memref<1x4x1xf32, #tpu.memory_space<vmem>>, %arg2: memref<1x64xbf16, #tpu.memory_space<vmem>>, %arg3: memref<1x64xbf16, #tpu.memory_space<vmem>>, %arg4: memref<1x64xbf16, #tpu.memory_space<vmem>>, %arg5: memref<64x64xbf16, #tpu.memory_space<vmem>>, %arg6: memref<64x64xbf16, #tpu.memory_space<vmem>>, %arg7: memref<64x64xbf16, #tpu.memory_space<vmem>>, %arg8: memref<1x64xf32, #tpu.memory_space<vmem>>, %arg9: memref<1x64xf32, #tpu.memory_space<vmem>>, %arg10: memref<1x64xf32, #tpu.memory_space<vmem>>, %arg11: memref<1x64xf32, #tpu.memory_space<vmem>>, %arg12: memref<1x4x64xf32, #tpu.memory_space<vmem>>, %arg13: memref<4x64xf32, #tpu.memory_space<vmem>>, %arg14: memref<4x64xf32, #tpu.memory_space<vmem>>, %arg15: memref<4x64xf32, #tpu.memory_space<vmem>>) attributes {dimension_semantics = [#tpu.dimension_semantics<parallel>], iteration_bounds = array<i64: 2>, scalar_prefetch = 0 : i64, scratch_operands = 3 : i64, tpu.core_type = #tpu.core_type<tc>, window_params = [{transform_indices = @transform_0, window_bounds = array<i64: 1, 4, 1>}, {pipeline_mode = #tpu.pipeline_mode<synchronous>, transform_indices = @transform_1, window_bounds = array<i64: 1, 64>}, {pipeline_mode = #tpu.pipeline_mode<synchronous>, transform_indices = @transform_2, window_bounds = array<i64: 1, 64>}, {pipeline_mode = #tpu.pipeline_mode<synchronous>, transform_indices = @transform_3, window_bounds = array<i64: 1, 64>}, {pipeline_mode = #tpu.pipeline_mode<synchronous>, transform_indices = @transform_4, window_bounds = array<i64: 64, 64>}, {pipeline_mode = #tpu.pipeline_mode<synchronous>, transform_indices = @transform_5, window_bounds = array<i64: 64, 64>}, {pipeline_mode = #tpu.pipeline_mode<synchronous>, transform_indices = @transform_6, window_bounds = array<i64: 64, 64>}, {pipeline_mode = #tpu.pipeline_mode<synchronous>, transform_indices = @transform_7, window_bounds = array<i64: 1, 64>}, {pipeline_mode = #tpu.pipeline_mode<synchronous>, transform_indices = @transform_8, window_bounds = array<i64: 1, 64>}, {pipeline_mode = #tpu.pipeline_mode<synchronous>, transform_indices = @transform_9, window_bounds = array<i64: 1, 64>}, {pipeline_mode = #tpu.pipeline_mode<synchronous>, transform_indices = @transform_10, window_bounds = array<i64: 1, 64>}, {transform_indices = @transform_11, window_bounds = array<i64: 1, 4, 64>}]} {
    %c0 = arith.constant 0 : index
    %c0_0 = arith.constant 0 : index
    %c0_1 = arith.constant 0 : index
    %0 = vector.load %arg1[%c0, %c0_0, %c0_1] : memref<1x4x1xf32, #tpu.memory_space<vmem>>, vector<1x4x1xf32>
    %1 = vector.shape_cast %0 : vector<1x4x1xf32> to vector<4x1xf32>
    %c0_2 = arith.constant 0 : index
    %c0_3 = arith.constant 0 : index
    %2 = vector.load %arg2[%c0_2, %c0_3] : memref<1x64xbf16, #tpu.memory_space<vmem>>, vector<1x64xbf16>
    %3 = arith.extf %2 : vector<1x64xbf16> to vector<1x64xf32>
    %4 = vector.broadcast %1 : vector<4x1xf32> to vector<4x64xf32>
    %5 = vector.broadcast %3 : vector<1x64xf32> to vector<4x64xf32>
    %6 = arith.mulf %4, %5 : vector<4x64xf32>
    %c0_4 = arith.constant 0 : index
    %c0_5 = arith.constant 0 : index
    %7 = vector.load %arg8[%c0_4, %c0_5] : memref<1x64xf32, #tpu.memory_space<vmem>>, vector<1x64xf32>
    %8 = vector.broadcast %7 : vector<1x64xf32> to vector<4x64xf32>
    %9 = arith.addf %6, %8 : vector<4x64xf32>
    %c0_6 = arith.constant 0 : index
    %c0_7 = arith.constant 0 : index
    %10 = vector.load %arg13[%c0_6, %c0_7] : memref<4x64xf32, #tpu.memory_space<vmem>>, vector<4x64xf32>
    tpu.vector_store %arg13[%c0_6, %c0_7], %9 {strides = array<i32>} : memref<4x64xf32, #tpu.memory_space<vmem>>, vector<4x64xf32>,
    %c0_8 = arith.constant 0 : index
    %c0_9 = arith.constant 0 : index
    %11 = vector.load %arg3[%c0_8, %c0_9] : memref<1x64xbf16, #tpu.memory_space<vmem>>, vector<1x64xbf16>
    %12 = arith.extf %11 : vector<1x64xbf16> to vector<1x64xf32>
    %13 = vector.broadcast %1 : vector<4x1xf32> to vector<4x64xf32>
    %14 = vector.broadcast %12 : vector<1x64xf32> to vector<4x64xf32>
    %15 = arith.mulf %13, %14 : vector<4x64xf32>
    %c0_10 = arith.constant 0 : index
    %c0_11 = arith.constant 0 : index
    %16 = vector.load %arg9[%c0_10, %c0_11] : memref<1x64xf32, #tpu.memory_space<vmem>>, vector<1x64xf32>
    %17 = vector.broadcast %16 : vector<1x64xf32> to vector<4x64xf32>
    %18 = arith.addf %15, %17 : vector<4x64xf32>
    %c0_12 = arith.constant 0 : index
    %c0_13 = arith.constant 0 : index
    %19 = vector.load %arg14[%c0_12, %c0_13] : memref<4x64xf32, #tpu.memory_space<vmem>>, vector<4x64xf32>
    tpu.vector_store %arg14[%c0_12, %c0_13], %18 {strides = array<i32>} : memref<4x64xf32, #tpu.memory_space<vmem>>, vector<4x64xf32>,
    %c0_14 = arith.constant 0 : index
    %c0_15 = arith.constant 0 : index
    %20 = vector.load %arg4[%c0_14, %c0_15] : memref<1x64xbf16, #tpu.memory_space<vmem>>, vector<1x64xbf16>
    %21 = arith.extf %20 : vector<1x64xbf16> to vector<1x64xf32>
    %22 = vector.broadcast %1 : vector<4x1xf32> to vector<4x64xf32>
    %23 = vector.broadcast %21 : vector<1x64xf32> to vector<4x64xf32>
    %24 = arith.mulf %22, %23 : vector<4x64xf32>
    %c0_16 = arith.constant 0 : index
    %c0_17 = arith.constant 0 : index
    %25 = vector.load %arg10[%c0_16, %c0_17] : memref<1x64xf32, #tpu.memory_space<vmem>>, vector<1x64xf32>
    %26 = vector.broadcast %25 : vector<1x64xf32> to vector<4x64xf32>
    %27 = arith.addf %24, %26 : vector<4x64xf32>
    %c0_18 = arith.constant 0 : index
    %c0_19 = arith.constant 0 : index
    %28 = vector.load %arg15[%c0_18, %c0_19] : memref<4x64xf32, #tpu.memory_space<vmem>>, vector<4x64xf32>
    tpu.vector_store %arg15[%c0_18, %c0_19], %27 {strides = array<i32>} : memref<4x64xf32, #tpu.memory_space<vmem>>, vector<4x64xf32>,
    %c0_20 = arith.constant 0 : index
    %c0_21 = arith.constant 0 : index
    %29 = vector.load %arg5[%c0_20, %c0_21] : memref<64x64xbf16, #tpu.memory_space<vmem>>, vector<64x64xbf16>
    %c0_22 = arith.constant 0 : index
    %c0_23 = arith.constant 0 : index
    %30 = vector.load %arg6[%c0_22, %c0_23] : memref<64x64xbf16, #tpu.memory_space<vmem>>, vector<64x64xbf16>
    %c0_24 = arith.constant 0 : index
    %c0_25 = arith.constant 0 : index
    %31 = vector.load %arg7[%c0_24, %c0_25] : memref<64x64xbf16, #tpu.memory_space<vmem>>, vector<64x64xbf16>
    %c0_26 = arith.constant 0 : index
    %c0_27 = arith.constant 0 : index
    %32 = vector.load %arg11[%c0_26, %c0_27] : memref<1x64xf32, #tpu.memory_space<vmem>>, vector<1x64xf32>
    %cst = arith.constant 0.000000e+00 : f32
    %33 = vector.broadcast %cst : f32 to vector<1x64xf32>
    %34 = arith.truncf %33 : vector<1x64xf32> to vector<1x64xbf16>
    %cst_28 = arith.constant dense<0.000000e+00> : vector<1x64xf32>
    %35 = tpu.matmul %34, %29, %cst_28 {dimension_numbers = #tpu.dot_dimension_numbers<[1], [0], [0], [1], [0, 0, 1, 1], [], []>} : vector<1x64xbf16>, vector<64x64xbf16>, vector<1x64xf32> -> vector<1x64xf32>
    %cst_29 = arith.constant dense<0.000000e+00> : vector<1x64xf32>
    %36 = tpu.matmul %34, %30, %cst_29 {dimension_numbers = #tpu.dot_dimension_numbers<[1], [0], [0], [1], [0, 0, 1, 1], [], []>} : vector<1x64xbf16>, vector<64x64xbf16>, vector<1x64xf32> -> vector<1x64xf32>
    %cst_30 = arith.constant dense<0.000000e+00> : vector<1x64xf32>
    %37 = tpu.matmul %34, %31, %cst_30 {dimension_numbers = #tpu.dot_dimension_numbers<[1], [0], [0], [1], [0, 0, 1, 1], [], []>} : vector<1x64xbf16>, vector<64x64xbf16>, vector<1x64xf32> -> vector<1x64xf32>
    %c0_31 = arith.constant 0 : index
    %c0_32 = arith.constant 0 : index
    %38 = vector.load %arg13[%c0_31, %c0_32] : memref<4x64xf32, #tpu.memory_space<vmem>>, vector<1x64xf32>
    %39 = arith.addf %38, %35 : vector<1x64xf32>
    %40 = arith.negf %39 : vector<1x64xf32>
    %41 = math.exp %40 : vector<1x64xf32>
    %cst_33 = arith.constant 1.000000e+00 : f32
    %42 = vector.broadcast %cst_33 : f32 to vector<1x64xf32>
    %43 = arith.addf %42, %41 : vector<1x64xf32>
    %44 = arith.divf %42, %43 : vector<1x64xf32>
    %c0_34 = arith.constant 0 : index
    %c0_35 = arith.constant 0 : index
    %45 = vector.load %arg14[%c0_34, %c0_35] : memref<4x64xf32, #tpu.memory_space<vmem>>, vector<1x64xf32>
    %46 = arith.addf %45, %36 : vector<1x64xf32>
    %47 = arith.negf %46 : vector<1x64xf32>
    %48 = math.exp %47 : vector<1x64xf32>
    %cst_36 = arith.constant 1.000000e+00 : f32
    %49 = vector.broadcast %cst_36 : f32 to vector<1x64xf32>
    %50 = arith.addf %49, %48 : vector<1x64xf32>
    %51 = arith.divf %49, %50 : vector<1x64xf32>
    %c0_37 = arith.constant 0 : index
    %c0_38 = arith.constant 0 : index
    %52 = vector.load %arg15[%c0_37, %c0_38] : memref<4x64xf32, #tpu.memory_space<vmem>>, vector<1x64xf32>
    %53 = arith.addf %37, %32 : vector<1x64xf32>
    %54 = arith.mulf %44, %53 : vector<1x64xf32>
    %55 = arith.addf %52, %54 : vector<1x64xf32>
    %56 = math.tanh %55 : vector<1x64xf32>
    %cst_39 = arith.constant 1.000000e+00 : f32
    %57 = vector.broadcast %cst_39 : f32 to vector<1x64xf32>
    %58 = arith.subf %57, %51 : vector<1x64xf32>
    %59 = arith.mulf %58, %56 : vector<1x64xf32>
    %60 = arith.mulf %51, %33 : vector<1x64xf32>
    %61 = arith.addf %59, %60 : vector<1x64xf32>
    %cst_40 = arith.constant 0.000000e+00 : f32
    %62 = vector.broadcast %cst_40 : f32 to vector<1x64xf32>
    %63 = arith.maximumf %61, %62 : vector<1x64xf32>
    %c0_41 = arith.constant 0 : index
    %c0_42 = arith.constant 0 : index
    %c0_43 = arith.constant 0 : index
    %64 = vector.load %arg12[%c0_41, %c0_42, %c0_43] : memref<1x4x64xf32, #tpu.memory_space<vmem>>, vector<1x1x64xf32>
    %65 = vector.shape_cast %64 : vector<1x1x64xf32> to vector<1x64xf32>
    %66 = vector.shape_cast %63 : vector<1x64xf32> to vector<1x1x64xf32>
    tpu.vector_store %arg12[%c0_41, %c0_42, %c0_43], %66 {strides = array<i32>} : memref<1x4x64xf32, #tpu.memory_space<vmem>>, vector<1x1x64xf32>,
    %67 = arith.truncf %61 : vector<1x64xf32> to vector<1x64xbf16>
    %cst_44 = arith.constant dense<0.000000e+00> : vector<1x64xf32>
    %68 = tpu.matmul %67, %29, %cst_44 {dimension_numbers = #tpu.dot_dimension_numbers<[1], [0], [0], [1], [0, 0, 1, 1], [], []>} : vector<1x64xbf16>, vector<64x64xbf16>, vector<1x64xf32> -> vector<1x64xf32>
    %cst_45 = arith.constant dense<0.000000e+00> : vector<1x64xf32>
    %69 = tpu.matmul %67, %30, %cst_45 {dimension_numbers = #tpu.dot_dimension_numbers<[1], [0], [0], [1], [0, 0, 1, 1], [], []>} : vector<1x64xbf16>, vector<64x64xbf16>, vector<1x64xf32> -> vector<1x64xf32>
    %cst_46 = arith.constant dense<0.000000e+00> : vector<1x64xf32>
    %70 = tpu.matmul %67, %31, %cst_46 {dimension_numbers = #tpu.dot_dimension_numbers<[1], [0], [0], [1], [0, 0, 1, 1], [], []>} : vector<1x64xbf16>, vector<64x64xbf16>, vector<1x64xf32> -> vector<1x64xf32>
    %c1 = arith.constant 1 : index
    %c0_47 = arith.constant 0 : index
    %71 = vector.load %arg13[%c1, %c0_47] : memref<4x64xf32, #tpu.memory_space<vmem>>, vector<1x64xf32>
    %72 = arith.addf %71, %68 : vector<1x64xf32>
    %73 = arith.negf %72 : vector<1x64xf32>
    %74 = math.exp %73 : vector<1x64xf32>
    %cst_48 = arith.constant 1.000000e+00 : f32
    %75 = vector.broadcast %cst_48 : f32 to vector<1x64xf32>
    %76 = arith.addf %75, %74 : vector<1x64xf32>
    %77 = arith.divf %75, %76 : vector<1x64xf32>
    %c1_49 = arith.constant 1 : index
    %c0_50 = arith.constant 0 : index
    %78 = vector.load %arg14[%c1_49, %c0_50] : memref<4x64xf32, #tpu.memory_space<vmem>>, vector<1x64xf32>
    %79 = arith.addf %78, %69 : vector<1x64xf32>
    %80 = arith.negf %79 : vector<1x64xf32>
    %81 = math.exp %80 : vector<1x64xf32>
    %cst_51 = arith.constant 1.000000e+00 : f32
    %82 = vector.broadcast %cst_51 : f32 to vector<1x64xf32>
    %83 = arith.addf %82, %81 : vector<1x64xf32>
    %84 = arith.divf %82, %83 : vector<1x64xf32>
    %c1_52 = arith.constant 1 : index
    %c0_53 = arith.constant 0 : index
    %85 = vector.load %arg15[%c1_52, %c0_53] : memref<4x64xf32, #tpu.memory_space<vmem>>, vector<1x64xf32>
    %86 = arith.addf %70, %32 : vector<1x64xf32>
    %87 = arith.mulf %77, %86 : vector<1x64xf32>
    %88 = arith.addf %85, %87 : vector<1x64xf32>
    %89 = math.tanh %88 : vector<1x64xf32>
    %cst_54 = arith.constant 1.000000e+00 : f32
    %90 = vector.broadcast %cst_54 : f32 to vector<1x64xf32>
    %91 = arith.subf %90, %84 : vector<1x64xf32>
    %92 = arith.mulf %91, %89 : vector<1x64xf32>
    %93 = arith.mulf %84, %61 : vector<1x64xf32>
    %94 = arith.addf %92, %93 : vector<1x64xf32>
    %cst_55 = arith.constant 0.000000e+00 : f32
    %95 = vector.broadcast %cst_55 : f32 to vector<1x64xf32>
    %96 = arith.maximumf %94, %95 : vector<1x64xf32>
    %c0_56 = arith.constant 0 : index
    %c1_57 = arith.constant 1 : index
    %c0_58 = arith.constant 0 : index
    %97 = vector.load %arg12[%c0_56, %c1_57, %c0_58] : memref<1x4x64xf32, #tpu.memory_space<vmem>>, vector<1x1x64xf32>
    %98 = vector.shape_cast %97 : vector<1x1x64xf32> to vector<1x64xf32>
    %99 = vector.shape_cast %96 : vector<1x64xf32> to vector<1x1x64xf32>
    tpu.vector_store %arg12[%c0_56, %c1_57, %c0_58], %99 {strides = array<i32>} : memref<1x4x64xf32, #tpu.memory_space<vmem>>, vector<1x1x64xf32>,
    %100 = arith.truncf %94 : vector<1x64xf32> to vector<1x64xbf16>
    %cst_59 = arith.constant dense<0.000000e+00> : vector<1x64xf32>
    %101 = tpu.matmul %100, %29, %cst_59 {dimension_numbers = #tpu.dot_dimension_numbers<[1], [0], [0], [1], [0, 0, 1, 1], [], []>} : vector<1x64xbf16>, vector<64x64xbf16>, vector<1x64xf32> -> vector<1x64xf32>
    %cst_60 = arith.constant dense<0.000000e+00> : vector<1x64xf32>
    %102 = tpu.matmul %100, %30, %cst_60 {dimension_numbers = #tpu.dot_dimension_numbers<[1], [0], [0], [1], [0, 0, 1, 1], [], []>} : vector<1x64xbf16>, vector<64x64xbf16>, vector<1x64xf32> -> vector<1x64xf32>
    %cst_61 = arith.constant dense<0.000000e+00> : vector<1x64xf32>
    %103 = tpu.matmul %100, %31, %cst_61 {dimension_numbers = #tpu.dot_dimension_numbers<[1], [0], [0], [1], [0, 0, 1, 1], [], []>} : vector<1x64xbf16>, vector<64x64xbf16>, vector<1x64xf32> -> vector<1x64xf32>
    %c2 = arith.constant 2 : index
    %c0_62 = arith.constant 0 : index
    %104 = vector.load %arg13[%c2, %c0_62] : memref<4x64xf32, #tpu.memory_space<vmem>>, vector<1x64xf32>
    %105 = arith.addf %104, %101 : vector<1x64xf32>
    %106 = arith.negf %105 : vector<1x64xf32>
    %107 = math.exp %106 : vector<1x64xf32>
    %cst_63 = arith.constant 1.000000e+00 : f32
    %108 = vector.broadcast %cst_63 : f32 to vector<1x64xf32>
    %109 = arith.addf %108, %107 : vector<1x64xf32>
    %110 = arith.divf %108, %109 : vector<1x64xf32>
    %c2_64 = arith.constant 2 : index
    %c0_65 = arith.constant 0 : index
    %111 = vector.load %arg14[%c2_64, %c0_65] : memref<4x64xf32, #tpu.memory_space<vmem>>, vector<1x64xf32>
    %112 = arith.addf %111, %102 : vector<1x64xf32>
    %113 = arith.negf %112 : vector<1x64xf32>
    %114 = math.exp %113 : vector<1x64xf32>
    %cst_66 = arith.constant 1.000000e+00 : f32
    %115 = vector.broadcast %cst_66 : f32 to vector<1x64xf32>
    %116 = arith.addf %115, %114 : vector<1x64xf32>
    %117 = arith.divf %115, %116 : vector<1x64xf32>
    %c2_67 = arith.constant 2 : index
    %c0_68 = arith.constant 0 : index
    %118 = vector.load %arg15[%c2_67, %c0_68] : memref<4x64xf32, #tpu.memory_space<vmem>>, vector<1x64xf32>
    %119 = arith.addf %103, %32 : vector<1x64xf32>
    %120 = arith.mulf %110, %119 : vector<1x64xf32>
    %121 = arith.addf %118, %120 : vector<1x64xf32>
    %122 = math.tanh %121 : vector<1x64xf32>
    %cst_69 = arith.constant 1.000000e+00 : f32
    %123 = vector.broadcast %cst_69 : f32 to vector<1x64xf32>
    %124 = arith.subf %123, %117 : vector<1x64xf32>
    %125 = arith.mulf %124, %122 : vector<1x64xf32>
    %126 = arith.mulf %117, %94 : vector<1x64xf32>
    %127 = arith.addf %125, %126 : vector<1x64xf32>
    %cst_70 = arith.constant 0.000000e+00 : f32
    %128 = vector.broadcast %cst_70 : f32 to vector<1x64xf32>
    %129 = arith.maximumf %127, %128 : vector<1x64xf32>
    %c0_71 = arith.constant 0 : index
    %c2_72 = arith.constant 2 : index
    %c0_73 = arith.constant 0 : index
    %130 = vector.load %arg12[%c0_71, %c2_72, %c0_73] : memref<1x4x64xf32, #tpu.memory_space<vmem>>, vector<1x1x64xf32>
    %131 = vector.shape_cast %130 : vector<1x1x64xf32> to vector<1x64xf32>
    %132 = vector.shape_cast %129 : vector<1x64xf32> to vector<1x1x64xf32>
    tpu.vector_store %arg12[%c0_71, %c2_72, %c0_73], %132 {strides = array<i32>} : memref<1x4x64xf32, #tpu.memory_space<vmem>>, vector<1x1x64xf32>,
    %133 = arith.truncf %127 : vector<1x64xf32> to vector<1x64xbf16>
    %cst_74 = arith.constant dense<0.000000e+00> : vector<1x64xf32>
    %134 = tpu.matmul %133, %29, %cst_74 {dimension_numbers = #tpu.dot_dimension_numbers<[1], [0], [0], [1], [0, 0, 1, 1], [], []>} : vector<1x64xbf16>, vector<64x64xbf16>, vector<1x64xf32> -> vector<1x64xf32>
    %cst_75 = arith.constant dense<0.000000e+00> : vector<1x64xf32>
    %135 = tpu.matmul %133, %30, %cst_75 {dimension_numbers = #tpu.dot_dimension_numbers<[1], [0], [0], [1], [0, 0, 1, 1], [], []>} : vector<1x64xbf16>, vector<64x64xbf16>, vector<1x64xf32> -> vector<1x64xf32>
    %cst_76 = arith.constant dense<0.000000e+00> : vector<1x64xf32>
    %136 = tpu.matmul %133, %31, %cst_76 {dimension_numbers = #tpu.dot_dimension_numbers<[1], [0], [0], [1], [0, 0, 1, 1], [], []>} : vector<1x64xbf16>, vector<64x64xbf16>, vector<1x64xf32> -> vector<1x64xf32>
    %c3 = arith.constant 3 : index
    %c0_77 = arith.constant 0 : index
    %137 = vector.load %arg13[%c3, %c0_77] : memref<4x64xf32, #tpu.memory_space<vmem>>, vector<1x64xf32>
    %138 = arith.addf %137, %134 : vector<1x64xf32>
    %139 = arith.negf %138 : vector<1x64xf32>
    %140 = math.exp %139 : vector<1x64xf32>
    %cst_78 = arith.constant 1.000000e+00 : f32
    %141 = vector.broadcast %cst_78 : f32 to vector<1x64xf32>
    %142 = arith.addf %141, %140 : vector<1x64xf32>
    %143 = arith.divf %141, %142 : vector<1x64xf32>
    %c3_79 = arith.constant 3 : index
    %c0_80 = arith.constant 0 : index
    %144 = vector.load %arg14[%c3_79, %c0_80] : memref<4x64xf32, #tpu.memory_space<vmem>>, vector<1x64xf32>
    %145 = arith.addf %144, %135 : vector<1x64xf32>
    %146 = arith.negf %145 : vector<1x64xf32>
    %147 = math.exp %146 : vector<1x64xf32>
    %cst_81 = arith.constant 1.000000e+00 : f32
    %148 = vector.broadcast %cst_81 : f32 to vector<1x64xf32>
    %149 = arith.addf %148, %147 : vector<1x64xf32>
    %150 = arith.divf %148, %149 : vector<1x64xf32>
    %c3_82 = arith.constant 3 : index
    %c0_83 = arith.constant 0 : index
    %151 = vector.load %arg15[%c3_82, %c0_83] : memref<4x64xf32, #tpu.memory_space<vmem>>, vector<1x64xf32>
    %152 = arith.addf %136, %32 : vector<1x64xf32>
    %153 = arith.mulf %143, %152 : vector<1x64xf32>
    %154 = arith.addf %151, %153 : vector<1x64xf32>
    %155 = math.tanh %154 : vector<1x64xf32>
    %cst_84 = arith.constant 1.000000e+00 : f32
    %156 = vector.broadcast %cst_84 : f32 to vector<1x64xf32>
    %157 = arith.subf %156, %150 : vector<1x64xf32>
    %158 = arith.mulf %157, %155 : vector<1x64xf32>
    %159 = arith.mulf %150, %127 : vector<1x64xf32>
    %160 = arith.addf %158, %159 : vector<1x64xf32>
    %cst_85 = arith.constant 0.000000e+00 : f32
    %161 = vector.broadcast %cst_85 : f32 to vector<1x64xf32>
    %162 = arith.maximumf %160, %161 : vector<1x64xf32>
    %c0_86 = arith.constant 0 : index
    %c3_87 = arith.constant 3 : index
    %c0_88 = arith.constant 0 : index
    %163 = vector.load %arg12[%c0_86, %c3_87, %c0_88] : memref<1x4x64xf32, #tpu.memory_space<vmem>>, vector<1x1x64xf32>
    %164 = vector.shape_cast %163 : vector<1x1x64xf32> to vector<1x64xf32>
    %165 = vector.shape_cast %162 : vector<1x64xf32> to vector<1x1x64xf32>
    tpu.vector_store %arg12[%c0_86, %c3_87, %c0_88], %165 {strides = array<i32>} : memref<1x4x64xf32, #tpu.memory_space<vmem>>, vector<1x1x64xf32>,
    return
  }
  func.func @transform_0(%arg0: i32) -> (i32, i32, i32) {
    %c0_i32 = arith.constant 0 : i32
    %c0_i32_0 = arith.constant 0 : i32
    %c0_i32_1 = arith.constant 0 : i32
    return %arg0, %c0_i32, %c0_i32_0 : i32, i32, i32
  }
  func.func @transform_1(%arg0: i32) -> (i32, i32) {
    %c0_i32 = arith.constant 0 : i32
    %c0_i32_0 = arith.constant 0 : i32
    %c0_i32_1 = arith.constant 0 : i32
    return %c0_i32, %c0_i32_0 : i32, i32
  }
  func.func @transform_2(%arg0: i32) -> (i32, i32) {
    %c0_i32 = arith.constant 0 : i32
    %c0_i32_0 = arith.constant 0 : i32
    %c0_i32_1 = arith.constant 0 : i32
    return %c0_i32, %c0_i32_0 : i32, i32
  }
  func.func @transform_3(%arg0: i32) -> (i32, i32) {
    %c0_i32 = arith.constant 0 : i32
    %c0_i32_0 = arith.constant 0 : i32
    %c0_i32_1 = arith.constant 0 : i32
    return %c0_i32, %c0_i32_0 : i32, i32
  }
  func.func @transform_4(%arg0: i32) -> (i32, i32) {
    %c0_i32 = arith.constant 0 : i32
    %c0_i32_0 = arith.constant 0 : i32
    %c0_i32_1 = arith.constant 0 : i32
    return %c0_i32, %c0_i32_0 : i32, i32
  }
  func.func @transform_5(%arg0: i32) -> (i32, i32) {
    %c0_i32 = arith.constant 0 : i32
    %c0_i32_0 = arith.constant 0 : i32
    %c0_i32_1 = arith.constant 0 : i32
    return %c0_i32, %c0_i32_0 : i32, i32
  }
  func.func @transform_6(%arg0: i32) -> (i32, i32) {
    %c0_i32 = arith.constant 0 : i32
    %c0_i32_0 = arith.constant 0 : i32
    %c0_i32_1 = arith.constant 0 : i32
    return %c0_i32, %c0_i32_0 : i32, i32
  }
  func.func @transform_7(%arg0: i32) -> (i32, i32) {
    %c0_i32 = arith.constant 0 : i32
    %c0_i32_0 = arith.constant 0 : i32
    %c0_i32_1 = arith.constant 0 : i32
    return %c0_i32, %c0_i32_0 : i32, i32
  }
  func.func @transform_8(%arg0: i32) -> (i32, i32) {
    %c0_i32 = arith.constant 0 : i32
    %c0_i32_0 = arith.constant 0 : i32
    %c0_i32_1 = arith.constant 0 : i32
    return %c0_i32, %c0_i32_0 : i32, i32
  }
  func.func @transform_9(%arg0: i32) -> (i32, i32) {
    %c0_i32 = arith.constant 0 : i32
    %c0_i32_0 = arith.constant 0 : i32
    %c0_i32_1 = arith.constant 0 : i32
    return %c0_i32, %c0_i32_0 : i32, i32
  }
  func.func @transform_10(%arg0: i32) -> (i32, i32) {
    %c0_i32 = arith.constant 0 : i32
    %c0_i32_0 = arith.constant 0 : i32
    %c0_i32_1 = arith.constant 0 : i32
    return %c0_i32, %c0_i32_0 : i32, i32
  }
  func.func @transform_11(%arg0: i32) -> (i32, i32, i32) {
    %c0_i32 = arith.constant 0 : i32
    %c0_i32_0 = arith.constant 0 : i32
    %c0_i32_1 = arith.constant 0 : i32
    return %arg0, %c0_i32, %c0_i32_0 : i32, i32, i32
  }
}

module attributes {stable_mosaic.version = 11 : i64} {
  func.func @kernel(%arg0: i32, %arg1: memref<1x4x64xf32, #tpu.memory_space<vmem>>, %arg2: memref<4x64x32xbf16, #tpu.memory_space<vmem>>, %arg3: memref<1x32xf32, #tpu.memory_space<vmem>>, %arg4: memref<1x4x64xf32, #tpu.memory_space<vmem>>) attributes {dimension_semantics = [#tpu.dimension_semantics<parallel>], iteration_bounds = array<i64: 2>, scalar_prefetch = 0 : i64, scratch_operands = 0 : i64, tpu.core_type = #tpu.core_type<tc>, window_params = [{transform_indices = @transform_0, window_bounds = array<i64: 1, 4, 64>}, {pipeline_mode = #tpu.pipeline_mode<synchronous>, transform_indices = @transform_1, window_bounds = array<i64: 4, 64, 32>}, {pipeline_mode = #tpu.pipeline_mode<synchronous>, transform_indices = @transform_2, window_bounds = array<i64: 1, 32>}, {transform_indices = @transform_3, window_bounds = array<i64: 1, 4, 64>}]} {
    %c0 = arith.constant 0 : index
    %c0_0 = arith.constant 0 : index
    %c0_1 = arith.constant 0 : index
    %0 = vector.load %arg1[%c0, %c0_0, %c0_1] : memref<1x4x64xf32, #tpu.memory_space<vmem>>, vector<1x4x64xf32>
    %1 = vector.shape_cast %0 : vector<1x4x64xf32> to vector<4x64xf32>
    %cst = arith.constant 0.000000e+00 : f32
    %2 = vector.broadcast %cst : f32 to vector<1x64xf32>
    %cst_2 = arith.constant 0.000000e+00 : f32
    %3 = vector.broadcast %cst_2 : f32 to vector<1x64xf32>
    %4 = tpu.concatenate %2, %1, %3 in 0 : vector<1x64xf32>, vector<4x64xf32>, vector<1x64xf32> -> vector<6x64xf32>
    %c0_3 = arith.constant 0 : index
    %c0_4 = arith.constant 0 : index
    %5 = vector.load %arg3[%c0_3, %c0_4] : memref<1x32xf32, #tpu.memory_space<vmem>>, vector<1x32xf32>
    %6 = vector.extract_strided_slice %4 {offsets = [1, 0], sizes = [4, 64], strides = [1, 1]} : vector<6x64xf32> to vector<4x64xf32>
    %7 = arith.truncf %6 : vector<4x64xf32> to vector<4x64xbf16>
    %8 = vector.extract_strided_slice %4 {offsets = [0, 0], sizes = [4, 64], strides = [1, 1]} : vector<6x64xf32> to vector<4x64xf32>
    %9 = arith.truncf %8 : vector<4x64xf32> to vector<4x64xbf16>
    %c1 = arith.constant 1 : index
    %c0_5 = arith.constant 0 : index
    %c0_6 = arith.constant 0 : index
    %10 = vector.load %arg2[%c1, %c0_5, %c0_6] : memref<4x64x32xbf16, #tpu.memory_space<vmem>>, vector<1x64x32xbf16>
    %11 = vector.shape_cast %10 : vector<1x64x32xbf16> to vector<64x32xbf16>
    %cst_7 = arith.constant dense<0.000000e+00> : vector<4x32xf32>
    %12 = tpu.matmul %7, %11, %cst_7 {dimension_numbers = #tpu.dot_dimension_numbers<[1], [0], [0], [1], [0, 0, 1, 1], [], []>} : vector<4x64xbf16>, vector<64x32xbf16>, vector<4x32xf32> -> vector<4x32xf32>
    %c3 = arith.constant 3 : index
    %c0_8 = arith.constant 0 : index
    %c0_9 = arith.constant 0 : index
    %13 = vector.load %arg2[%c3, %c0_8, %c0_9] : memref<4x64x32xbf16, #tpu.memory_space<vmem>>, vector<1x64x32xbf16>
    %14 = vector.shape_cast %13 : vector<1x64x32xbf16> to vector<64x32xbf16>
    %cst_10 = arith.constant dense<0.000000e+00> : vector<4x32xf32>
    %15 = tpu.matmul %9, %14, %cst_10 {dimension_numbers = #tpu.dot_dimension_numbers<[1], [0], [0], [1], [0, 0, 1, 1], [], []>} : vector<4x64xbf16>, vector<64x32xbf16>, vector<4x32xf32> -> vector<4x32xf32>
    %16 = arith.addf %12, %15 : vector<4x32xf32>
    %17 = vector.broadcast %5 : vector<1x32xf32> to vector<4x32xf32>
    %18 = arith.addf %16, %17 : vector<4x32xf32>
    %cst_11 = arith.constant 0.000000e+00 : f32
    %19 = vector.broadcast %cst_11 : f32 to vector<4x32xf32>
    %20 = arith.maximumf %18, %19 : vector<4x32xf32>
    %21 = vector.extract_strided_slice %4 {offsets = [2, 0], sizes = [4, 64], strides = [1, 1]} : vector<6x64xf32> to vector<4x64xf32>
    %22 = arith.truncf %21 : vector<4x64xf32> to vector<4x64xbf16>
    %23 = vector.extract_strided_slice %4 {offsets = [1, 0], sizes = [4, 64], strides = [1, 1]} : vector<6x64xf32> to vector<4x64xf32>
    %24 = arith.truncf %23 : vector<4x64xf32> to vector<4x64xbf16>
    %c0_12 = arith.constant 0 : index
    %c0_13 = arith.constant 0 : index
    %c0_14 = arith.constant 0 : index
    %25 = vector.load %arg2[%c0_12, %c0_13, %c0_14] : memref<4x64x32xbf16, #tpu.memory_space<vmem>>, vector<1x64x32xbf16>
    %26 = vector.shape_cast %25 : vector<1x64x32xbf16> to vector<64x32xbf16>
    %cst_15 = arith.constant dense<0.000000e+00> : vector<4x32xf32>
    %27 = tpu.matmul %22, %26, %cst_15 {dimension_numbers = #tpu.dot_dimension_numbers<[1], [0], [0], [1], [0, 0, 1, 1], [], []>} : vector<4x64xbf16>, vector<64x32xbf16>, vector<4x32xf32> -> vector<4x32xf32>
    %c2 = arith.constant 2 : index
    %c0_16 = arith.constant 0 : index
    %c0_17 = arith.constant 0 : index
    %28 = vector.load %arg2[%c2, %c0_16, %c0_17] : memref<4x64x32xbf16, #tpu.memory_space<vmem>>, vector<1x64x32xbf16>
    %29 = vector.shape_cast %28 : vector<1x64x32xbf16> to vector<64x32xbf16>
    %cst_18 = arith.constant dense<0.000000e+00> : vector<4x32xf32>
    %30 = tpu.matmul %24, %29, %cst_18 {dimension_numbers = #tpu.dot_dimension_numbers<[1], [0], [0], [1], [0, 0, 1, 1], [], []>} : vector<4x64xbf16>, vector<64x32xbf16>, vector<4x32xf32> -> vector<4x32xf32>
    %31 = arith.addf %27, %30 : vector<4x32xf32>
    %32 = vector.broadcast %5 : vector<1x32xf32> to vector<4x32xf32>
    %33 = arith.addf %31, %32 : vector<4x32xf32>
    %cst_19 = arith.constant 0.000000e+00 : f32
    %34 = vector.broadcast %cst_19 : f32 to vector<4x32xf32>
    %35 = arith.maximumf %33, %34 : vector<4x32xf32>
    %36 = tpu.concatenate %20, %35 in 1 : vector<4x32xf32>, vector<4x32xf32> -> vector<4x64xf32>
    %c0_20 = arith.constant 0 : index
    %c0_21 = arith.constant 0 : index
    %c0_22 = arith.constant 0 : index
    %37 = vector.load %arg4[%c0_20, %c0_21, %c0_22] : memref<1x4x64xf32, #tpu.memory_space<vmem>>, vector<1x4x64xf32>
    %38 = vector.shape_cast %37 : vector<1x4x64xf32> to vector<4x64xf32>
    %39 = vector.shape_cast %36 : vector<4x64xf32> to vector<1x4x64xf32>
    tpu.vector_store %arg4[%c0_20, %c0_21, %c0_22], %39 {strides = array<i32>} : memref<1x4x64xf32, #tpu.memory_space<vmem>>, vector<1x4x64xf32>,
    return
  }
  func.func @transform_0(%arg0: i32) -> (i32, i32, i32) {
    %c0_i32 = arith.constant 0 : i32
    %c0_i32_0 = arith.constant 0 : i32
    %c0_i32_1 = arith.constant 0 : i32
    return %arg0, %c0_i32, %c0_i32_0 : i32, i32, i32
  }
  func.func @transform_1(%arg0: i32) -> (i32, i32, i32) {
    %c0_i32 = arith.constant 0 : i32
    %c0_i32_0 = arith.constant 0 : i32
    %c0_i32_1 = arith.constant 0 : i32
    %c0_i32_2 = arith.constant 0 : i32
    return %c0_i32, %c0_i32_0, %c0_i32_1 : i32, i32, i32
  }
  func.func @transform_2(%arg0: i32) -> (i32, i32) {
    %c0_i32 = arith.constant 0 : i32
    %c0_i32_0 = arith.constant 0 : i32
    %c0_i32_1 = arith.constant 0 : i32
    return %c0_i32, %c0_i32_0 : i32, i32
  }
  func.func @transform_3(%arg0: i32) -> (i32, i32, i32) {
    %c0_i32 = arith.constant 0 : i32
    %c0_i32_0 = arith.constant 0 : i32
    %c0_i32_1 = arith.constant 0 : i32
    return %arg0, %c0_i32, %c0_i32_0 : i32, i32, i32
  }
}

module attributes {stable_mosaic.version = 11 : i64} {
  func.func @_gru_kernel(%arg0: i32, %arg1: memref<1x8x32xf32, #tpu.memory_space<vmem>>, %arg2: memref<32x32xbf16, #tpu.memory_space<vmem>>, %arg3: memref<32x32xbf16, #tpu.memory_space<vmem>>, %arg4: memref<32x32xbf16, #tpu.memory_space<vmem>>, %arg5: memref<32x32xbf16, #tpu.memory_space<vmem>>, %arg6: memref<32x32xbf16, #tpu.memory_space<vmem>>, %arg7: memref<32x32xbf16, #tpu.memory_space<vmem>>, %arg8: memref<1x32xf32, #tpu.memory_space<vmem>>, %arg9: memref<1x32xf32, #tpu.memory_space<vmem>>, %arg10: memref<1x32xf32, #tpu.memory_space<vmem>>, %arg11: memref<1x32xf32, #tpu.memory_space<vmem>>, %arg12: memref<1x8x32xf32, #tpu.memory_space<vmem>>, %arg13: memref<8x32xf32, #tpu.memory_space<vmem>>, %arg14: memref<8x32xf32, #tpu.memory_space<vmem>>, %arg15: memref<8x32xf32, #tpu.memory_space<vmem>>) attributes {dimension_semantics = [#tpu.dimension_semantics<parallel>], iteration_bounds = array<i64: 2>, scalar_prefetch = 0 : i64, scratch_operands = 3 : i64, tpu.core_type = #tpu.core_type<tc>, window_params = [{transform_indices = @transform_0, window_bounds = array<i64: 1, 8, 32>}, {pipeline_mode = #tpu.pipeline_mode<synchronous>, transform_indices = @transform_1, window_bounds = array<i64: 32, 32>}, {pipeline_mode = #tpu.pipeline_mode<synchronous>, transform_indices = @transform_2, window_bounds = array<i64: 32, 32>}, {pipeline_mode = #tpu.pipeline_mode<synchronous>, transform_indices = @transform_3, window_bounds = array<i64: 32, 32>}, {pipeline_mode = #tpu.pipeline_mode<synchronous>, transform_indices = @transform_4, window_bounds = array<i64: 32, 32>}, {pipeline_mode = #tpu.pipeline_mode<synchronous>, transform_indices = @transform_5, window_bounds = array<i64: 32, 32>}, {pipeline_mode = #tpu.pipeline_mode<synchronous>, transform_indices = @transform_6, window_bounds = array<i64: 32, 32>}, {pipeline_mode = #tpu.pipeline_mode<synchronous>, transform_indices = @transform_7, window_bounds = array<i64: 1, 32>}, {pipeline_mode = #tpu.pipeline_mode<synchronous>, transform_indices = @transform_8, window_bounds = array<i64: 1, 32>}, {pipeline_mode = #tpu.pipeline_mode<synchronous>, transform_indices = @transform_9, window_bounds = array<i64: 1, 32>}, {pipeline_mode = #tpu.pipeline_mode<synchronous>, transform_indices = @transform_10, window_bounds = array<i64: 1, 32>}, {transform_indices = @transform_11, window_bounds = array<i64: 1, 8, 32>}]} {
    %c0 = arith.constant 0 : index
    %c0_0 = arith.constant 0 : index
    %c0_1 = arith.constant 0 : index
    %0 = vector.load %arg1[%c0, %c0_0, %c0_1] : memref<1x8x32xf32, #tpu.memory_space<vmem>>, vector<1x8x32xf32>
    %1 = vector.shape_cast %0 : vector<1x8x32xf32> to vector<8x32xf32>
    %2 = arith.truncf %1 : vector<8x32xf32> to vector<8x32xbf16>
    %c0_2 = arith.constant 0 : index
    %c0_3 = arith.constant 0 : index
    %3 = vector.load %arg2[%c0_2, %c0_3] : memref<32x32xbf16, #tpu.memory_space<vmem>>, vector<32x32xbf16>
    %cst = arith.constant dense<0.000000e+00> : vector<8x32xf32>
    %4 = tpu.matmul %2, %3, %cst {dimension_numbers = #tpu.dot_dimension_numbers<[1], [0], [0], [1], [0, 0, 1, 1], [], []>} : vector<8x32xbf16>, vector<32x32xbf16>, vector<8x32xf32> -> vector<8x32xf32>
    %c0_4 = arith.constant 0 : index
    %c0_5 = arith.constant 0 : index
    %5 = vector.load %arg8[%c0_4, %c0_5] : memref<1x32xf32, #tpu.memory_space<vmem>>, vector<1x32xf32>
    %6 = vector.broadcast %5 : vector<1x32xf32> to vector<8x32xf32>
    %7 = arith.addf %4, %6 : vector<8x32xf32>
    %c0_6 = arith.constant 0 : index
    %c0_7 = arith.constant 0 : index
    %8 = vector.load %arg13[%c0_6, %c0_7] : memref<8x32xf32, #tpu.memory_space<vmem>>, vector<8x32xf32>
    tpu.vector_store %arg13[%c0_6, %c0_7], %7 {strides = array<i32>} : memref<8x32xf32, #tpu.memory_space<vmem>>, vector<8x32xf32>,
    %c0_8 = arith.constant 0 : index
    %c0_9 = arith.constant 0 : index
    %9 = vector.load %arg3[%c0_8, %c0_9] : memref<32x32xbf16, #tpu.memory_space<vmem>>, vector<32x32xbf16>
    %cst_10 = arith.constant dense<0.000000e+00> : vector<8x32xf32>
    %10 = tpu.matmul %2, %9, %cst_10 {dimension_numbers = #tpu.dot_dimension_numbers<[1], [0], [0], [1], [0, 0, 1, 1], [], []>} : vector<8x32xbf16>, vector<32x32xbf16>, vector<8x32xf32> -> vector<8x32xf32>
    %c0_11 = arith.constant 0 : index
    %c0_12 = arith.constant 0 : index
    %11 = vector.load %arg9[%c0_11, %c0_12] : memref<1x32xf32, #tpu.memory_space<vmem>>, vector<1x32xf32>
    %12 = vector.broadcast %11 : vector<1x32xf32> to vector<8x32xf32>
    %13 = arith.addf %10, %12 : vector<8x32xf32>
    %c0_13 = arith.constant 0 : index
    %c0_14 = arith.constant 0 : index
    %14 = vector.load %arg14[%c0_13, %c0_14] : memref<8x32xf32, #tpu.memory_space<vmem>>, vector<8x32xf32>
    tpu.vector_store %arg14[%c0_13, %c0_14], %13 {strides = array<i32>} : memref<8x32xf32, #tpu.memory_space<vmem>>, vector<8x32xf32>,
    %c0_15 = arith.constant 0 : index
    %c0_16 = arith.constant 0 : index
    %15 = vector.load %arg4[%c0_15, %c0_16] : memref<32x32xbf16, #tpu.memory_space<vmem>>, vector<32x32xbf16>
    %cst_17 = arith.constant dense<0.000000e+00> : vector<8x32xf32>
    %16 = tpu.matmul %2, %15, %cst_17 {dimension_numbers = #tpu.dot_dimension_numbers<[1], [0], [0], [1], [0, 0, 1, 1], [], []>} : vector<8x32xbf16>, vector<32x32xbf16>, vector<8x32xf32> -> vector<8x32xf32>
    %c0_18 = arith.constant 0 : index
    %c0_19 = arith.constant 0 : index
    %17 = vector.load %arg10[%c0_18, %c0_19] : memref<1x32xf32, #tpu.memory_space<vmem>>, vector<1x32xf32>
    %18 = vector.broadcast %17 : vector<1x32xf32> to vector<8x32xf32>
    %19 = arith.addf %16, %18 : vector<8x32xf32>
    %c0_20 = arith.constant 0 : index
    %c0_21 = arith.constant 0 : index
    %20 = vector.load %arg15[%c0_20, %c0_21] : memref<8x32xf32, #tpu.memory_space<vmem>>, vector<8x32xf32>
    tpu.vector_store %arg15[%c0_20, %c0_21], %19 {strides = array<i32>} : memref<8x32xf32, #tpu.memory_space<vmem>>, vector<8x32xf32>,
    %c0_22 = arith.constant 0 : index
    %c0_23 = arith.constant 0 : index
    %21 = vector.load %arg5[%c0_22, %c0_23] : memref<32x32xbf16, #tpu.memory_space<vmem>>, vector<32x32xbf16>
    %c0_24 = arith.constant 0 : index
    %c0_25 = arith.constant 0 : index
    %22 = vector.load %arg6[%c0_24, %c0_25] : memref<32x32xbf16, #tpu.memory_space<vmem>>, vector<32x32xbf16>
    %c0_26 = arith.constant 0 : index
    %c0_27 = arith.constant 0 : index
    %23 = vector.load %arg7[%c0_26, %c0_27] : memref<32x32xbf16, #tpu.memory_space<vmem>>, vector<32x32xbf16>
    %c0_28 = arith.constant 0 : index
    %c0_29 = arith.constant 0 : index
    %24 = vector.load %arg11[%c0_28, %c0_29] : memref<1x32xf32, #tpu.memory_space<vmem>>, vector<1x32xf32>
    %cst_30 = arith.constant 0.000000e+00 : f32
    %25 = vector.broadcast %cst_30 : f32 to vector<1x32xf32>
    %26 = arith.truncf %25 : vector<1x32xf32> to vector<1x32xbf16>
    %cst_31 = arith.constant dense<0.000000e+00> : vector<1x32xf32>
    %27 = tpu.matmul %26, %21, %cst_31 {dimension_numbers = #tpu.dot_dimension_numbers<[1], [0], [0], [1], [0, 0, 1, 1], [], []>} : vector<1x32xbf16>, vector<32x32xbf16>, vector<1x32xf32> -> vector<1x32xf32>
    %cst_32 = arith.constant dense<0.000000e+00> : vector<1x32xf32>
    %28 = tpu.matmul %26, %22, %cst_32 {dimension_numbers = #tpu.dot_dimension_numbers<[1], [0], [0], [1], [0, 0, 1, 1], [], []>} : vector<1x32xbf16>, vector<32x32xbf16>, vector<1x32xf32> -> vector<1x32xf32>
    %cst_33 = arith.constant dense<0.000000e+00> : vector<1x32xf32>
    %29 = tpu.matmul %26, %23, %cst_33 {dimension_numbers = #tpu.dot_dimension_numbers<[1], [0], [0], [1], [0, 0, 1, 1], [], []>} : vector<1x32xbf16>, vector<32x32xbf16>, vector<1x32xf32> -> vector<1x32xf32>
    %c0_34 = arith.constant 0 : index
    %c0_35 = arith.constant 0 : index
    %30 = vector.load %arg13[%c0_34, %c0_35] : memref<8x32xf32, #tpu.memory_space<vmem>>, vector<1x32xf32>
    %31 = arith.addf %30, %27 : vector<1x32xf32>
    %32 = arith.negf %31 : vector<1x32xf32>
    %33 = math.exp %32 : vector<1x32xf32>
    %cst_36 = arith.constant 1.000000e+00 : f32
    %34 = vector.broadcast %cst_36 : f32 to vector<1x32xf32>
    %35 = arith.addf %34, %33 : vector<1x32xf32>
    %36 = arith.divf %34, %35 : vector<1x32xf32>
    %c0_37 = arith.constant 0 : index
    %c0_38 = arith.constant 0 : index
    %37 = vector.load %arg14[%c0_37, %c0_38] : memref<8x32xf32, #tpu.memory_space<vmem>>, vector<1x32xf32>
    %38 = arith.addf %37, %28 : vector<1x32xf32>
    %39 = arith.negf %38 : vector<1x32xf32>
    %40 = math.exp %39 : vector<1x32xf32>
    %cst_39 = arith.constant 1.000000e+00 : f32
    %41 = vector.broadcast %cst_39 : f32 to vector<1x32xf32>
    %42 = arith.addf %41, %40 : vector<1x32xf32>
    %43 = arith.divf %41, %42 : vector<1x32xf32>
    %c0_40 = arith.constant 0 : index
    %c0_41 = arith.constant 0 : index
    %44 = vector.load %arg15[%c0_40, %c0_41] : memref<8x32xf32, #tpu.memory_space<vmem>>, vector<1x32xf32>
    %45 = arith.addf %29, %24 : vector<1x32xf32>
    %46 = arith.mulf %36, %45 : vector<1x32xf32>
    %47 = arith.addf %44, %46 : vector<1x32xf32>
    %48 = math.tanh %47 : vector<1x32xf32>
    %cst_42 = arith.constant 1.000000e+00 : f32
    %49 = vector.broadcast %cst_42 : f32 to vector<1x32xf32>
    %50 = arith.subf %49, %43 : vector<1x32xf32>
    %51 = arith.mulf %50, %48 : vector<1x32xf32>
    %52 = arith.mulf %43, %25 : vector<1x32xf32>
    %53 = arith.addf %51, %52 : vector<1x32xf32>
    %cst_43 = arith.constant 0.000000e+00 : f32
    %54 = vector.broadcast %cst_43 : f32 to vector<1x32xf32>
    %55 = arith.maximumf %53, %54 : vector<1x32xf32>
    %c0_44 = arith.constant 0 : index
    %c0_45 = arith.constant 0 : index
    %c0_46 = arith.constant 0 : index
    %56 = vector.load %arg12[%c0_44, %c0_45, %c0_46] : memref<1x8x32xf32, #tpu.memory_space<vmem>>, vector<1x1x32xf32>
    %57 = vector.shape_cast %56 : vector<1x1x32xf32> to vector<1x32xf32>
    %58 = vector.shape_cast %55 : vector<1x32xf32> to vector<1x1x32xf32>
    tpu.vector_store %arg12[%c0_44, %c0_45, %c0_46], %58 {strides = array<i32>} : memref<1x8x32xf32, #tpu.memory_space<vmem>>, vector<1x1x32xf32>,
    %59 = arith.truncf %53 : vector<1x32xf32> to vector<1x32xbf16>
    %cst_47 = arith.constant dense<0.000000e+00> : vector<1x32xf32>
    %60 = tpu.matmul %59, %21, %cst_47 {dimension_numbers = #tpu.dot_dimension_numbers<[1], [0], [0], [1], [0, 0, 1, 1], [], []>} : vector<1x32xbf16>, vector<32x32xbf16>, vector<1x32xf32> -> vector<1x32xf32>
    %cst_48 = arith.constant dense<0.000000e+00> : vector<1x32xf32>
    %61 = tpu.matmul %59, %22, %cst_48 {dimension_numbers = #tpu.dot_dimension_numbers<[1], [0], [0], [1], [0, 0, 1, 1], [], []>} : vector<1x32xbf16>, vector<32x32xbf16>, vector<1x32xf32> -> vector<1x32xf32>
    %cst_49 = arith.constant dense<0.000000e+00> : vector<1x32xf32>
    %62 = tpu.matmul %59, %23, %cst_49 {dimension_numbers = #tpu.dot_dimension_numbers<[1], [0], [0], [1], [0, 0, 1, 1], [], []>} : vector<1x32xbf16>, vector<32x32xbf16>, vector<1x32xf32> -> vector<1x32xf32>
    %c1 = arith.constant 1 : index
    %c0_50 = arith.constant 0 : index
    %63 = vector.load %arg13[%c1, %c0_50] : memref<8x32xf32, #tpu.memory_space<vmem>>, vector<1x32xf32>
    %64 = arith.addf %63, %60 : vector<1x32xf32>
    %65 = arith.negf %64 : vector<1x32xf32>
    %66 = math.exp %65 : vector<1x32xf32>
    %cst_51 = arith.constant 1.000000e+00 : f32
    %67 = vector.broadcast %cst_51 : f32 to vector<1x32xf32>
    %68 = arith.addf %67, %66 : vector<1x32xf32>
    %69 = arith.divf %67, %68 : vector<1x32xf32>
    %c1_52 = arith.constant 1 : index
    %c0_53 = arith.constant 0 : index
    %70 = vector.load %arg14[%c1_52, %c0_53] : memref<8x32xf32, #tpu.memory_space<vmem>>, vector<1x32xf32>
    %71 = arith.addf %70, %61 : vector<1x32xf32>
    %72 = arith.negf %71 : vector<1x32xf32>
    %73 = math.exp %72 : vector<1x32xf32>
    %cst_54 = arith.constant 1.000000e+00 : f32
    %74 = vector.broadcast %cst_54 : f32 to vector<1x32xf32>
    %75 = arith.addf %74, %73 : vector<1x32xf32>
    %76 = arith.divf %74, %75 : vector<1x32xf32>
    %c1_55 = arith.constant 1 : index
    %c0_56 = arith.constant 0 : index
    %77 = vector.load %arg15[%c1_55, %c0_56] : memref<8x32xf32, #tpu.memory_space<vmem>>, vector<1x32xf32>
    %78 = arith.addf %62, %24 : vector<1x32xf32>
    %79 = arith.mulf %69, %78 : vector<1x32xf32>
    %80 = arith.addf %77, %79 : vector<1x32xf32>
    %81 = math.tanh %80 : vector<1x32xf32>
    %cst_57 = arith.constant 1.000000e+00 : f32
    %82 = vector.broadcast %cst_57 : f32 to vector<1x32xf32>
    %83 = arith.subf %82, %76 : vector<1x32xf32>
    %84 = arith.mulf %83, %81 : vector<1x32xf32>
    %85 = arith.mulf %76, %53 : vector<1x32xf32>
    %86 = arith.addf %84, %85 : vector<1x32xf32>
    %cst_58 = arith.constant 0.000000e+00 : f32
    %87 = vector.broadcast %cst_58 : f32 to vector<1x32xf32>
    %88 = arith.maximumf %86, %87 : vector<1x32xf32>
    %c0_59 = arith.constant 0 : index
    %c1_60 = arith.constant 1 : index
    %c0_61 = arith.constant 0 : index
    %89 = vector.load %arg12[%c0_59, %c1_60, %c0_61] : memref<1x8x32xf32, #tpu.memory_space<vmem>>, vector<1x1x32xf32>
    %90 = vector.shape_cast %89 : vector<1x1x32xf32> to vector<1x32xf32>
    %91 = vector.shape_cast %88 : vector<1x32xf32> to vector<1x1x32xf32>
    tpu.vector_store %arg12[%c0_59, %c1_60, %c0_61], %91 {strides = array<i32>} : memref<1x8x32xf32, #tpu.memory_space<vmem>>, vector<1x1x32xf32>,
    %92 = arith.truncf %86 : vector<1x32xf32> to vector<1x32xbf16>
    %cst_62 = arith.constant dense<0.000000e+00> : vector<1x32xf32>
    %93 = tpu.matmul %92, %21, %cst_62 {dimension_numbers = #tpu.dot_dimension_numbers<[1], [0], [0], [1], [0, 0, 1, 1], [], []>} : vector<1x32xbf16>, vector<32x32xbf16>, vector<1x32xf32> -> vector<1x32xf32>
    %cst_63 = arith.constant dense<0.000000e+00> : vector<1x32xf32>
    %94 = tpu.matmul %92, %22, %cst_63 {dimension_numbers = #tpu.dot_dimension_numbers<[1], [0], [0], [1], [0, 0, 1, 1], [], []>} : vector<1x32xbf16>, vector<32x32xbf16>, vector<1x32xf32> -> vector<1x32xf32>
    %cst_64 = arith.constant dense<0.000000e+00> : vector<1x32xf32>
    %95 = tpu.matmul %92, %23, %cst_64 {dimension_numbers = #tpu.dot_dimension_numbers<[1], [0], [0], [1], [0, 0, 1, 1], [], []>} : vector<1x32xbf16>, vector<32x32xbf16>, vector<1x32xf32> -> vector<1x32xf32>
    %c2 = arith.constant 2 : index
    %c0_65 = arith.constant 0 : index
    %96 = vector.load %arg13[%c2, %c0_65] : memref<8x32xf32, #tpu.memory_space<vmem>>, vector<1x32xf32>
    %97 = arith.addf %96, %93 : vector<1x32xf32>
    %98 = arith.negf %97 : vector<1x32xf32>
    %99 = math.exp %98 : vector<1x32xf32>
    %cst_66 = arith.constant 1.000000e+00 : f32
    %100 = vector.broadcast %cst_66 : f32 to vector<1x32xf32>
    %101 = arith.addf %100, %99 : vector<1x32xf32>
    %102 = arith.divf %100, %101 : vector<1x32xf32>
    %c2_67 = arith.constant 2 : index
    %c0_68 = arith.constant 0 : index
    %103 = vector.load %arg14[%c2_67, %c0_68] : memref<8x32xf32, #tpu.memory_space<vmem>>, vector<1x32xf32>
    %104 = arith.addf %103, %94 : vector<1x32xf32>
    %105 = arith.negf %104 : vector<1x32xf32>
    %106 = math.exp %105 : vector<1x32xf32>
    %cst_69 = arith.constant 1.000000e+00 : f32
    %107 = vector.broadcast %cst_69 : f32 to vector<1x32xf32>
    %108 = arith.addf %107, %106 : vector<1x32xf32>
    %109 = arith.divf %107, %108 : vector<1x32xf32>
    %c2_70 = arith.constant 2 : index
    %c0_71 = arith.constant 0 : index
    %110 = vector.load %arg15[%c2_70, %c0_71] : memref<8x32xf32, #tpu.memory_space<vmem>>, vector<1x32xf32>
    %111 = arith.addf %95, %24 : vector<1x32xf32>
    %112 = arith.mulf %102, %111 : vector<1x32xf32>
    %113 = arith.addf %110, %112 : vector<1x32xf32>
    %114 = math.tanh %113 : vector<1x32xf32>
    %cst_72 = arith.constant 1.000000e+00 : f32
    %115 = vector.broadcast %cst_72 : f32 to vector<1x32xf32>
    %116 = arith.subf %115, %109 : vector<1x32xf32>
    %117 = arith.mulf %116, %114 : vector<1x32xf32>
    %118 = arith.mulf %109, %86 : vector<1x32xf32>
    %119 = arith.addf %117, %118 : vector<1x32xf32>
    %cst_73 = arith.constant 0.000000e+00 : f32
    %120 = vector.broadcast %cst_73 : f32 to vector<1x32xf32>
    %121 = arith.maximumf %119, %120 : vector<1x32xf32>
    %c0_74 = arith.constant 0 : index
    %c2_75 = arith.constant 2 : index
    %c0_76 = arith.constant 0 : index
    %122 = vector.load %arg12[%c0_74, %c2_75, %c0_76] : memref<1x8x32xf32, #tpu.memory_space<vmem>>, vector<1x1x32xf32>
    %123 = vector.shape_cast %122 : vector<1x1x32xf32> to vector<1x32xf32>
    %124 = vector.shape_cast %121 : vector<1x32xf32> to vector<1x1x32xf32>
    tpu.vector_store %arg12[%c0_74, %c2_75, %c0_76], %124 {strides = array<i32>} : memref<1x8x32xf32, #tpu.memory_space<vmem>>, vector<1x1x32xf32>,
    %125 = arith.truncf %119 : vector<1x32xf32> to vector<1x32xbf16>
    %cst_77 = arith.constant dense<0.000000e+00> : vector<1x32xf32>
    %126 = tpu.matmul %125, %21, %cst_77 {dimension_numbers = #tpu.dot_dimension_numbers<[1], [0], [0], [1], [0, 0, 1, 1], [], []>} : vector<1x32xbf16>, vector<32x32xbf16>, vector<1x32xf32> -> vector<1x32xf32>
    %cst_78 = arith.constant dense<0.000000e+00> : vector<1x32xf32>
    %127 = tpu.matmul %125, %22, %cst_78 {dimension_numbers = #tpu.dot_dimension_numbers<[1], [0], [0], [1], [0, 0, 1, 1], [], []>} : vector<1x32xbf16>, vector<32x32xbf16>, vector<1x32xf32> -> vector<1x32xf32>
    %cst_79 = arith.constant dense<0.000000e+00> : vector<1x32xf32>
    %128 = tpu.matmul %125, %23, %cst_79 {dimension_numbers = #tpu.dot_dimension_numbers<[1], [0], [0], [1], [0, 0, 1, 1], [], []>} : vector<1x32xbf16>, vector<32x32xbf16>, vector<1x32xf32> -> vector<1x32xf32>
    %c3 = arith.constant 3 : index
    %c0_80 = arith.constant 0 : index
    %129 = vector.load %arg13[%c3, %c0_80] : memref<8x32xf32, #tpu.memory_space<vmem>>, vector<1x32xf32>
    %130 = arith.addf %129, %126 : vector<1x32xf32>
    %131 = arith.negf %130 : vector<1x32xf32>
    %132 = math.exp %131 : vector<1x32xf32>
    %cst_81 = arith.constant 1.000000e+00 : f32
    %133 = vector.broadcast %cst_81 : f32 to vector<1x32xf32>
    %134 = arith.addf %133, %132 : vector<1x32xf32>
    %135 = arith.divf %133, %134 : vector<1x32xf32>
    %c3_82 = arith.constant 3 : index
    %c0_83 = arith.constant 0 : index
    %136 = vector.load %arg14[%c3_82, %c0_83] : memref<8x32xf32, #tpu.memory_space<vmem>>, vector<1x32xf32>
    %137 = arith.addf %136, %127 : vector<1x32xf32>
    %138 = arith.negf %137 : vector<1x32xf32>
    %139 = math.exp %138 : vector<1x32xf32>
    %cst_84 = arith.constant 1.000000e+00 : f32
    %140 = vector.broadcast %cst_84 : f32 to vector<1x32xf32>
    %141 = arith.addf %140, %139 : vector<1x32xf32>
    %142 = arith.divf %140, %141 : vector<1x32xf32>
    %c3_85 = arith.constant 3 : index
    %c0_86 = arith.constant 0 : index
    %143 = vector.load %arg15[%c3_85, %c0_86] : memref<8x32xf32, #tpu.memory_space<vmem>>, vector<1x32xf32>
    %144 = arith.addf %128, %24 : vector<1x32xf32>
    %145 = arith.mulf %135, %144 : vector<1x32xf32>
    %146 = arith.addf %143, %145 : vector<1x32xf32>
    %147 = math.tanh %146 : vector<1x32xf32>
    %cst_87 = arith.constant 1.000000e+00 : f32
    %148 = vector.broadcast %cst_87 : f32 to vector<1x32xf32>
    %149 = arith.subf %148, %142 : vector<1x32xf32>
    %150 = arith.mulf %149, %147 : vector<1x32xf32>
    %151 = arith.mulf %142, %119 : vector<1x32xf32>
    %152 = arith.addf %150, %151 : vector<1x32xf32>
    %cst_88 = arith.constant 0.000000e+00 : f32
    %153 = vector.broadcast %cst_88 : f32 to vector<1x32xf32>
    %154 = arith.maximumf %152, %153 : vector<1x32xf32>
    %c0_89 = arith.constant 0 : index
    %c3_90 = arith.constant 3 : index
    %c0_91 = arith.constant 0 : index
    %155 = vector.load %arg12[%c0_89, %c3_90, %c0_91] : memref<1x8x32xf32, #tpu.memory_space<vmem>>, vector<1x1x32xf32>
    %156 = vector.shape_cast %155 : vector<1x1x32xf32> to vector<1x32xf32>
    %157 = vector.shape_cast %154 : vector<1x32xf32> to vector<1x1x32xf32>
    tpu.vector_store %arg12[%c0_89, %c3_90, %c0_91], %157 {strides = array<i32>} : memref<1x8x32xf32, #tpu.memory_space<vmem>>, vector<1x1x32xf32>,
    %158 = arith.truncf %152 : vector<1x32xf32> to vector<1x32xbf16>
    %cst_92 = arith.constant dense<0.000000e+00> : vector<1x32xf32>
    %159 = tpu.matmul %158, %21, %cst_92 {dimension_numbers = #tpu.dot_dimension_numbers<[1], [0], [0], [1], [0, 0, 1, 1], [], []>} : vector<1x32xbf16>, vector<32x32xbf16>, vector<1x32xf32> -> vector<1x32xf32>
    %cst_93 = arith.constant dense<0.000000e+00> : vector<1x32xf32>
    %160 = tpu.matmul %158, %22, %cst_93 {dimension_numbers = #tpu.dot_dimension_numbers<[1], [0], [0], [1], [0, 0, 1, 1], [], []>} : vector<1x32xbf16>, vector<32x32xbf16>, vector<1x32xf32> -> vector<1x32xf32>
    %cst_94 = arith.constant dense<0.000000e+00> : vector<1x32xf32>
    %161 = tpu.matmul %158, %23, %cst_94 {dimension_numbers = #tpu.dot_dimension_numbers<[1], [0], [0], [1], [0, 0, 1, 1], [], []>} : vector<1x32xbf16>, vector<32x32xbf16>, vector<1x32xf32> -> vector<1x32xf32>
    %c4 = arith.constant 4 : index
    %c0_95 = arith.constant 0 : index
    %162 = vector.load %arg13[%c4, %c0_95] : memref<8x32xf32, #tpu.memory_space<vmem>>, vector<1x32xf32>
    %163 = arith.addf %162, %159 : vector<1x32xf32>
    %164 = arith.negf %163 : vector<1x32xf32>
    %165 = math.exp %164 : vector<1x32xf32>
    %cst_96 = arith.constant 1.000000e+00 : f32
    %166 = vector.broadcast %cst_96 : f32 to vector<1x32xf32>
    %167 = arith.addf %166, %165 : vector<1x32xf32>
    %168 = arith.divf %166, %167 : vector<1x32xf32>
    %c4_97 = arith.constant 4 : index
    %c0_98 = arith.constant 0 : index
    %169 = vector.load %arg14[%c4_97, %c0_98] : memref<8x32xf32, #tpu.memory_space<vmem>>, vector<1x32xf32>
    %170 = arith.addf %169, %160 : vector<1x32xf32>
    %171 = arith.negf %170 : vector<1x32xf32>
    %172 = math.exp %171 : vector<1x32xf32>
    %cst_99 = arith.constant 1.000000e+00 : f32
    %173 = vector.broadcast %cst_99 : f32 to vector<1x32xf32>
    %174 = arith.addf %173, %172 : vector<1x32xf32>
    %175 = arith.divf %173, %174 : vector<1x32xf32>
    %c4_100 = arith.constant 4 : index
    %c0_101 = arith.constant 0 : index
    %176 = vector.load %arg15[%c4_100, %c0_101] : memref<8x32xf32, #tpu.memory_space<vmem>>, vector<1x32xf32>
    %177 = arith.addf %161, %24 : vector<1x32xf32>
    %178 = arith.mulf %168, %177 : vector<1x32xf32>
    %179 = arith.addf %176, %178 : vector<1x32xf32>
    %180 = math.tanh %179 : vector<1x32xf32>
    %cst_102 = arith.constant 1.000000e+00 : f32
    %181 = vector.broadcast %cst_102 : f32 to vector<1x32xf32>
    %182 = arith.subf %181, %175 : vector<1x32xf32>
    %183 = arith.mulf %182, %180 : vector<1x32xf32>
    %184 = arith.mulf %175, %152 : vector<1x32xf32>
    %185 = arith.addf %183, %184 : vector<1x32xf32>
    %cst_103 = arith.constant 0.000000e+00 : f32
    %186 = vector.broadcast %cst_103 : f32 to vector<1x32xf32>
    %187 = arith.maximumf %185, %186 : vector<1x32xf32>
    %c0_104 = arith.constant 0 : index
    %c4_105 = arith.constant 4 : index
    %c0_106 = arith.constant 0 : index
    %188 = vector.load %arg12[%c0_104, %c4_105, %c0_106] : memref<1x8x32xf32, #tpu.memory_space<vmem>>, vector<1x1x32xf32>
    %189 = vector.shape_cast %188 : vector<1x1x32xf32> to vector<1x32xf32>
    %190 = vector.shape_cast %187 : vector<1x32xf32> to vector<1x1x32xf32>
    tpu.vector_store %arg12[%c0_104, %c4_105, %c0_106], %190 {strides = array<i32>} : memref<1x8x32xf32, #tpu.memory_space<vmem>>, vector<1x1x32xf32>,
    %191 = arith.truncf %185 : vector<1x32xf32> to vector<1x32xbf16>
    %cst_107 = arith.constant dense<0.000000e+00> : vector<1x32xf32>
    %192 = tpu.matmul %191, %21, %cst_107 {dimension_numbers = #tpu.dot_dimension_numbers<[1], [0], [0], [1], [0, 0, 1, 1], [], []>} : vector<1x32xbf16>, vector<32x32xbf16>, vector<1x32xf32> -> vector<1x32xf32>
    %cst_108 = arith.constant dense<0.000000e+00> : vector<1x32xf32>
    %193 = tpu.matmul %191, %22, %cst_108 {dimension_numbers = #tpu.dot_dimension_numbers<[1], [0], [0], [1], [0, 0, 1, 1], [], []>} : vector<1x32xbf16>, vector<32x32xbf16>, vector<1x32xf32> -> vector<1x32xf32>
    %cst_109 = arith.constant dense<0.000000e+00> : vector<1x32xf32>
    %194 = tpu.matmul %191, %23, %cst_109 {dimension_numbers = #tpu.dot_dimension_numbers<[1], [0], [0], [1], [0, 0, 1, 1], [], []>} : vector<1x32xbf16>, vector<32x32xbf16>, vector<1x32xf32> -> vector<1x32xf32>
    %c5 = arith.constant 5 : index
    %c0_110 = arith.constant 0 : index
    %195 = vector.load %arg13[%c5, %c0_110] : memref<8x32xf32, #tpu.memory_space<vmem>>, vector<1x32xf32>
    %196 = arith.addf %195, %192 : vector<1x32xf32>
    %197 = arith.negf %196 : vector<1x32xf32>
    %198 = math.exp %197 : vector<1x32xf32>
    %cst_111 = arith.constant 1.000000e+00 : f32
    %199 = vector.broadcast %cst_111 : f32 to vector<1x32xf32>
    %200 = arith.addf %199, %198 : vector<1x32xf32>
    %201 = arith.divf %199, %200 : vector<1x32xf32>
    %c5_112 = arith.constant 5 : index
    %c0_113 = arith.constant 0 : index
    %202 = vector.load %arg14[%c5_112, %c0_113] : memref<8x32xf32, #tpu.memory_space<vmem>>, vector<1x32xf32>
    %203 = arith.addf %202, %193 : vector<1x32xf32>
    %204 = arith.negf %203 : vector<1x32xf32>
    %205 = math.exp %204 : vector<1x32xf32>
    %cst_114 = arith.constant 1.000000e+00 : f32
    %206 = vector.broadcast %cst_114 : f32 to vector<1x32xf32>
    %207 = arith.addf %206, %205 : vector<1x32xf32>
    %208 = arith.divf %206, %207 : vector<1x32xf32>
    %c5_115 = arith.constant 5 : index
    %c0_116 = arith.constant 0 : index
    %209 = vector.load %arg15[%c5_115, %c0_116] : memref<8x32xf32, #tpu.memory_space<vmem>>, vector<1x32xf32>
    %210 = arith.addf %194, %24 : vector<1x32xf32>
    %211 = arith.mulf %201, %210 : vector<1x32xf32>
    %212 = arith.addf %209, %211 : vector<1x32xf32>
    %213 = math.tanh %212 : vector<1x32xf32>
    %cst_117 = arith.constant 1.000000e+00 : f32
    %214 = vector.broadcast %cst_117 : f32 to vector<1x32xf32>
    %215 = arith.subf %214, %208 : vector<1x32xf32>
    %216 = arith.mulf %215, %213 : vector<1x32xf32>
    %217 = arith.mulf %208, %185 : vector<1x32xf32>
    %218 = arith.addf %216, %217 : vector<1x32xf32>
    %cst_118 = arith.constant 0.000000e+00 : f32
    %219 = vector.broadcast %cst_118 : f32 to vector<1x32xf32>
    %220 = arith.maximumf %218, %219 : vector<1x32xf32>
    %c0_119 = arith.constant 0 : index
    %c5_120 = arith.constant 5 : index
    %c0_121 = arith.constant 0 : index
    %221 = vector.load %arg12[%c0_119, %c5_120, %c0_121] : memref<1x8x32xf32, #tpu.memory_space<vmem>>, vector<1x1x32xf32>
    %222 = vector.shape_cast %221 : vector<1x1x32xf32> to vector<1x32xf32>
    %223 = vector.shape_cast %220 : vector<1x32xf32> to vector<1x1x32xf32>
    tpu.vector_store %arg12[%c0_119, %c5_120, %c0_121], %223 {strides = array<i32>} : memref<1x8x32xf32, #tpu.memory_space<vmem>>, vector<1x1x32xf32>,
    %224 = arith.truncf %218 : vector<1x32xf32> to vector<1x32xbf16>
    %cst_122 = arith.constant dense<0.000000e+00> : vector<1x32xf32>
    %225 = tpu.matmul %224, %21, %cst_122 {dimension_numbers = #tpu.dot_dimension_numbers<[1], [0], [0], [1], [0, 0, 1, 1], [], []>} : vector<1x32xbf16>, vector<32x32xbf16>, vector<1x32xf32> -> vector<1x32xf32>
    %cst_123 = arith.constant dense<0.000000e+00> : vector<1x32xf32>
    %226 = tpu.matmul %224, %22, %cst_123 {dimension_numbers = #tpu.dot_dimension_numbers<[1], [0], [0], [1], [0, 0, 1, 1], [], []>} : vector<1x32xbf16>, vector<32x32xbf16>, vector<1x32xf32> -> vector<1x32xf32>
    %cst_124 = arith.constant dense<0.000000e+00> : vector<1x32xf32>
    %227 = tpu.matmul %224, %23, %cst_124 {dimension_numbers = #tpu.dot_dimension_numbers<[1], [0], [0], [1], [0, 0, 1, 1], [], []>} : vector<1x32xbf16>, vector<32x32xbf16>, vector<1x32xf32> -> vector<1x32xf32>
    %c6 = arith.constant 6 : index
    %c0_125 = arith.constant 0 : index
    %228 = vector.load %arg13[%c6, %c0_125] : memref<8x32xf32, #tpu.memory_space<vmem>>, vector<1x32xf32>
    %229 = arith.addf %228, %225 : vector<1x32xf32>
    %230 = arith.negf %229 : vector<1x32xf32>
    %231 = math.exp %230 : vector<1x32xf32>
    %cst_126 = arith.constant 1.000000e+00 : f32
    %232 = vector.broadcast %cst_126 : f32 to vector<1x32xf32>
    %233 = arith.addf %232, %231 : vector<1x32xf32>
    %234 = arith.divf %232, %233 : vector<1x32xf32>
    %c6_127 = arith.constant 6 : index
    %c0_128 = arith.constant 0 : index
    %235 = vector.load %arg14[%c6_127, %c0_128] : memref<8x32xf32, #tpu.memory_space<vmem>>, vector<1x32xf32>
    %236 = arith.addf %235, %226 : vector<1x32xf32>
    %237 = arith.negf %236 : vector<1x32xf32>
    %238 = math.exp %237 : vector<1x32xf32>
    %cst_129 = arith.constant 1.000000e+00 : f32
    %239 = vector.broadcast %cst_129 : f32 to vector<1x32xf32>
    %240 = arith.addf %239, %238 : vector<1x32xf32>
    %241 = arith.divf %239, %240 : vector<1x32xf32>
    %c6_130 = arith.constant 6 : index
    %c0_131 = arith.constant 0 : index
    %242 = vector.load %arg15[%c6_130, %c0_131] : memref<8x32xf32, #tpu.memory_space<vmem>>, vector<1x32xf32>
    %243 = arith.addf %227, %24 : vector<1x32xf32>
    %244 = arith.mulf %234, %243 : vector<1x32xf32>
    %245 = arith.addf %242, %244 : vector<1x32xf32>
    %246 = math.tanh %245 : vector<1x32xf32>
    %cst_132 = arith.constant 1.000000e+00 : f32
    %247 = vector.broadcast %cst_132 : f32 to vector<1x32xf32>
    %248 = arith.subf %247, %241 : vector<1x32xf32>
    %249 = arith.mulf %248, %246 : vector<1x32xf32>
    %250 = arith.mulf %241, %218 : vector<1x32xf32>
    %251 = arith.addf %249, %250 : vector<1x32xf32>
    %cst_133 = arith.constant 0.000000e+00 : f32
    %252 = vector.broadcast %cst_133 : f32 to vector<1x32xf32>
    %253 = arith.maximumf %251, %252 : vector<1x32xf32>
    %c0_134 = arith.constant 0 : index
    %c6_135 = arith.constant 6 : index
    %c0_136 = arith.constant 0 : index
    %254 = vector.load %arg12[%c0_134, %c6_135, %c0_136] : memref<1x8x32xf32, #tpu.memory_space<vmem>>, vector<1x1x32xf32>
    %255 = vector.shape_cast %254 : vector<1x1x32xf32> to vector<1x32xf32>
    %256 = vector.shape_cast %253 : vector<1x32xf32> to vector<1x1x32xf32>
    tpu.vector_store %arg12[%c0_134, %c6_135, %c0_136], %256 {strides = array<i32>} : memref<1x8x32xf32, #tpu.memory_space<vmem>>, vector<1x1x32xf32>,
    %257 = arith.truncf %251 : vector<1x32xf32> to vector<1x32xbf16>
    %cst_137 = arith.constant dense<0.000000e+00> : vector<1x32xf32>
    %258 = tpu.matmul %257, %21, %cst_137 {dimension_numbers = #tpu.dot_dimension_numbers<[1], [0], [0], [1], [0, 0, 1, 1], [], []>} : vector<1x32xbf16>, vector<32x32xbf16>, vector<1x32xf32> -> vector<1x32xf32>
    %cst_138 = arith.constant dense<0.000000e+00> : vector<1x32xf32>
    %259 = tpu.matmul %257, %22, %cst_138 {dimension_numbers = #tpu.dot_dimension_numbers<[1], [0], [0], [1], [0, 0, 1, 1], [], []>} : vector<1x32xbf16>, vector<32x32xbf16>, vector<1x32xf32> -> vector<1x32xf32>
    %cst_139 = arith.constant dense<0.000000e+00> : vector<1x32xf32>
    %260 = tpu.matmul %257, %23, %cst_139 {dimension_numbers = #tpu.dot_dimension_numbers<[1], [0], [0], [1], [0, 0, 1, 1], [], []>} : vector<1x32xbf16>, vector<32x32xbf16>, vector<1x32xf32> -> vector<1x32xf32>
    %c7 = arith.constant 7 : index
    %c0_140 = arith.constant 0 : index
    %261 = vector.load %arg13[%c7, %c0_140] : memref<8x32xf32, #tpu.memory_space<vmem>>, vector<1x32xf32>
    %262 = arith.addf %261, %258 : vector<1x32xf32>
    %263 = arith.negf %262 : vector<1x32xf32>
    %264 = math.exp %263 : vector<1x32xf32>
    %cst_141 = arith.constant 1.000000e+00 : f32
    %265 = vector.broadcast %cst_141 : f32 to vector<1x32xf32>
    %266 = arith.addf %265, %264 : vector<1x32xf32>
    %267 = arith.divf %265, %266 : vector<1x32xf32>
    %c7_142 = arith.constant 7 : index
    %c0_143 = arith.constant 0 : index
    %268 = vector.load %arg14[%c7_142, %c0_143] : memref<8x32xf32, #tpu.memory_space<vmem>>, vector<1x32xf32>
    %269 = arith.addf %268, %259 : vector<1x32xf32>
    %270 = arith.negf %269 : vector<1x32xf32>
    %271 = math.exp %270 : vector<1x32xf32>
    %cst_144 = arith.constant 1.000000e+00 : f32
    %272 = vector.broadcast %cst_144 : f32 to vector<1x32xf32>
    %273 = arith.addf %272, %271 : vector<1x32xf32>
    %274 = arith.divf %272, %273 : vector<1x32xf32>
    %c7_145 = arith.constant 7 : index
    %c0_146 = arith.constant 0 : index
    %275 = vector.load %arg15[%c7_145, %c0_146] : memref<8x32xf32, #tpu.memory_space<vmem>>, vector<1x32xf32>
    %276 = arith.addf %260, %24 : vector<1x32xf32>
    %277 = arith.mulf %267, %276 : vector<1x32xf32>
    %278 = arith.addf %275, %277 : vector<1x32xf32>
    %279 = math.tanh %278 : vector<1x32xf32>
    %cst_147 = arith.constant 1.000000e+00 : f32
    %280 = vector.broadcast %cst_147 : f32 to vector<1x32xf32>
    %281 = arith.subf %280, %274 : vector<1x32xf32>
    %282 = arith.mulf %281, %279 : vector<1x32xf32>
    %283 = arith.mulf %274, %251 : vector<1x32xf32>
    %284 = arith.addf %282, %283 : vector<1x32xf32>
    %cst_148 = arith.constant 0.000000e+00 : f32
    %285 = vector.broadcast %cst_148 : f32 to vector<1x32xf32>
    %286 = arith.maximumf %284, %285 : vector<1x32xf32>
    %c0_149 = arith.constant 0 : index
    %c7_150 = arith.constant 7 : index
    %c0_151 = arith.constant 0 : index
    %287 = vector.load %arg12[%c0_149, %c7_150, %c0_151] : memref<1x8x32xf32, #tpu.memory_space<vmem>>, vector<1x1x32xf32>
    %288 = vector.shape_cast %287 : vector<1x1x32xf32> to vector<1x32xf32>
    %289 = vector.shape_cast %286 : vector<1x32xf32> to vector<1x1x32xf32>
    tpu.vector_store %arg12[%c0_149, %c7_150, %c0_151], %289 {strides = array<i32>} : memref<1x8x32xf32, #tpu.memory_space<vmem>>, vector<1x1x32xf32>,
    return
  }
  func.func @transform_0(%arg0: i32) -> (i32, i32, i32) {
    %c0_i32 = arith.constant 0 : i32
    %c0_i32_0 = arith.constant 0 : i32
    %c0_i32_1 = arith.constant 0 : i32
    return %arg0, %c0_i32, %c0_i32_0 : i32, i32, i32
  }
  func.func @transform_1(%arg0: i32) -> (i32, i32) {
    %c0_i32 = arith.constant 0 : i32
    %c0_i32_0 = arith.constant 0 : i32
    %c0_i32_1 = arith.constant 0 : i32
    return %c0_i32, %c0_i32_0 : i32, i32
  }
  func.func @transform_2(%arg0: i32) -> (i32, i32) {
    %c0_i32 = arith.constant 0 : i32
    %c0_i32_0 = arith.constant 0 : i32
    %c0_i32_1 = arith.constant 0 : i32
    return %c0_i32, %c0_i32_0 : i32, i32
  }
  func.func @transform_3(%arg0: i32) -> (i32, i32) {
    %c0_i32 = arith.constant 0 : i32
    %c0_i32_0 = arith.constant 0 : i32
    %c0_i32_1 = arith.constant 0 : i32
    return %c0_i32, %c0_i32_0 : i32, i32
  }
  func.func @transform_4(%arg0: i32) -> (i32, i32) {
    %c0_i32 = arith.constant 0 : i32
    %c0_i32_0 = arith.constant 0 : i32
    %c0_i32_1 = arith.constant 0 : i32
    return %c0_i32, %c0_i32_0 : i32, i32
  }
  func.func @transform_5(%arg0: i32) -> (i32, i32) {
    %c0_i32 = arith.constant 0 : i32
    %c0_i32_0 = arith.constant 0 : i32
    %c0_i32_1 = arith.constant 0 : i32
    return %c0_i32, %c0_i32_0 : i32, i32
  }
  func.func @transform_6(%arg0: i32) -> (i32, i32) {
    %c0_i32 = arith.constant 0 : i32
    %c0_i32_0 = arith.constant 0 : i32
    %c0_i32_1 = arith.constant 0 : i32
    return %c0_i32, %c0_i32_0 : i32, i32
  }
  func.func @transform_7(%arg0: i32) -> (i32, i32) {
    %c0_i32 = arith.constant 0 : i32
    %c0_i32_0 = arith.constant 0 : i32
    %c0_i32_1 = arith.constant 0 : i32
    return %c0_i32, %c0_i32_0 : i32, i32
  }
  func.func @transform_8(%arg0: i32) -> (i32, i32) {
    %c0_i32 = arith.constant 0 : i32
    %c0_i32_0 = arith.constant 0 : i32
    %c0_i32_1 = arith.constant 0 : i32
    return %c0_i32, %c0_i32_0 : i32, i32
  }
  func.func @transform_9(%arg0: i32) -> (i32, i32) {
    %c0_i32 = arith.constant 0 : i32
    %c0_i32_0 = arith.constant 0 : i32
    %c0_i32_1 = arith.constant 0 : i32
    return %c0_i32, %c0_i32_0 : i32, i32
  }
  func.func @transform_10(%arg0: i32) -> (i32, i32) {
    %c0_i32 = arith.constant 0 : i32
    %c0_i32_0 = arith.constant 0 : i32
    %c0_i32_1 = arith.constant 0 : i32
    return %c0_i32, %c0_i32_0 : i32, i32
  }
  func.func @transform_11(%arg0: i32) -> (i32, i32, i32) {
    %c0_i32 = arith.constant 0 : i32
    %c0_i32_0 = arith.constant 0 : i32
    %c0_i32_1 = arith.constant 0 : i32
    return %arg0, %c0_i32, %c0_i32_0 : i32, i32, i32
  }
}

module attributes {stable_mosaic.version = 11 : i64} {
  func.func @kernel(%arg0: i32, %arg1: memref<1x8x32xf32, #tpu.memory_space<vmem>>, %arg2: memref<4x32x16xbf16, #tpu.memory_space<vmem>>, %arg3: memref<1x16xf32, #tpu.memory_space<vmem>>, %arg4: memref<16x4xbf16, #tpu.memory_space<vmem>>, %arg5: memref<1x4xf32, #tpu.memory_space<vmem>>, %arg6: memref<1x8x8xf32, #tpu.memory_space<vmem>>) attributes {dimension_semantics = [#tpu.dimension_semantics<parallel>], iteration_bounds = array<i64: 2>, scalar_prefetch = 0 : i64, scratch_operands = 0 : i64, tpu.core_type = #tpu.core_type<tc>, window_params = [{transform_indices = @transform_0, window_bounds = array<i64: 1, 8, 32>}, {pipeline_mode = #tpu.pipeline_mode<synchronous>, transform_indices = @transform_1, window_bounds = array<i64: 4, 32, 16>}, {pipeline_mode = #tpu.pipeline_mode<synchronous>, transform_indices = @transform_2, window_bounds = array<i64: 1, 16>}, {pipeline_mode = #tpu.pipeline_mode<synchronous>, transform_indices = @transform_3, window_bounds = array<i64: 16, 4>}, {pipeline_mode = #tpu.pipeline_mode<synchronous>, transform_indices = @transform_4, window_bounds = array<i64: 1, 4>}, {transform_indices = @transform_5, window_bounds = array<i64: 1, 8, 8>}]} {
    %c0 = arith.constant 0 : index
    %c0_0 = arith.constant 0 : index
    %c0_1 = arith.constant 0 : index
    %0 = vector.load %arg1[%c0, %c0_0, %c0_1] : memref<1x8x32xf32, #tpu.memory_space<vmem>>, vector<1x8x32xf32>
    %1 = vector.shape_cast %0 : vector<1x8x32xf32> to vector<8x32xf32>
    %cst = arith.constant 0.000000e+00 : f32
    %2 = vector.broadcast %cst : f32 to vector<1x32xf32>
    %cst_2 = arith.constant 0.000000e+00 : f32
    %3 = vector.broadcast %cst_2 : f32 to vector<1x32xf32>
    %4 = tpu.concatenate %2, %1, %3 in 0 : vector<1x32xf32>, vector<8x32xf32>, vector<1x32xf32> -> vector<10x32xf32>
    %c0_3 = arith.constant 0 : index
    %c0_4 = arith.constant 0 : index
    %5 = vector.load %arg3[%c0_3, %c0_4] : memref<1x16xf32, #tpu.memory_space<vmem>>, vector<1x16xf32>
    %c0_5 = arith.constant 0 : index
    %c0_6 = arith.constant 0 : index
    %6 = vector.load %arg4[%c0_5, %c0_6] : memref<16x4xbf16, #tpu.memory_space<vmem>>, vector<16x4xbf16>
    %c0_7 = arith.constant 0 : index
    %c0_8 = arith.constant 0 : index
    %7 = vector.load %arg5[%c0_7, %c0_8] : memref<1x4xf32, #tpu.memory_space<vmem>>, vector<1x4xf32>
    %8 = vector.extract_strided_slice %4 {offsets = [1, 0], sizes = [8, 32], strides = [1, 1]} : vector<10x32xf32> to vector<8x32xf32>
    %9 = arith.truncf %8 : vector<8x32xf32> to vector<8x32xbf16>
    %10 = vector.extract_strided_slice %4 {offsets = [0, 0], sizes = [8, 32], strides = [1, 1]} : vector<10x32xf32> to vector<8x32xf32>
    %11 = arith.truncf %10 : vector<8x32xf32> to vector<8x32xbf16>
    %c1 = arith.constant 1 : index
    %c0_9 = arith.constant 0 : index
    %c0_10 = arith.constant 0 : index
    %12 = vector.load %arg2[%c1, %c0_9, %c0_10] : memref<4x32x16xbf16, #tpu.memory_space<vmem>>, vector<1x32x16xbf16>
    %13 = vector.shape_cast %12 : vector<1x32x16xbf16> to vector<32x16xbf16>
    %cst_11 = arith.constant dense<0.000000e+00> : vector<8x16xf32>
    %14 = tpu.matmul %9, %13, %cst_11 {dimension_numbers = #tpu.dot_dimension_numbers<[1], [0], [0], [1], [0, 0, 1, 1], [], []>} : vector<8x32xbf16>, vector<32x16xbf16>, vector<8x16xf32> -> vector<8x16xf32>
    %c3 = arith.constant 3 : index
    %c0_12 = arith.constant 0 : index
    %c0_13 = arith.constant 0 : index
    %15 = vector.load %arg2[%c3, %c0_12, %c0_13] : memref<4x32x16xbf16, #tpu.memory_space<vmem>>, vector<1x32x16xbf16>
    %16 = vector.shape_cast %15 : vector<1x32x16xbf16> to vector<32x16xbf16>
    %cst_14 = arith.constant dense<0.000000e+00> : vector<8x16xf32>
    %17 = tpu.matmul %11, %16, %cst_14 {dimension_numbers = #tpu.dot_dimension_numbers<[1], [0], [0], [1], [0, 0, 1, 1], [], []>} : vector<8x32xbf16>, vector<32x16xbf16>, vector<8x16xf32> -> vector<8x16xf32>
    %18 = arith.addf %14, %17 : vector<8x16xf32>
    %19 = vector.broadcast %5 : vector<1x16xf32> to vector<8x16xf32>
    %20 = arith.addf %18, %19 : vector<8x16xf32>
    %cst_15 = arith.constant 0.000000e+00 : f32
    %21 = vector.broadcast %cst_15 : f32 to vector<8x16xf32>
    %22 = arith.maximumf %20, %21 : vector<8x16xf32>
    %23 = arith.truncf %22 : vector<8x16xf32> to vector<8x16xbf16>
    %cst_16 = arith.constant dense<0.000000e+00> : vector<8x4xf32>
    %24 = tpu.matmul %23, %6, %cst_16 {dimension_numbers = #tpu.dot_dimension_numbers<[1], [0], [0], [1], [0, 0, 1, 1], [], []>} : vector<8x16xbf16>, vector<16x4xbf16>, vector<8x4xf32> -> vector<8x4xf32>
    %25 = vector.broadcast %7 : vector<1x4xf32> to vector<8x4xf32>
    %26 = arith.addf %24, %25 : vector<8x4xf32>
    %27 = vector.extract_strided_slice %4 {offsets = [2, 0], sizes = [8, 32], strides = [1, 1]} : vector<10x32xf32> to vector<8x32xf32>
    %28 = arith.truncf %27 : vector<8x32xf32> to vector<8x32xbf16>
    %29 = vector.extract_strided_slice %4 {offsets = [1, 0], sizes = [8, 32], strides = [1, 1]} : vector<10x32xf32> to vector<8x32xf32>
    %30 = arith.truncf %29 : vector<8x32xf32> to vector<8x32xbf16>
    %c0_17 = arith.constant 0 : index
    %c0_18 = arith.constant 0 : index
    %c0_19 = arith.constant 0 : index
    %31 = vector.load %arg2[%c0_17, %c0_18, %c0_19] : memref<4x32x16xbf16, #tpu.memory_space<vmem>>, vector<1x32x16xbf16>
    %32 = vector.shape_cast %31 : vector<1x32x16xbf16> to vector<32x16xbf16>
    %cst_20 = arith.constant dense<0.000000e+00> : vector<8x16xf32>
    %33 = tpu.matmul %28, %32, %cst_20 {dimension_numbers = #tpu.dot_dimension_numbers<[1], [0], [0], [1], [0, 0, 1, 1], [], []>} : vector<8x32xbf16>, vector<32x16xbf16>, vector<8x16xf32> -> vector<8x16xf32>
    %c2 = arith.constant 2 : index
    %c0_21 = arith.constant 0 : index
    %c0_22 = arith.constant 0 : index
    %34 = vector.load %arg2[%c2, %c0_21, %c0_22] : memref<4x32x16xbf16, #tpu.memory_space<vmem>>, vector<1x32x16xbf16>
    %35 = vector.shape_cast %34 : vector<1x32x16xbf16> to vector<32x16xbf16>
    %cst_23 = arith.constant dense<0.000000e+00> : vector<8x16xf32>
    %36 = tpu.matmul %30, %35, %cst_23 {dimension_numbers = #tpu.dot_dimension_numbers<[1], [0], [0], [1], [0, 0, 1, 1], [], []>} : vector<8x32xbf16>, vector<32x16xbf16>, vector<8x16xf32> -> vector<8x16xf32>
    %37 = arith.addf %33, %36 : vector<8x16xf32>
    %38 = vector.broadcast %5 : vector<1x16xf32> to vector<8x16xf32>
    %39 = arith.addf %37, %38 : vector<8x16xf32>
    %cst_24 = arith.constant 0.000000e+00 : f32
    %40 = vector.broadcast %cst_24 : f32 to vector<8x16xf32>
    %41 = arith.maximumf %39, %40 : vector<8x16xf32>
    %42 = arith.truncf %41 : vector<8x16xf32> to vector<8x16xbf16>
    %cst_25 = arith.constant dense<0.000000e+00> : vector<8x4xf32>
    %43 = tpu.matmul %42, %6, %cst_25 {dimension_numbers = #tpu.dot_dimension_numbers<[1], [0], [0], [1], [0, 0, 1, 1], [], []>} : vector<8x16xbf16>, vector<16x4xbf16>, vector<8x4xf32> -> vector<8x4xf32>
    %44 = vector.broadcast %7 : vector<1x4xf32> to vector<8x4xf32>
    %45 = arith.addf %43, %44 : vector<8x4xf32>
    %46 = tpu.concatenate %26, %45 in 1 : vector<8x4xf32>, vector<8x4xf32> -> vector<8x8xf32>
    %c0_26 = arith.constant 0 : index
    %c0_27 = arith.constant 0 : index
    %c0_28 = arith.constant 0 : index
    %47 = vector.load %arg6[%c0_26, %c0_27, %c0_28] : memref<1x8x8xf32, #tpu.memory_space<vmem>>, vector<1x8x8xf32>
    %48 = vector.shape_cast %47 : vector<1x8x8xf32> to vector<8x8xf32>
    %49 = vector.shape_cast %46 : vector<8x8xf32> to vector<1x8x8xf32>
    tpu.vector_store %arg6[%c0_26, %c0_27, %c0_28], %49 {strides = array<i32>} : memref<1x8x8xf32, #tpu.memory_space<vmem>>, vector<1x8x8xf32>,
    return
  }
  func.func @transform_0(%arg0: i32) -> (i32, i32, i32) {
    %c0_i32 = arith.constant 0 : i32
    %c0_i32_0 = arith.constant 0 : i32
    %c0_i32_1 = arith.constant 0 : i32
    return %arg0, %c0_i32, %c0_i32_0 : i32, i32, i32
  }
  func.func @transform_1(%arg0: i32) -> (i32, i32, i32) {
    %c0_i32 = arith.constant 0 : i32
    %c0_i32_0 = arith.constant 0 : i32
    %c0_i32_1 = arith.constant 0 : i32
    %c0_i32_2 = arith.constant 0 : i32
    return %c0_i32, %c0_i32_0, %c0_i32_1 : i32, i32, i32
  }
  func.func @transform_2(%arg0: i32) -> (i32, i32) {
    %c0_i32 = arith.constant 0 : i32
    %c0_i32_0 = arith.constant 0 : i32
    %c0_i32_1 = arith.constant 0 : i32
    return %c0_i32, %c0_i32_0 : i32, i32
  }
  func.func @transform_3(%arg0: i32) -> (i32, i32) {
    %c0_i32 = arith.constant 0 : i32
    %c0_i32_0 = arith.constant 0 : i32
    %c0_i32_1 = arith.constant 0 : i32
    return %c0_i32, %c0_i32_0 : i32, i32
  }
  func.func @transform_4(%arg0: i32) -> (i32, i32) {
    %c0_i32 = arith.constant 0 : i32
    %c0_i32_0 = arith.constant 0 : i32
    %c0_i32_1 = arith.constant 0 : i32
    return %c0_i32, %c0_i32_0 : i32, i32
  }
  func.func @transform_5(%arg0: i32) -> (i32, i32, i32) {
    %c0_i32 = arith.constant 0 : i32
    %c0_i32_0 = arith.constant 0 : i32
    %c0_i32_1 = arith.constant 0 : i32
    return %arg0, %c0_i32, %c0_i32_0 : i32, i32, i32
  }
}

</mosaic_0001>

<llo_original>
// kernel: generator_forward.5
$region0: #{generator_forward.5}
  #allocation0 [shape = 'u32[]', space=smem, size = 0x4, offset = 0x4, fixed_abs, tag = 'smem constant byte address 0x4 - core index']
  #allocation1 [shape = 'u32[72,128]{1,0:T(1,128)}', space=vmem, size = 0x9000, scoped, tag = 'internal scratch']
  %s0 = inlined_call_operand.vmem [shape: f32[2,32], index: 0, kind: input, shape index: {}]
  %s1 = inlined_call_operand.vmem [shape: bf16[32,4], index: 1, kind: input, shape index: {}]
  %s2 = inlined_call_operand.vmem [shape: f32[1,4], index: 2, kind: input, shape index: {}]
  %s3 = inlined_call_operand.vmem [shape: f32[2,4], index: 3, kind: output, shape index: {}]
  %s4 = sld [smem:[#allocation0]]
  $region22: #{generator_forward.5} parent=0
    _
  %s6 = ssub.s32 1, %s4
  %s7 = scalar_select 0, %s6, %s4
  // Predicated region
  $region2: #{generator_forward.5} parent=0 // pred_check
    _
  $region3: #{generator_forward.5} parent=0 // pred_check_branch
    %9 = sbr.rel (0) target = $region5
  $region4: #{generator_forward.5} parent=0 // pred_region
    _
  $region5: #{generator_forward.5} parent=0 // pred_fallthru
    _
  // Predicated region
  $region6: #{generator_forward.5} parent=0 // pred_check
    _
  $region7: #{generator_forward.5} parent=0 // pred_check_branch
    %11 = sbr.rel (0) target = $region9
  $region8: #{generator_forward.5} parent=0 // pred_region
    _
  $region9: #{generator_forward.5} parent=0 // pred_fallthru
    _
  // Predicated region
  $region10: #{generator_forward.5} parent=0 // pred_check
    _
  $region11: #{generator_forward.5} parent=0 // pred_check_branch
    %13 = sbr.rel (0) target = $region13
  $region12: #{generator_forward.5} parent=0 // pred_region
    _
  $region13: #{generator_forward.5} parent=0 // pred_fallthru
    _
  %v15 = vld [vmem:[%s0] sm:$0x3]
  %v16 = vpack.c.bf16 %v15, %v15
  %v17 = vld [vmem:[%s1] sm:$0xf]
  %v18 = vld [vmem:[%s1 + $0x4] sm:$0xf]
  %v19 = vld [vmem:[%s1 + $0x8] sm:$0xf]
  %v20 = vld [vmem:[%s1 + $0xc] sm:$0xf]
  %v21 = vld [vmem:[%s2] sm:$0x1]
  %v23 = vperm.slane %v21, 0
  %v29 = vunpack.c.l.b16 %v17
  %v30 = vunpack.c.l.b16 %v18
  %v31 = vunpack.c.l.b16 %v19
  %v32 = vunpack.c.l.b16 %v20
  %v33 = vpack.c.b16 %v30, %v29
  %v34 = vpack.c.b16 %v32, %v31
  %vm37 = vcmask 261120
  %v39 = vsel %vm37, %v16, 0
  %41 = vmatpush.bf16.msra.mxu0 0
  %42 = vmatpush.bf16.msra.mxu0 0
  %43 = vmatpush.bf16.msra.mxu0 0
  %44 = vmatpush.bf16.msra.mxu0 0
  %45 = vmatpush.bf16.msra.mxu0 0
  %46 = vmatpush.bf16.msra.mxu0 0
  %47 = vmatpush.bf16.msra.mxu0 %v34
  %48 = vmatpush.bf16.msra.mxu0 %v33
  %49 = vmatmul.bf16.gmra.mxu0 %v39
  %v50 = vpop.f32.mrf.mxu0
  %v51 = vadd.f32 %v23, %v50
  %v52 = vpop.f32.mrf.mxu0
  %53 = vdwg.mxu0
  %v54 = vmax.f32 %v51, 0.0
  %vm55 = vcmask 25600
  %56 = vst.msk [vmem:[%s3] sm:$0x3] %vm55, %v54
  // Predicated region
  $region14: #{generator_forward.5} parent=0 // pred_check
    _
  $region15: #{generator_forward.5} parent=0 // pred_check_branch
    %58 = sbr.rel (0) target = $region17
  $region16: #{generator_forward.5} parent=0 // pred_region
    _
  $region17: #{generator_forward.5} parent=0 // pred_fallthru
    _
  // Predicated region
  $region18: #{generator_forward.5} parent=0 // pred_check
    _
  $region19: #{generator_forward.5} parent=0 // pred_check_branch
    %60 = sbr.rel (0) target = $region21
  $region20: #{generator_forward.5} parent=0 // pred_region
    _
  $region21: #{generator_forward.5} parent=0 // pred_fallthru
    _

// kernel: generator_forward.6
$region0: #{generator_forward.6}
  #allocation0 [shape = 'u32[]', space=smem, size = 0x4, offset = 0x4, fixed_abs, tag = 'smem constant byte address 0x4 - core index']
  #allocation1 [shape = 'u32[72,128]{1,0:T(1,128)}', space=vmem, size = 0x9000, scoped, tag = 'internal scratch']
  #allocation2 [shape = 'f32[4,64]{1,0:T(4,128)}', space=vmem, size = 0x800, scoped, tag = 'scratch operand']
  #allocation3 [shape = 'f32[4,64]{1,0:T(4,128)}', space=vmem, size = 0x800, scoped, tag = 'scratch operand']
  #allocation4 [shape = 'f32[4,64]{1,0:T(4,128)}', space=vmem, size = 0x800, scoped, tag = 'scratch operand']
  %s0 = inlined_call_operand.vmem [shape: f32[2,4,1], index: 0, kind: input, shape index: {}]
  %s1 = inlined_call_operand.vmem [shape: bf16[1,64], index: 1, kind: input, shape index: {}]
  %s2 = inlined_call_operand.vmem [shape: bf16[1,64], index: 2, kind: input, shape index: {}]
  %s3 = inlined_call_operand.vmem [shape: bf16[1,64], index: 3, kind: input, shape index: {}]
  %s4 = inlined_call_operand.hbm [shape: bf16[64,64], index: 4, kind: input, shape index: {}]
  %s5 = inlined_call_operand.hbm [shape: bf16[64,64], index: 5, kind: input, shape index: {}]
  %s6 = inlined_call_operand.hbm [shape: bf16[64,64], index: 6, kind: input, shape index: {}]
  %s7 = inlined_call_operand.vmem [shape: f32[1,64], index: 7, kind: input, shape index: {}]
  %s8 = inlined_call_operand.vmem [shape: f32[1,64], index: 8, kind: input, shape index: {}]
  %s9 = inlined_call_operand.vmem [shape: f32[1,64], index: 9, kind: input, shape index: {}]
  %s10 = inlined_call_operand.vmem [shape: f32[1,64], index: 10, kind: input, shape index: {}]
  %s11 = inlined_call_operand.vmem [shape: f32[2,4,64], index: 11, kind: output, shape index: {}]
  %s12 = sld [smem:[#allocation0]]
  $region89: #{generator_forward.6} parent=0
    _
  %s14 = ssub.s32 1, %s12
  %s15 = scalar_select 0, %s14, %s12
  $region1: #{generator_forward.6} parent=0
    #allocation5 [shape = 'u8[16384]{0}', space=vmem, size = 0x4000, scoped, tag = 'input window, operand 4, single buffered']
    #allocation6 [shape = 's32[2]{0}', space=sflag, size = 0x8, scoped, tag = 'scoped memory for generator_forward.6']
    #allocation7 [shape = 'u8[16384]{0}', space=vmem, size = 0x4000, scoped, tag = 'input window, operand 5, single buffered']
    #allocation8 [shape = 's32[1]{0}', space=sflag, size = 0x4, scoped, tag = 'scoped memory for generator_forward.6']
    #allocation9 [shape = 'u8[16384]{0}', space=vmem, size = 0x4000, scoped, tag = 'input window, operand 6, single buffered']
    %16 = vsyncpa [#allocation6], 0
    %17 = vsyncpa [#allocation8], 0
    loop: start=0, step=1, limit=4
    $region2: #{generator_forward.6} parent=1 // loop_pre_header
      _
    $region3: #{generator_forward.6} parent=1 // loop_header
      %s19 = sphi 0, %s23
      %p20 = scmp.ge.s32.totalorder %s19, 4
      %s29 = sphi 0, %s31
      %s32 = sphi 0, %s29
      %s33 = sphi 0, %s32
      %s49 = sphi 0, %s33
      %s53 = sphi 0, %s53
      %s55 = sphi 0, %s53
      %s56 = sphi 0, %s55
      %s70 = sphi 0, %s56
      %s74 = sphi 0, %s74
      %s76 = sphi 0, %s74
      %s77 = sphi 0, %s76
      %s91 = sphi 0, %s77
      %s95 = sphi 0, %s95
      %s97 = sphi 0, %s95
      %s98 = sphi 0, %s97
      %s112 = sphi 0, %s98
      %s116 = sphi 0, %s116
      %s118 = sphi 0, %s116
      %s119 = sphi 0, %s118
      %s133 = sphi 0, %s119
      %s137 = sphi 0, %s137
      %s139 = sphi 0, %s137
      %s140 = sphi 0, %s139
      %s154 = sphi 0, %s140
      %s158 = sphi 0, %s158
      %s160 = sphi 0, %s158
      %s161 = sphi 0, %s160
      %s175 = sphi 0, %s161
      %s179 = sphi 0, %s179
      %s181 = sphi 0, %s179
      %s182 = sphi 0, %s181
      %s196 = sphi 0, %s182
      %s200 = sphi 0, %s200
      %s202 = sphi 0, %s200
      %s203 = sphi 0, %s202
      %s217 = sphi 0, %s203
      %s221 = sphi 0, %s221
      %s223 = sphi 0, %s221
      %s224 = sphi 0, %s223
      %s238 = sphi 0, %s224
      %s242 = sphi 0, %s242
      %s244 = sphi 0, %s242
      %s245 = sphi 0, %s244
      %s259 = sphi 0, %s245
      %s265 = sphi 0, %s267
      %s268 = sphi 0, %s265
      %s269 = sphi 0, %s268
      %s285 = sphi 0, %s269
    $region4: #{generator_forward.6} parent=1 // loop_header_branch
      %22 = sbr.rel (%p20) target = $region8
    $region5: #{generator_forward.6} parent=1 // loop_body
      %s24 = ssub.s32 %s19, 1
      %s25 = ssub.s32 %s19, 2
      %s26 = sadd.s32 %s19, 1
      %s27 = ssub.s32 %s19, %s26
      %p28 = scmp.eq.s32.totalorder %s27, 0
      %s30 = sadd.s32 %s29, 1
      %s31 = scalar_select %p28, %s29, %s30
      %p34 = pneg %p28
      %p35 = scmp.eq.s32.totalorder %s19, 1
      %p36 = por %p34, %p35
      %p37 = scmp.ne.s32.totalorder %s29, %s32
      %p38 = scmp.eq.s32.totalorder %s19, 0
      %p39 = por %p37, %p38
      %p40 = scmp.ne.s32.totalorder %s29, %s32
      %p41 = scmp.eq.s32.totalorder %s24, 1
      %p42 = por %p40, %p41
      %p43 = scmp.ne.s32.totalorder %s32, %s33
      %p44 = scmp.eq.s32.totalorder %s24, 0
      %p45 = por %p43, %p44
      %p46 = scmp.ne.s32.totalorder %s32, %s33
      %p47 = scmp.eq.s32.totalorder %s25, 1
      %p48 = por %p46, %p47
      %p50 = scmp.ne.s32.totalorder %s33, %s49
      %p51 = scmp.eq.s32.totalorder %s25, 0
      %p52 = por %p50, %p51
      %s54 = sadd.s32 %s53, 1
      %p57 = scmp.eq.s32.totalorder %s19, 1
      %p58 = scmp.ne.s32.totalorder %s53, %s55
      %p59 = scmp.eq.s32.totalorder %s19, 0
      %p60 = por %p58, %p59
      %p61 = scmp.ne.s32.totalorder %s53, %s55
      %p62 = scmp.eq.s32.totalorder %s24, 1
      %p63 = por %p61, %p62
      %p64 = scmp.ne.s32.totalorder %s55, %s56
      %p65 = scmp.eq.s32.totalorder %s24, 0
      %p66 = por %p64, %p65
      %p67 = scmp.ne.s32.totalorder %s55, %s56
      %p68 = scmp.eq.s32.totalorder %s25, 1
      %p69 = por %p67, %p68
      %p71 = scmp.ne.s32.totalorder %s56, %s70
      %p72 = scmp.eq.s32.totalorder %s25, 0
      %p73 = por %p71, %p72
      %s75 = sadd.s32 %s74, 1
      %p78 = scmp.eq.s32.totalorder %s19, 1
      %p79 = scmp.ne.s32.totalorder %s74, %s76
      %p80 = scmp.eq.s32.totalorder %s19, 0
      %p81 = por %p79, %p80
      %p82 = scmp.ne.s32.totalorder %s74, %s76
      %p83 = scmp.eq.s32.totalorder %s24, 1
      %p84 = por %p82, %p83
      %p85 = scmp.ne.s32.totalorder %s76, %s77
      %p86 = scmp.eq.s32.totalorder %s24, 0
      %p87 = por %p85, %p86
      %p88 = scmp.ne.s32.totalorder %s76, %s77
      %p89 = scmp.eq.s32.totalorder %s25, 1
      %p90 = por %p88, %p89
      %p92 = scmp.ne.s32.totalorder %s77, %s91
      %p93 = scmp.eq.s32.totalorder %s25, 0
      %p94 = por %p92, %p93
      %s96 = sadd.s32 %s95, 1
      %p99 = scmp.eq.s32.totalorder %s19, 1
      %p100 = scmp.ne.s32.totalorder %s95, %s97
      %p101 = scmp.eq.s32.totalorder %s19, 0
      %p102 = por %p100, %p101
      %p103 = scmp.ne.s32.totalorder %s95, %s97
      %p104 = scmp.eq.s32.totalorder %s24, 1
      %p105 = por %p103, %p104
      %p106 = scmp.ne.s32.totalorder %s97, %s98
      %p107 = scmp.eq.s32.totalorder %s24, 0
      %p108 = por %p106, %p107
      %p109 = scmp.ne.s32.totalorder %s97, %s98
      %p110 = scmp.eq.s32.totalorder %s25, 1
      %p111 = por %p109, %p110
      %p113 = scmp.ne.s32.totalorder %s98, %s112
      %p114 = scmp.eq.s32.totalorder %s25, 0
      %p115 = por %p113, %p114
      %s117 = sadd.s32 %s116, 1
      %p120 = scmp.eq.s32.totalorder %s19, 1
      %p121 = scmp.ne.s32.totalorder %s116, %s118
      %p122 = scmp.eq.s32.totalorder %s19, 0
      %p123 = por %p121, %p122
      %p124 = scmp.ne.s32.totalorder %s116, %s118
      %p125 = scmp.eq.s32.totalorder %s24, 1
      %p126 = por %p124, %p125
      %p127 = scmp.ne.s32.totalorder %s118, %s119
      %p128 = scmp.eq.s32.totalorder %s24, 0
      %p129 = por %p127, %p128
      %p130 = scmp.ne.s32.totalorder %s118, %s119
      %p131 = scmp.eq.s32.totalorder %s25, 1
      %p132 = por %p130, %p131
      %p134 = scmp.ne.s32.totalorder %s119, %s133
      %p135 = scmp.eq.s32.totalorder %s25, 0
      %p136 = por %p134, %p135
      %s138 = sadd.s32 %s137, 1
      %p141 = scmp.eq.s32.totalorder %s19, 1
      %p142 = scmp.ne.s32.totalorder %s137, %s139
      %p143 = scmp.eq.s32.totalorder %s19, 0
      %p144 = por %p142, %p143
      %p145 = scmp.ne.s32.totalorder %s137, %s139
      %p146 = scmp.eq.s32.totalorder %s24, 1
      %p147 = por %p145, %p146
      %p148 = scmp.ne.s32.totalorder %s139, %s140
      %p149 = scmp.eq.s32.totalorder %s24, 0
      %p150 = por %p148, %p149
      %p151 = scmp.ne.s32.totalorder %s139, %s140
      %p152 = scmp.eq.s32.totalorder %s25, 1
      %p153 = por %p151, %p152
      %p155 = scmp.ne.s32.totalorder %s140, %s154
      %p156 = scmp.eq.s32.totalorder %s25, 0
      %p157 = por %p155, %p156
      %s159 = sadd.s32 %s158, 1
      %p162 = scmp.eq.s32.totalorder %s19, 1
      %p163 = scmp.ne.s32.totalorder %s158, %s160
      %p164 = scmp.eq.s32.totalorder %s19, 0
      %p165 = por %p163, %p164
      %p166 = scmp.ne.s32.totalorder %s158, %s160
      %p167 = scmp.eq.s32.totalorder %s24, 1
      %p168 = por %p166, %p167
      %p169 = scmp.ne.s32.totalorder %s160, %s161
      %p170 = scmp.eq.s32.totalorder %s24, 0
      %p171 = por %p169, %p170
      %p172 = scmp.ne.s32.totalorder %s160, %s161
      %p173 = scmp.eq.s32.totalorder %s25, 1
      %p174 = por %p172, %p173
      %p176 = scmp.ne.s32.totalorder %s161, %s175
      %p177 = scmp.eq.s32.totalorder %s25, 0
      %p178 = por %p176, %p177
      %s180 = sadd.s32 %s179, 1
      %p183 = scmp.eq.s32.totalorder %s19, 1
      %p184 = scmp.ne.s32.totalorder %s179, %s181
      %p185 = scmp.eq.s32.totalorder %s19, 0
      %p186 = por %p184, %p185
      %p187 = scmp.ne.s32.totalorder %s179, %s181
      %p188 = scmp.eq.s32.totalorder %s24, 1
      %p189 = por %p187, %p188
      %p190 = scmp.ne.s32.totalorder %s181, %s182
      %p191 = scmp.eq.s32.totalorder %s24, 0
      %p192 = por %p190, %p191
      %p193 = scmp.ne.s32.totalorder %s181, %s182
      %p194 = scmp.eq.s32.totalorder %s25, 1
      %p195 = por %p193, %p194
      %p197 = scmp.ne.s32.totalorder %s182, %s196
      %p198 = scmp.eq.s32.totalorder %s25, 0
      %p199 = por %p197, %p198
      %s201 = sadd.s32 %s200, 1
      %p204 = scmp.eq.s32.totalorder %s19, 1
      %p205 = scmp.ne.s32.totalorder %s200, %s202
      %p206 = scmp.eq.s32.totalorder %s19, 0
      %p207 = por %p205, %p206
      %p208 = scmp.ne.s32.totalorder %s200, %s202
      %p209 = scmp.eq.s32.totalorder %s24, 1
      %p210 = por %p208, %p209
      %p211 = scmp.ne.s32.totalorder %s202, %s203
      %p212 = scmp.eq.s32.totalorder %s24, 0
      %p213 = por %p211, %p212
      %p214 = scmp.ne.s32.totalorder %s202, %s203
      %p215 = scmp.eq.s32.totalorder %s25, 1
      %p216 = por %p214, %p215
      %p218 = scmp.ne.s32.totalorder %s203, %s217
      %p219 = scmp.eq.s32.totalorder %s25, 0
      %p220 = por %p218, %p219
      %s222 = sadd.s32 %s221, 1
      %p225 = scmp.eq.s32.totalorder %s19, 1
      %p226 = scmp.ne.s32.totalorder %s221, %s223
      %p227 = scmp.eq.s32.totalorder %s19, 0
      %p228 = por %p226, %p227
      %p229 = scmp.ne.s32.totalorder %s221, %s223
      %p230 = scmp.eq.s32.totalorder %s24, 1
      %p231 = por %p229, %p230
      %p232 = scmp.ne.s32.totalorder %s223, %s224
      %p233 = scmp.eq.s32.totalorder %s24, 0
      %p234 = por %p232, %p233
      %p235 = scmp.ne.s32.totalorder %s223, %s224
      %p236 = scmp.eq.s32.totalorder %s25, 1
      %p237 = por %p235, %p236
      %p239 = scmp.ne.s32.totalorder %s224, %s238
      %p240 = scmp.eq.s32.totalorder %s25, 0
      %p241 = por %p239, %p240
      %s243 = sadd.s32 %s242, 1
      %p246 = scmp.eq.s32.totalorder %s19, 1
      %p247 = scmp.ne.s32.totalorder %s242, %s244
      %p248 = scmp.eq.s32.totalorder %s19, 0
      %p249 = por %p247, %p248
      %p250 = scmp.ne.s32.totalorder %s242, %s244
      %p251 = scmp.eq.s32.totalorder %s24, 1
      %p252 = por %p250, %p251
      %p253 = scmp.ne.s32.totalorder %s244, %s245
      %p254 = scmp.eq.s32.totalorder %s24, 0
      %p255 = por %p253, %p254
      %p256 = scmp.ne.s32.totalorder %s244, %s245
      %p257 = scmp.eq.s32.totalorder %s25, 1
      %p258 = por %p256, %p257
      %p260 = scmp.ne.s32.totalorder %s245, %s259
      %p261 = scmp.eq.s32.totalorder %s25, 0
      %p262 = por %p260, %p261
      %s263 = ssub.s32 %s19, %s26
      %p264 = scmp.eq.s32.totalorder %s263, 0
      %s266 = sadd.s32 %s265, 1
      %s267 = scalar_select %p264, %s265, %s266
      %p270 = pneg %p264
      %p271 = scmp.eq.s32.totalorder %s19, 1
      %p272 = por %p270, %p271
      %p273 = scmp.ne.s32.totalorder %s265, %s268
      %p274 = scmp.eq.s32.totalorder %s19, 0
      %p275 = por %p273, %p274
      %p276 = scmp.ne.s32.totalorder %s265, %s268
      %p277 = scmp.eq.s32.totalorder %s24, 1
      %p278 = por %p276, %p277
      %p279 = scmp.ne.s32.totalorder %s268, %s269
      %p280 = scmp.eq.s32.totalorder %s24, 0
      %p281 = por %p279, %p280
      %p282 = scmp.ne.s32.totalorder %s268, %s269
      %p283 = scmp.eq.s32.totalorder %s25, 1
      %p284 = por %p282, %p283
      %p286 = scmp.ne.s32.totalorder %s269, %s285
      %p287 = scmp.eq.s32.totalorder %s25, 0
      %p288 = por %p286, %p287
      %p289 = scmp.le.s32.totalorder 1, %s19
      %p290 = scmp.lt.s32.totalorder %s19, 3
      %p291 = pnand %p289, %p290
      %p292 = pneg %p291
      // Predicated region
      $region9: #{generator_forward.6} parent=5 // pred_check
        _
      $region10: #{generator_forward.6} parent=5 // pred_check_branch
        %294 = sbr.rel (%p291) target = $region12
      $region11: #{generator_forward.6} parent=5 // pred_region
        %s295 = ssub.s32 %s19, 1
        // Predicated region
        $region13: #{generator_forward.6} parent=11 // pred_check
          %p296 = pneg %p66
        $region14: #{generator_forward.6} parent=11 // pred_check_branch
          %298 = sbr.rel (%p296) target = $region16
        $region15: #{generator_forward.6} parent=11 // pred_region
          _
        $region16: #{generator_forward.6} parent=11 // pred_fallthru
          _
        // Predicated region
        $region17: #{generator_forward.6} parent=11 // pred_check
          %p299 = pneg %p87
        $region18: #{generator_forward.6} parent=11 // pred_check_branch
          %301 = sbr.rel (%p299) target = $region20
        $region19: #{generator_forward.6} parent=11 // pred_region
          _
        $region20: #{generator_forward.6} parent=11 // pred_fallthru
          _
        // Predicated region
        $region21: #{generator_forward.6} parent=11 // pred_check
          %p302 = pneg %p108
        $region22: #{generator_forward.6} parent=11 // pred_check_branch
          %304 = sbr.rel (%p302) target = $region24
        $region23: #{generator_forward.6} parent=11 // pred_region
          _
        $region24: #{generator_forward.6} parent=11 // pred_fallthru
          _
        // Predicated region
        $region25: #{generator_forward.6} parent=11 // pred_check
          %p305 = pneg %p129
        $region26: #{generator_forward.6} parent=11 // pred_check_branch
          %307 = sbr.rel (%p305) target = $region28
        $region27: #{generator_forward.6} parent=11 // pred_region
          %309 = vsyncadd [#allocation6], 0
          %s310 = sshll.u32 %s4, 4
          %s311 = int_to_ptr.hbm [resolvable:$true] %s310
          %s312 = sshll.u32 [#allocation5], 4
          %s313 = int_to_ptr.vmem [resolvable:$true] %s312
          %318 = dma.hbm_to_vmem [thread:$0]  %s311, 512, %s313, [#allocation6], 64, 64, 4
        $region28: #{generator_forward.6} parent=11 // pred_fallthru
          _
        // Predicated region
        $region29: #{generator_forward.6} parent=11 // pred_check
          %p319 = pneg %p150
        $region30: #{generator_forward.6} parent=11 // pred_check_branch
          %321 = sbr.rel (%p319) target = $region32
        $region31: #{generator_forward.6} parent=11 // pred_region
          %323 = vsyncadd [#allocation8], 0
          %s324 = sshll.u32 %s5, 4
          %s325 = int_to_ptr.hbm [resolvable:$true] %s324
          %s326 = sshll.u32 [#allocation7], 4
          %s327 = int_to_ptr.vmem [resolvable:$true] %s326
          %332 = dma.hbm_to_vmem [thread:$0]  %s325, 512, %s327, [#allocation8], 64, 64, 4
        $region32: #{generator_forward.6} parent=11 // pred_fallthru
          _
        // Predicated region
        $region33: #{generator_forward.6} parent=11 // pred_check
          %p333 = pneg %p171
        $region34: #{generator_forward.6} parent=11 // pred_check_branch
          %335 = sbr.rel (%p333) target = $region36
        $region35: #{generator_forward.6} parent=11 // pred_region
          %337 = vsyncadd [#allocation8], 0
          %s338 = sshll.u32 %s6, 4
          %s339 = int_to_ptr.hbm [resolvable:$true] %s338
          %s340 = sshll.u32 [#allocation9], 4
          %s341 = int_to_ptr.vmem [resolvable:$true] %s340
          %346 = dma.hbm_to_vmem [thread:$0]  %s339, 512, %s341, [#allocation8], 64, 64, 4
        $region36: #{generator_forward.6} parent=11 // pred_fallthru
          _
        // Predicated region
        $region37: #{generator_forward.6} parent=11 // pred_check
          %p347 = pneg %p192
        $region38: #{generator_forward.6} parent=11 // pred_check_branch
          %349 = sbr.rel (%p347) target = $region40
        $region39: #{generator_forward.6} parent=11 // pred_region
          _
        $region40: #{generator_forward.6} parent=11 // pred_fallthru
          _
        // Predicated region
        $region41: #{generator_forward.6} parent=11 // pred_check
          %p350 = pneg %p213
        $region42: #{generator_forward.6} parent=11 // pred_check_branch
          %352 = sbr.rel (%p350) target = $region44
        $region43: #{generator_forward.6} parent=11 // pred_region
          _
        $region44: #{generator_forward.6} parent=11 // pred_fallthru
          _
        // Predicated region
        $region45: #{generator_forward.6} parent=11 // pred_check
          %p353 = pneg %p234
        $region46: #{generator_forward.6} parent=11 // pred_check_branch
          %355 = sbr.rel (%p353) target = $region48
        $region47: #{generator_forward.6} parent=11 // pred_region
          _
        $region48: #{generator_forward.6} parent=11 // pred_fallthru
          _
        // Predicated region
        $region49: #{generator_forward.6} parent=11 // pred_check
          %p356 = pneg %p255
        $region50: #{generator_forward.6} parent=11 // pred_check_branch
          %358 = sbr.rel (%p356) target = $region52
        $region51: #{generator_forward.6} parent=11 // pred_region
          _
        $region52: #{generator_forward.6} parent=11 // pred_fallthru
          _
      $region12: #{generator_forward.6} parent=5 // pred_fallthru
        _
      %p359 = scmp.lt.s32.totalorder %s19, 2
      // Predicated region
      $region53: #{generator_forward.6} parent=5 // pred_check
        %p360 = pneg %p359
      $region54: #{generator_forward.6} parent=5 // pred_check_branch
        %362 = sbr.rel (%p360) target = $region56
      $region55: #{generator_forward.6} parent=5 // pred_region
        // Predicated region
        $region57: #{generator_forward.6} parent=55 // pred_check
          %p363 = pneg %p39
        $region58: #{generator_forward.6} parent=55 // pred_check_branch
          %365 = sbr.rel (%p363) target = $region60
        $region59: #{generator_forward.6} parent=55 // pred_region
          %p366 = scmp.lt.s32.totalorder %s19, 1
          %s367 = scalar_select %p366, %s19, 1
          %s368 = smul.addr %s367, 4
          %s369 = scalar_lea.vmem %s0, %s368
        $region60: #{generator_forward.6} parent=55 // pred_fallthru
          _
      $region56: #{generator_forward.6} parent=5 // pred_fallthru
        _
      %p370 = scmp.le.s32.totalorder 1, %s19
      %p371 = scmp.lt.s32.totalorder %s19, 3
      %p372 = pnand %p370, %p371
      %p373 = pneg %p372
      // Predicated region
      $region61: #{generator_forward.6} parent=5 // pred_check
        _
      $region62: #{generator_forward.6} parent=5 // pred_check_branch
        %375 = sbr.rel (%p372) target = $region64
      $region63: #{generator_forward.6} parent=5 // pred_region
        %s376 = ssub.s32 %s19, 1
        // Predicated region
        $region65: #{generator_forward.6} parent=63 // pred_check
          %p377 = pneg %p129
        $region66: #{generator_forward.6} parent=63 // pred_check_branch
          %379 = sbr.rel (%p377) target = $region68
        $region67: #{generator_forward.6} parent=63 // pred_region
          %381 = dma.done [#allocation6], 512
        $region68: #{generator_forward.6} parent=63 // pred_fallthru
          _
        // Predicated region
        $region69: #{generator_forward.6} parent=63 // pred_check
          %p382 = pneg %p150
        $region70: #{generator_forward.6} parent=63 // pred_check_branch
          %384 = sbr.rel (%p382) target = $region72
        $region71: #{generator_forward.6} parent=63 // pred_region
          %386 = dma.done [#allocation8], 512
        $region72: #{generator_forward.6} parent=63 // pred_fallthru
          _
        // Predicated region
        $region73: #{generator_forward.6} parent=63 // pred_check
          %p387 = pneg %p171
        $region74: #{generator_forward.6} parent=63 // pred_check_branch
          %389 = sbr.rel (%p387) target = $region76
        $region75: #{generator_forward.6} parent=63 // pred_region
          %391 = dma.done [#allocation8], 512
        $region76: #{generator_forward.6} parent=63 // pred_fallthru
          _
        %p392 = scmp.lt.s32.totalorder %s24, 1
        %s393 = scalar_select %p392, %s24, 1
        %s394 = smul.addr %s393, 4
        %s395 = scalar_lea.vmem %s0, %s394
        %p396 = pneg %p45
        %p397 = pneg %p42
        %p398 = pneg %p66
        %p399 = pneg %p63
        %p400 = pneg %p87
        %p401 = pneg %p84
        %p402 = pneg %p108
        %p403 = pneg %p105
        %p404 = pneg %p129
        %p405 = pneg %p126
        %p406 = pneg %p150
        %p407 = pneg %p147
        %p408 = pneg %p171
        %p409 = pneg %p168
        %p410 = pneg %p192
        %p411 = pneg %p189
        %p412 = pneg %p213
        %p413 = pneg %p210
        %p414 = pneg %p234
        %p415 = pneg %p231
        %p416 = pneg %p255
        %p417 = pneg %p252
        %p418 = pneg %p281
        %p419 = pneg %p278
        %p420 = scmp.lt.s32.totalorder %s24, 1
        %s421 = scalar_select %p420, %s24, 1
        %s422 = smul.addr %s421, 4
        %s423 = scalar_lea.vmem %s11, %s422
        %p424 = scmp.lt.s32.totalorder %s24, 1
        %s425 = scalar_select %p424, %s24, 1
        %s426 = smul.addr %s425, 4
        %s427 = scalar_lea.vmem %s0, %s426
        %p428 = scmp.lt.s32.totalorder %s24, 1
        %s429 = scalar_select %p428, %s24, 1
        %s430 = smul.addr %s429, 4
        %s431 = scalar_lea.vmem %s11, %s430
        %v433 = vld [vmem:[%s427] sm:$0xf]
        %v434 = vld [vmem:[%s1] sm:$0x1]
        %v435 = vunpack.c.l.bf16 %v434
        %437 = vset.pattern.permute.xlu0 0
        %438 = vperm.xlu0 %437, %v433
        %v439 = vpop.permute.xlu0 %438
        %v441 = vperm.slane %v435, 0
        %v442 = vmul.f32 %v439, %v441
        %v443 = vld [vmem:[%s7] sm:$0x1]
        %v445 = vperm.slane %v443, 0
        %v447 = vadd.f32 %v442, %v445
        %vm448 = vcmask 519168
        %449 = vst.msk [vmem:[#allocation2] sm:$0xf] %vm448, %v447
        %v450 = vld [vmem:[%s2] sm:$0x1]
        %v451 = vunpack.c.l.bf16 %v450
        %v452 = vperm.slane %v451, 0
        %v453 = vmul.f32 %v439, %v452
        %v454 = vld [vmem:[%s8] sm:$0x1]
        %v456 = vperm.slane %v454, 0
        %v458 = vadd.f32 %v453, %v456
        %459 = vst.msk [vmem:[#allocation3] sm:$0xf] %vm448, %v458
        %v460 = vld [vmem:[%s3] sm:$0x1]
        %v461 = vunpack.c.l.bf16 %v460
        %v462 = vperm.slane %v461, 0
        %v463 = vmul.f32 %v439, %v462
        %v464 = vld [vmem:[%s9] sm:$0x1]
        %v466 = vperm.slane %v464, 0
        %v468 = vadd.f32 %v463, %v466
        %469 = vst.msk [vmem:[#allocation4] sm:$0xf] %vm448, %v468
        %v470 = vld [vmem:[#allocation5] sm:$0xf]
        %v471 = vld [vmem:[#allocation5 + $0x4] sm:$0xf]
        %v472 = vld [vmem:[#allocation5 + $0x8] sm:$0xf]
        %v473 = vld [vmem:[#allocation5 + $0xc] sm:$0xf]
        %v474 = vld [vmem:[#allocation5 + $0x10] sm:$0xf]
        %v475 = vld [vmem:[#allocation5 + $0x14] sm:$0xf]
        %v476 = vld [vmem:[#allocation5 + $0x18] sm:$0xf]
        %v477 = vld [vmem:[#allocation5 + $0x1c] sm:$0xf]
        %v478 = vld [vmem:[#allocation7] sm:$0xf]
        %v479 = vld [vmem:[#allocation7 + $0x4] sm:$0xf]
        %v480 = vld [vmem:[#allocation7 + $0x8] sm:$0xf]
        %v481 = vld [vmem:[#allocation7 + $0xc] sm:$0xf]
        %v482 = vld [vmem:[#allocation7 + $0x10] sm:$0xf]
        %v483 = vld [vmem:[#allocation7 + $0x14] sm:$0xf]
        %v484 = vld [vmem:[#allocation7 + $0x18] sm:$0xf]
        %v485 = vld [vmem:[#allocation7 + $0x1c] sm:$0xf]
        %v486 = vld [vmem:[#allocation9] sm:$0xf]
        %v487 = vld [vmem:[#allocation9 + $0x4] sm:$0xf]
        %v488 = vld [vmem:[#allocation9 + $0x8] sm:$0xf]
        %v489 = vld [vmem:[#allocation9 + $0xc] sm:$0xf]
        %v490 = vld [vmem:[#allocation9 + $0x10] sm:$0xf]
        %v491 = vld [vmem:[#allocation9 + $0x14] sm:$0xf]
        %v492 = vld [vmem:[#allocation9 + $0x18] sm:$0xf]
        %v493 = vld [vmem:[#allocation9 + $0x1c] sm:$0xf]
        %v494 = vld [vmem:[%s10] sm:$0x1]
        %v503 = vunpack.c.l.b16 %v470
        %v504 = vunpack.c.l.b16 %v471
        %v505 = vunpack.c.l.b16 %v472
        %v506 = vunpack.c.l.b16 %v473
        %v507 = vunpack.c.l.b16 %v474
        %v508 = vunpack.c.l.b16 %v475
        %v509 = vunpack.c.l.b16 %v476
        %v510 = vunpack.c.l.b16 %v477
        %v511 = vpack.c.b16 %v504, %v503
        %v512 = vpack.c.b16 %v506, %v505
        %v513 = vpack.c.b16 %v508, %v507
        %v514 = vpack.c.b16 %v510, %v509
        %vm519 = vcmask 523264
        %v521 = vsel %vm519, 0, 0
        %523 = vmatpush.bf16.msra.mxu0 0
        %524 = vmatpush.bf16.msra.mxu0 0
        %525 = vmatpush.bf16.msra.mxu0 0
        %526 = vmatpush.bf16.msra.mxu0 0
        %527 = vmatpush.bf16.msra.mxu0 %v514
        %528 = vmatpush.bf16.msra.mxu0 %v513
        %529 = vmatpush.bf16.msra.mxu0 %v512
        %530 = vmatpush.bf16.msra.mxu0 %v511
        %531 = vmatmul.bf16.gmra.mxu0 %v521
        %v532 = vpop.f32.mrf.mxu0
        %v533 = vadd.f32 0.0, %v532
        %v534 = vpop.f32.mrf.mxu0
        %535 = vdwg.mxu0
        %v544 = vunpack.c.l.b16 %v478
        %v545 = vunpack.c.l.b16 %v479
        %v546 = vunpack.c.l.b16 %v480
        %v547 = vunpack.c.l.b16 %v481
        %v548 = vunpack.c.l.b16 %v482
        %v549 = vunpack.c.l.b16 %v483
        %v550 = vunpack.c.l.b16 %v484
        %v551 = vunpack.c.l.b16 %v485
        %v552 = vpack.c.b16 %v545, %v544
        %v553 = vpack.c.b16 %v547, %v546
        %v554 = vpack.c.b16 %v549, %v548
        %v555 = vpack.c.b16 %v551, %v550
        %560 = vmatpush.bf16.msra.mxu0 0
        %561 = vmatpush.bf16.msra.mxu0 0
        %562 = vmatpush.bf16.msra.mxu0 0
        %563 = vmatpush.bf16.msra.mxu0 0
        %564 = vmatpush.bf16.msra.mxu0 %v555
        %565 = vmatpush.bf16.msra.mxu0 %v554
        %566 = vmatpush.bf16.msra.mxu0 %v553
        %567 = vmatpush.bf16.msra.mxu0 %v552
        %568 = vmatmul.bf16.gmra.mxu0 %v521
        %v569 = vpop.f32.mrf.mxu0
        %v570 = vadd.f32 0.0, %v569
        %v571 = vpop.f32.mrf.mxu0
        %572 = vdwg.mxu0
        %v573 = vld [vmem:[#allocation2] sm:$0x1]
        %v574 = vadd.f32 %v573, %v533
        %v575 = vxor.u32 %v574, 2147483648
        %v576 = vmul.f32 %v575, 1.442695
        %v577 = vpow.pop %v576
        %v578 = vadd.f32 %v577, 1.0
        %v579 = vrcp.pop %v578
        %v580 = vmul.f32 %v578, %v579
        %v581 = vsub.f32 1.0, %v580
        %v582 = vmul.f32 %v579, %v581
        %v583 = vadd.f32 %v579, %v582
        %vm584 = vweird.f32 %v578
        %vm585 = vweird.f32 %v579
        %vm586 = vmor %vm584, %vm585
        %v587 = vsel %vm586, %v579, %v583
        %v588 = vand.u32 2147483647, %v578
        %vm589 = vcmp.eq.f32.partialorder %v588, 8.507059e+37
        %v590 = vand.u32 %v578, 2147483648
        %v591 = vor.u32 1.1754944e-38, %v590
        %v592 = vsel %vm589, %v591, %v587
        %v593 = vmul.f32 1.0, %v592
        %v594 = vld [vmem:[#allocation3] sm:$0x1]
        %v595 = vadd.f32 %v594, %v570
        %v596 = vxor.u32 %v595, 2147483648
        %v597 = vmul.f32 %v596, 1.442695
        %v598 = vpow.pop %v597
        %v599 = vadd.f32 %v598, 1.0
        %v600 = vrcp.pop %v599
        %v601 = vmul.f32 %v599, %v600
        %v602 = vsub.f32 1.0, %v601
        %v603 = vmul.f32 %v600, %v602
        %v604 = vadd.f32 %v600, %v603
        %vm605 = vweird.f32 %v599
        %vm606 = vweird.f32 %v600
        %vm607 = vmor %vm605, %vm606
        %v608 = vsel %vm607, %v600, %v604
        %v609 = vand.u32 2147483647, %v599
        %vm610 = vcmp.eq.f32.partialorder %v609, 8.507059e+37
        %v611 = vand.u32 %v599, 2147483648
        %v612 = vor.u32 1.1754944e-38, %v611
        %v613 = vsel %vm610, %v612, %v608
        %v614 = vmul.f32 1.0, %v613
        %v615 = vld [vmem:[#allocation4] sm:$0x1]
        %v624 = vunpack.c.l.b16 %v486
        %v625 = vunpack.c.l.b16 %v487
        %v626 = vunpack.c.l.b16 %v488
        %v627 = vunpack.c.l.b16 %v489
        %v628 = vunpack.c.l.b16 %v490
        %v629 = vunpack.c.l.b16 %v491
        %v630 = vunpack.c.l.b16 %v492
        %v631 = vunpack.c.l.b16 %v493
        %v632 = vpack.c.b16 %v625, %v624
        %v633 = vpack.c.b16 %v627, %v626
        %v634 = vpack.c.b16 %v629, %v628
        %v635 = vpack.c.b16 %v631, %v630
        %640 = vmatpush.bf16.msra.mxu0 0
        %641 = vmatpush.bf16.msra.mxu0 0
        %642 = vmatpush.bf16.msra.mxu0 0
        %643 = vmatpush.bf16.msra.mxu0 0
        %644 = vmatpush.bf16.msra.mxu0 %v635
        %645 = vmatpush.bf16.msra.mxu0 %v634
        %646 = vmatpush.bf16.msra.mxu0 %v633
        %647 = vmatpush.bf16.msra.mxu0 %v632
        %648 = vmatmul.bf16.gmra.mxu0 %v521
        %v649 = vpop.f32.mrf.mxu0
        %v650 = vadd.f32 %v494, %v649
        %v651 = vpop.f32.mrf.mxu0
        %652 = vdwg.mxu0
        %v653 = vmul.f32 %v593, %v650
        %v654 = vadd.f32 %v615, %v653
        %v655 = vtanh.pop %v654
        %v656 = vsub.f32 1.0, %v614
        %v657 = vmul.f32 %v656, %v655
        %v658 = vmul.f32 %v614, 0.0
        %v659 = vadd.f32 %v657, %v658
        %v660 = vmax.f32 %v659, 0.0
        %vm661 = vcmask 516096
        %662 = vst.msk [vmem:[%s431] sm:$0x1] %vm661, %v660
        %v663 = vpack.c.bf16 %v659, %v659
        %v665 = vsel %vm519, %v663, 0
        %667 = vmatpush.bf16.msra.mxu0 0
        %668 = vmatpush.bf16.msra.mxu0 0
        %669 = vmatpush.bf16.msra.mxu0 0
        %670 = vmatpush.bf16.msra.mxu0 0
        %671 = vmatpush.bf16.msra.mxu0 %v514
        %672 = vmatpush.bf16.msra.mxu0 %v513
        %673 = vmatpush.bf16.msra.mxu0 %v512
        %674 = vmatpush.bf16.msra.mxu0 %v511
        %675 = vmatmul.bf16.gmra.mxu0 %v665
        %v676 = vpop.f32.mrf.mxu0
        %v677 = vadd.f32 0.0, %v676
        %v678 = vpop.f32.mrf.mxu0
        %679 = vdwg.mxu0
        %680 = vmatpush.bf16.msra.mxu0 0
        %681 = vmatpush.bf16.msra.mxu0 0
        %682 = vmatpush.bf16.msra.mxu0 0
        %683 = vmatpush.bf16.msra.mxu0 0
        %684 = vmatpush.bf16.msra.mxu0 %v555
        %685 = vmatpush.bf16.msra.mxu0 %v554
        %686 = vmatpush.bf16.msra.mxu0 %v553
        %687 = vmatpush.bf16.msra.mxu0 %v552
        %688 = vmatmul.bf16.gmra.mxu0 %v665
        %v689 = vpop.f32.mrf.mxu0
        %v690 = vadd.f32 0.0, %v689
        %v691 = vpop.f32.mrf.mxu0
        %692 = vdwg.mxu0
        %v693 = vld [vmem:[#allocation2 + $0x1] sm:$0x1]
        %v694 = vadd.f32 %v693, %v677
        %v695 = vxor.u32 %v694, 2147483648
        %v696 = vmul.f32 %v695, 1.442695
        %v697 = vpow.pop %v696
        %v698 = vadd.f32 %v697, 1.0
        %v699 = vrcp.pop %v698
        %v700 = vmul.f32 %v698, %v699
        %v701 = vsub.f32 1.0, %v700
        %v702 = vmul.f32 %v699, %v701
        %v703 = vadd.f32 %v699, %v702
        %vm704 = vweird.f32 %v698
        %vm705 = vweird.f32 %v699
        %vm706 = vmor %vm704, %vm705
        %v707 = vsel %vm706, %v699, %v703
        %v708 = vand.u32 2147483647, %v698
        %vm709 = vcmp.eq.f32.partialorder %v708, 8.507059e+37
        %v710 = vand.u32 %v698, 2147483648
        %v711 = vor.u32 1.1754944e-38, %v710
        %v712 = vsel %vm709, %v711, %v707
        %v713 = vmul.f32 1.0, %v712
        %v714 = vld [vmem:[#allocation3 + $0x1] sm:$0x1]
        %v715 = vadd.f32 %v714, %v690
        %v716 = vxor.u32 %v715, 2147483648
        %v717 = vmul.f32 %v716, 1.442695
        %v718 = vpow.pop %v717
        %v719 = vadd.f32 %v718, 1.0
        %v720 = vrcp.pop %v719
        %v721 = vmul.f32 %v719, %v720
        %v722 = vsub.f32 1.0, %v721
        %v723 = vmul.f32 %v720, %v722
        %v724 = vadd.f32 %v720, %v723
        %vm725 = vweird.f32 %v719
        %vm726 = vweird.f32 %v720
        %vm727 = vmor %vm725, %vm726
        %v728 = vsel %vm727, %v720, %v724
        %v729 = vand.u32 2147483647, %v719
        %vm730 = vcmp.eq.f32.partialorder %v729, 8.507059e+37
        %v731 = vand.u32 %v719, 2147483648
        %v732 = vor.u32 1.1754944e-38, %v731
        %v733 = vsel %vm730, %v732, %v728
        %v734 = vmul.f32 1.0, %v733
        %v735 = vld [vmem:[#allocation4 + $0x1] sm:$0x1]
        %736 = vmatpush.bf16.msra.mxu0 0
        %737 = vmatpush.bf16.msra.mxu0 0
        %738 = vmatpush.bf16.msra.mxu0 0
        %739 = vmatpush.bf16.msra.mxu0 0
        %740 = vmatpush.bf16.msra.mxu0 %v635
        %741 = vmatpush.bf16.msra.mxu0 %v634
        %742 = vmatpush.bf16.msra.mxu0 %v633
        %743 = vmatpush.bf16.msra.mxu0 %v632
        %744 = vmatmul.bf16.gmra.mxu0 %v665
        %v745 = vpop.f32.mrf.mxu0
        %v746 = vadd.f32 %v494, %v745
        %v747 = vpop.f32.mrf.mxu0
        %748 = vdwg.mxu0
        %v749 = vmul.f32 %v713, %v746
        %v750 = vadd.f32 %v735, %v749
        %v751 = vtanh.pop %v750
        %v752 = vsub.f32 1.0, %v734
        %v753 = vmul.f32 %v752, %v751
        %v754 = vmul.f32 %v734, %v659
        %v755 = vadd.f32 %v753, %v754
        %v756 = vmax.f32 %v755, 0.0
        %757 = vst.msk [vmem:[%s431 + $0x1] sm:$0x1] %vm661, %v756
        %v758 = vpack.c.bf16 %v755, %v755
        %v760 = vsel %vm519, %v758, 0
        %762 = vmatpush.bf16.msra.mxu0 0
        %763 = vmatpush.bf16.msra.mxu0 0
        %764 = vmatpush.bf16.msra.mxu0 0
        %765 = vmatpush.bf16.msra.mxu0 0
        %766 = vmatpush.bf16.msra.mxu0 %v514
        %767 = vmatpush.bf16.msra.mxu0 %v513
        %768 = vmatpush.bf16.msra.mxu0 %v512
        %769 = vmatpush.bf16.msra.mxu0 %v511
        %770 = vmatmul.bf16.gmra.mxu0 %v760
        %v771 = vpop.f32.mrf.mxu0
        %v772 = vadd.f32 0.0, %v771
        %v773 = vpop.f32.mrf.mxu0
        %774 = vdwg.mxu0
        %775 = vmatpush.bf16.msra.mxu0 0
        %776 = vmatpush.bf16.msra.mxu0 0
        %777 = vmatpush.bf16.msra.mxu0 0
        %778 = vmatpush.bf16.msra.mxu0 0
        %779 = vmatpush.bf16.msra.mxu0 %v555
        %780 = vmatpush.bf16.msra.mxu0 %v554
        %781 = vmatpush.bf16.msra.mxu0 %v553
        %782 = vmatpush.bf16.msra.mxu0 %v552
        %783 = vmatmul.bf16.gmra.mxu0 %v760
        %v784 = vpop.f32.mrf.mxu0
        %v785 = vadd.f32 0.0, %v784
        %v786 = vpop.f32.mrf.mxu0
        %787 = vdwg.mxu0
        %v788 = vld [vmem:[#allocation2 + $0x2] sm:$0x1]
        %v789 = vadd.f32 %v788, %v772
        %v790 = vxor.u32 %v789, 2147483648
        %v791 = vmul.f32 %v790, 1.442695
        %v792 = vpow.pop %v791
        %v793 = vadd.f32 %v792, 1.0
        %v794 = vrcp.pop %v793
        %v795 = vmul.f32 %v793, %v794
        %v796 = vsub.f32 1.0, %v795
        %v797 = vmul.f32 %v794, %v796
        %v798 = vadd.f32 %v794, %v797
        %vm799 = vweird.f32 %v793
        %vm800 = vweird.f32 %v794
        %vm801 = vmor %vm799, %vm800
        %v802 = vsel %vm801, %v794, %v798
        %v803 = vand.u32 2147483647, %v793
        %vm804 = vcmp.eq.f32.partialorder %v803, 8.507059e+37
        %v805 = vand.u32 %v793, 2147483648
        %v806 = vor.u32 1.1754944e-38, %v805
        %v807 = vsel %vm804, %v806, %v802
        %v808 = vmul.f32 1.0, %v807
        %v809 = vld [vmem:[#allocation3 + $0x2] sm:$0x1]
        %v810 = vadd.f32 %v809, %v785
        %v811 = vxor.u32 %v810, 2147483648
        %v812 = vmul.f32 %v811, 1.442695
        %v813 = vpow.pop %v812
        %v814 = vadd.f32 %v813, 1.0
        %v815 = vrcp.pop %v814
        %v816 = vmul.f32 %v814, %v815
        %v817 = vsub.f32 1.0, %v816
        %v818 = vmul.f32 %v815, %v817
        %v819 = vadd.f32 %v815, %v818
        %vm820 = vweird.f32 %v814
        %vm821 = vweird.f32 %v815
        %vm822 = vmor %vm820, %vm821
        %v823 = vsel %vm822, %v815, %v819
        %v824 = vand.u32 2147483647, %v814
        %vm825 = vcmp.eq.f32.partialorder %v824, 8.507059e+37
        %v826 = vand.u32 %v814, 2147483648
        %v827 = vor.u32 1.1754944e-38, %v826
        %v828 = vsel %vm825, %v827, %v823
        %v829 = vmul.f32 1.0, %v828
        %v830 = vld [vmem:[#allocation4 + $0x2] sm:$0x1]
        %831 = vmatpush.bf16.msra.mxu0 0
        %832 = vmatpush.bf16.msra.mxu0 0
        %833 = vmatpush.bf16.msra.mxu0 0
        %834 = vmatpush.bf16.msra.mxu0 0
        %835 = vmatpush.bf16.msra.mxu0 %v635
        %836 = vmatpush.bf16.msra.mxu0 %v634
        %837 = vmatpush.bf16.msra.mxu0 %v633
        %838 = vmatpush.bf16.msra.mxu0 %v632
        %839 = vmatmul.bf16.gmra.mxu0 %v760
        %v840 = vpop.f32.mrf.mxu0
        %v841 = vadd.f32 %v494, %v840
        %v842 = vpop.f32.mrf.mxu0
        %843 = vdwg.mxu0
        %v844 = vmul.f32 %v808, %v841
        %v845 = vadd.f32 %v830, %v844
        %v846 = vtanh.pop %v845
        %v847 = vsub.f32 1.0, %v829
        %v848 = vmul.f32 %v847, %v846
        %v849 = vmul.f32 %v829, %v755
        %v850 = vadd.f32 %v848, %v849
        %v851 = vmax.f32 %v850, 0.0
        %852 = vst.msk [vmem:[%s431 + $0x2] sm:$0x1] %vm661, %v851
        %v853 = vpack.c.bf16 %v850, %v850
        %v855 = vsel %vm519, %v853, 0
        %857 = vmatpush.bf16.msra.mxu0 0
        %858 = vmatpush.bf16.msra.mxu0 0
        %859 = vmatpush.bf16.msra.mxu0 0
        %860 = vmatpush.bf16.msra.mxu0 0
        %861 = vmatpush.bf16.msra.mxu0 %v514
        %862 = vmatpush.bf16.msra.mxu0 %v513
        %863 = vmatpush.bf16.msra.mxu0 %v512
        %864 = vmatpush.bf16.msra.mxu0 %v511
        %865 = vmatmul.bf16.gmra.mxu0 %v855
        %v866 = vpop.f32.mrf.mxu0
        %v867 = vadd.f32 0.0, %v866
        %v868 = vpop.f32.mrf.mxu0
        %869 = vdwg.mxu0
        %870 = vmatpush.bf16.msra.mxu0 0
        %871 = vmatpush.bf16.msra.mxu0 0
        %872 = vmatpush.bf16.msra.mxu0 0
        %873 = vmatpush.bf16.msra.mxu0 0
        %874 = vmatpush.bf16.msra.mxu0 %v555
        %875 = vmatpush.bf16.msra.mxu0 %v554
        %876 = vmatpush.bf16.msra.mxu0 %v553
        %877 = vmatpush.bf16.msra.mxu0 %v552
        %878 = vmatmul.bf16.gmra.mxu0 %v855
        %v879 = vpop.f32.mrf.mxu0
        %v880 = vadd.f32 0.0, %v879
        %v881 = vpop.f32.mrf.mxu0
        %882 = vdwg.mxu0
        %v883 = vld [vmem:[#allocation2 + $0x3] sm:$0x1]
        %v884 = vadd.f32 %v883, %v867
        %v885 = vxor.u32 %v884, 2147483648
        %v886 = vmul.f32 %v885, 1.442695
        %v887 = vpow.pop %v886
        %v888 = vadd.f32 %v887, 1.0
        %v889 = vrcp.pop %v888
        %v890 = vmul.f32 %v888, %v889
        %v891 = vsub.f32 1.0, %v890
        %v892 = vmul.f32 %v889, %v891
        %v893 = vadd.f32 %v889, %v892
        %vm894 = vweird.f32 %v888
        %vm895 = vweird.f32 %v889
        %vm896 = vmor %vm894, %vm895
        %v897 = vsel %vm896, %v889, %v893
        %v898 = vand.u32 2147483647, %v888
        %vm899 = vcmp.eq.f32.partialorder %v898, 8.507059e+37
        %v900 = vand.u32 %v888, 2147483648
        %v901 = vor.u32 1.1754944e-38, %v900
        %v902 = vsel %vm899, %v901, %v897
        %v903 = vmul.f32 1.0, %v902
        %v904 = vld [vmem:[#allocation3 + $0x3] sm:$0x1]
        %v905 = vadd.f32 %v904, %v880
        %v906 = vxor.u32 %v905, 2147483648
        %v907 = vmul.f32 %v906, 1.442695
        %v908 = vpow.pop %v907
        %v909 = vadd.f32 %v908, 1.0
        %v910 = vrcp.pop %v909
        %v911 = vmul.f32 %v909, %v910
        %v912 = vsub.f32 1.0, %v911
        %v913 = vmul.f32 %v910, %v912
        %v914 = vadd.f32 %v910, %v913
        %vm915 = vweird.f32 %v909
        %vm916 = vweird.f32 %v910
        %vm917 = vmor %vm915, %vm916
        %v918 = vsel %vm917, %v910, %v914
        %v919 = vand.u32 2147483647, %v909
        %vm920 = vcmp.eq.f32.partialorder %v919, 8.507059e+37
        %v921 = vand.u32 %v909, 2147483648
        %v922 = vor.u32 1.1754944e-38, %v921
        %v923 = vsel %vm920, %v922, %v918
        %v924 = vmul.f32 1.0, %v923
        %v925 = vld [vmem:[#allocation4 + $0x3] sm:$0x1]
        %926 = vmatpush.bf16.msra.mxu0 0
        %927 = vmatpush.bf16.msra.mxu0 0
        %928 = vmatpush.bf16.msra.mxu0 0
        %929 = vmatpush.bf16.msra.mxu0 0
        %930 = vmatpush.bf16.msra.mxu0 %v635
        %931 = vmatpush.bf16.msra.mxu0 %v634
        %932 = vmatpush.bf16.msra.mxu0 %v633
        %933 = vmatpush.bf16.msra.mxu0 %v632
        %934 = vmatmul.bf16.gmra.mxu0 %v855
        %v935 = vpop.f32.mrf.mxu0
        %v936 = vadd.f32 %v494, %v935
        %v937 = vpop.f32.mrf.mxu0
        %938 = vdwg.mxu0
        %v939 = vmul.f32 %v903, %v936
        %v940 = vadd.f32 %v925, %v939
        %v941 = vtanh.pop %v940
        %v942 = vsub.f32 1.0, %v924
        %v943 = vmul.f32 %v942, %v941
        %v944 = vmul.f32 %v924, %v850
        %v945 = vadd.f32 %v943, %v944
        %v946 = vmax.f32 %v945, 0.0
        %947 = vst.msk [vmem:[%s431 + $0x3] sm:$0x1] %vm661, %v946
        %p948 = scmp.lt.s32.totalorder %s24, 1
        %s949 = scalar_select %p948, %s24, 1
        %s950 = smul.addr %s949, 4
        %s951 = scalar_lea.vmem %s11, %s950
        // Predicated region
        $region77: #{generator_forward.6} parent=63 // pred_check
          %p952 = pneg %p278
        $region78: #{generator_forward.6} parent=63 // pred_check_branch
          %954 = sbr.rel (%p952) target = $region80
        $region79: #{generator_forward.6} parent=63 // pred_region
          _
        $region80: #{generator_forward.6} parent=63 // pred_fallthru
          _
      $region64: #{generator_forward.6} parent=5 // pred_fallthru
        _
      %p955 = scmp.le.s32.totalorder 2, %s19
      // Predicated region
      $region81: #{generator_forward.6} parent=5 // pred_check
        %p956 = pneg %p955
      $region82: #{generator_forward.6} parent=5 // pred_check_branch
        %958 = sbr.rel (%p956) target = $region84
      $region83: #{generator_forward.6} parent=5 // pred_region
        %s959 = ssub.s32 %s19, 2
        // Predicated region
        $region85: #{generator_forward.6} parent=83 // pred_check
          %p960 = pneg %p284
        $region86: #{generator_forward.6} parent=83 // pred_check_branch
          %962 = sbr.rel (%p960) target = $region88
        $region87: #{generator_forward.6} parent=83 // pred_region
          %p963 = scmp.lt.s32.totalorder %s25, 1
          %s964 = scalar_select %p963, %s25, 1
          %s965 = smul.addr %s964, 4
          %s966 = scalar_lea.vmem %s11, %s965
        $region88: #{generator_forward.6} parent=83 // pred_fallthru
          _
      $region84: #{generator_forward.6} parent=5 // pred_fallthru
        _
    $region6: #{generator_forward.6} parent=1 // loop_footer
      %s23 = sadd.s32 1, %s19
    $region7: #{generator_forward.6} parent=1 // loop_footer_branch
      %18 = sbr.rel target = $region3
    $region8: #{generator_forward.6} parent=1 // loop_exit
      _
    %967 = vsyncpa [#allocation6], 1
    %s968 = scalar_lea.sflag [#allocation6], 1
    %969 = vsyncpa %s968, 1
    %970 = vsyncpa [#allocation8], 1

// kernel: generator_forward.7
$region0: #{generator_forward.7}
  #allocation0 [shape = 'u32[]', space=smem, size = 0x4, offset = 0x4, fixed_abs, tag = 'smem constant byte address 0x4 - core index']
  #allocation1 [shape = 'u32[72,128]{1,0:T(1,128)}', space=vmem, size = 0x9000, scoped, tag = 'internal scratch']
  %s0 = inlined_call_operand.vmem [shape: f32[2,4,64], index: 0, kind: input, shape index: {}]
  %s1 = inlined_call_operand.vmem [shape: bf16[4,64,32], index: 1, kind: input, shape index: {}]
  %s2 = inlined_call_operand.vmem [shape: f32[1,32], index: 2, kind: input, shape index: {}]
  %s3 = inlined_call_operand.vmem [shape: f32[2,4,64], index: 3, kind: output, shape index: {}]
  %s4 = sld [smem:[#allocation0]]
  $region45: #{generator_forward.7} parent=0
    _
  %s6 = ssub.s32 1, %s4
  %s7 = scalar_select 0, %s6, %s4
  loop: start=0, step=1, limit=4
  $region2: #{generator_forward.7} parent=0 // loop_pre_header
    _
  $region3: #{generator_forward.7} parent=0 // loop_header
    %s9 = sphi 0, %s13
    %p10 = scmp.ge.s32.totalorder %s9, 4
    %s19 = sphi 0, %s21
    %s22 = sphi 0, %s19
    %s23 = sphi 0, %s22
    %s39 = sphi 0, %s23
    %s43 = sphi 0, %s43
    %s45 = sphi 0, %s43
    %s46 = sphi 0, %s45
    %s60 = sphi 0, %s46
    %s64 = sphi 0, %s64
    %s66 = sphi 0, %s64
    %s67 = sphi 0, %s66
    %s81 = sphi 0, %s67
    %s87 = sphi 0, %s89
    %s90 = sphi 0, %s87
    %s91 = sphi 0, %s90
    %s107 = sphi 0, %s91
  $region4: #{generator_forward.7} parent=0 // loop_header_branch
    %12 = sbr.rel (%p10) target = $region8
  $region5: #{generator_forward.7} parent=0 // loop_body
    %s14 = ssub.s32 %s9, 1
    %s15 = ssub.s32 %s9, 2
    %s16 = sadd.s32 %s9, 1
    %s17 = ssub.s32 %s9, %s16
    %p18 = scmp.eq.s32.totalorder %s17, 0
    %s20 = sadd.s32 %s19, 1
    %s21 = scalar_select %p18, %s19, %s20
    %p24 = pneg %p18
    %p25 = scmp.eq.s32.totalorder %s9, 1
    %p26 = por %p24, %p25
    %p27 = scmp.ne.s32.totalorder %s19, %s22
    %p28 = scmp.eq.s32.totalorder %s9, 0
    %p29 = por %p27, %p28
    %p30 = scmp.ne.s32.totalorder %s19, %s22
    %p31 = scmp.eq.s32.totalorder %s14, 1
    %p32 = por %p30, %p31
    %p33 = scmp.ne.s32.totalorder %s22, %s23
    %p34 = scmp.eq.s32.totalorder %s14, 0
    %p35 = por %p33, %p34
    %p36 = scmp.ne.s32.totalorder %s22, %s23
    %p37 = scmp.eq.s32.totalorder %s15, 1
    %p38 = por %p36, %p37
    %p40 = scmp.ne.s32.totalorder %s23, %s39
    %p41 = scmp.eq.s32.totalorder %s15, 0
    %p42 = por %p40, %p41
    %s44 = sadd.s32 %s43, 1
    %p47 = scmp.eq.s32.totalorder %s9, 1
    %p48 = scmp.ne.s32.totalorder %s43, %s45
    %p49 = scmp.eq.s32.totalorder %s9, 0
    %p50 = por %p48, %p49
    %p51 = scmp.ne.s32.totalorder %s43, %s45
    %p52 = scmp.eq.s32.totalorder %s14, 1
    %p53 = por %p51, %p52
    %p54 = scmp.ne.s32.totalorder %s45, %s46
    %p55 = scmp.eq.s32.totalorder %s14, 0
    %p56 = por %p54, %p55
    %p57 = scmp.ne.s32.totalorder %s45, %s46
    %p58 = scmp.eq.s32.totalorder %s15, 1
    %p59 = por %p57, %p58
    %p61 = scmp.ne.s32.totalorder %s46, %s60
    %p62 = scmp.eq.s32.totalorder %s15, 0
    %p63 = por %p61, %p62
    %s65 = sadd.s32 %s64, 1
    %p68 = scmp.eq.s32.totalorder %s9, 1
    %p69 = scmp.ne.s32.totalorder %s64, %s66
    %p70 = scmp.eq.s32.totalorder %s9, 0
    %p71 = por %p69, %p70
    %p72 = scmp.ne.s32.totalorder %s64, %s66
    %p73 = scmp.eq.s32.totalorder %s14, 1
    %p74 = por %p72, %p73
    %p75 = scmp.ne.s32.totalorder %s66, %s67
    %p76 = scmp.eq.s32.totalorder %s14, 0
    %p77 = por %p75, %p76
    %p78 = scmp.ne.s32.totalorder %s66, %s67
    %p79 = scmp.eq.s32.totalorder %s15, 1
    %p80 = por %p78, %p79
    %p82 = scmp.ne.s32.totalorder %s67, %s81
    %p83 = scmp.eq.s32.totalorder %s15, 0
    %p84 = por %p82, %p83
    %s85 = ssub.s32 %s9, %s16
    %p86 = scmp.eq.s32.totalorder %s85, 0
    %s88 = sadd.s32 %s87, 1
    %s89 = scalar_select %p86, %s87, %s88
    %p92 = pneg %p86
    %p93 = scmp.eq.s32.totalorder %s9, 1
    %p94 = por %p92, %p93
    %p95 = scmp.ne.s32.totalorder %s87, %s90
    %p96 = scmp.eq.s32.totalorder %s9, 0
    %p97 = por %p95, %p96
    %p98 = scmp.ne.s32.totalorder %s87, %s90
    %p99 = scmp.eq.s32.totalorder %s14, 1
    %p100 = por %p98, %p99
    %p101 = scmp.ne.s32.totalorder %s90, %s91
    %p102 = scmp.eq.s32.totalorder %s14, 0
    %p103 = por %p101, %p102
    %p104 = scmp.ne.s32.totalorder %s90, %s91
    %p105 = scmp.eq.s32.totalorder %s15, 1
    %p106 = por %p104, %p105
    %p108 = scmp.ne.s32.totalorder %s91, %s107
    %p109 = scmp.eq.s32.totalorder %s15, 0
    %p110 = por %p108, %p109
    %p111 = scmp.le.s32.totalorder 1, %s9
    %p112 = scmp.lt.s32.totalorder %s9, 3
    %p113 = pnand %p111, %p112
    %p114 = pneg %p113
    // Predicated region
    $region9: #{generator_forward.7} parent=5 // pred_check
      _
    $region10: #{generator_forward.7} parent=5 // pred_check_branch
      %116 = sbr.rel (%p113) target = $region12
    $region11: #{generator_forward.7} parent=5 // pred_region
      %s117 = ssub.s32 %s9, 1
      // Predicated region
      $region13: #{generator_forward.7} parent=11 // pred_check
        %p118 = pneg %p56
      $region14: #{generator_forward.7} parent=11 // pred_check_branch
        %120 = sbr.rel (%p118) target = $region16
      $region15: #{generator_forward.7} parent=11 // pred_region
        _
      $region16: #{generator_forward.7} parent=11 // pred_fallthru
        _
      // Predicated region
      $region17: #{generator_forward.7} parent=11 // pred_check
        %p121 = pneg %p77
      $region18: #{generator_forward.7} parent=11 // pred_check_branch
        %123 = sbr.rel (%p121) target = $region20
      $region19: #{generator_forward.7} parent=11 // pred_region
        _
      $region20: #{generator_forward.7} parent=11 // pred_fallthru
        _
    $region12: #{generator_forward.7} parent=5 // pred_fallthru
      _
    %p124 = scmp.lt.s32.totalorder %s9, 2
    // Predicated region
    $region21: #{generator_forward.7} parent=5 // pred_check
      %p125 = pneg %p124
    $region22: #{generator_forward.7} parent=5 // pred_check_branch
      %127 = sbr.rel (%p125) target = $region24
    $region23: #{generator_forward.7} parent=5 // pred_region
      // Predicated region
      $region25: #{generator_forward.7} parent=23 // pred_check
        %p128 = pneg %p29
      $region26: #{generator_forward.7} parent=23 // pred_check_branch
        %130 = sbr.rel (%p128) target = $region28
      $region27: #{generator_forward.7} parent=23 // pred_region
        %p131 = scmp.lt.s32.totalorder %s9, 1
        %s132 = scalar_select %p131, %s9, 1
        %s133 = smul.addr %s132, 4
        %s134 = scalar_lea.vmem %s0, %s133
      $region28: #{generator_forward.7} parent=23 // pred_fallthru
        _
    $region24: #{generator_forward.7} parent=5 // pred_fallthru
      _
    %p135 = scmp.le.s32.totalorder 1, %s9
    %p136 = scmp.lt.s32.totalorder %s9, 3
    %p137 = pnand %p135, %p136
    %p138 = pneg %p137
    // Predicated region
    $region29: #{generator_forward.7} parent=5 // pred_check
      _
    $region30: #{generator_forward.7} parent=5 // pred_check_branch
      %140 = sbr.rel (%p137) target = $region32
    $region31: #{generator_forward.7} parent=5 // pred_region
      %s141 = ssub.s32 %s9, 1
      %p142 = scmp.lt.s32.totalorder %s14, 1
      %s143 = scalar_select %p142, %s14, 1
      %s144 = smul.addr %s143, 4
      %s145 = scalar_lea.vmem %s0, %s144
      %p146 = pneg %p35
      %p147 = pneg %p32
      %p148 = pneg %p56
      %p149 = pneg %p53
      %p150 = pneg %p77
      %p151 = pneg %p74
      %p152 = pneg %p103
      %p153 = pneg %p100
      %p154 = scmp.lt.s32.totalorder %s14, 1
      %s155 = scalar_select %p154, %s14, 1
      %s156 = smul.addr %s155, 4
      %s157 = scalar_lea.vmem %s3, %s156
      %p158 = scmp.lt.s32.totalorder %s14, 1
      %s159 = scalar_select %p158, %s14, 1
      %s160 = smul.addr %s159, 4
      %s161 = scalar_lea.vmem %s0, %s160
      %p162 = scmp.lt.s32.totalorder %s14, 1
      %s163 = scalar_select %p162, %s14, 1
      %s164 = smul.addr %s163, 4
      %s165 = scalar_lea.vmem %s3, %s164
      %v167 = vld [vmem:[%s161] sm:$0xf]
      %v169 = vrot.slane %v167, 7
      %vm171 = vcmask 1040384
      %v172 = vsel %vm171, 0.0, %v169
      %vm173 = vcmask 1044480
      %v174 = vsel %vm173, %v172, 0.0
      %v175 = vld [vmem:[%s2] sm:$0x1]
      %v176 = vpack.c.bf16 %v174, %v174
      %s177 = scalar_lea.vmem %s1, 32
      %v178 = vld [vmem:[%s177] sm:$0xf]
      %v179 = vld [vmem:[%s177 + $0x4] sm:$0xf]
      %v180 = vld [vmem:[%s177 + $0x8] sm:$0xf]
      %v181 = vld [vmem:[%s177 + $0xc] sm:$0xf]
      %v182 = vld [vmem:[%s177 + $0x10] sm:$0xf]
      %v183 = vld [vmem:[%s177 + $0x14] sm:$0xf]
      %v184 = vld [vmem:[%s177 + $0x18] sm:$0xf]
      %v185 = vld [vmem:[%s177 + $0x1c] sm:$0xf]
      %s186 = scalar_lea.vmem %s1, 96
      %v187 = vld [vmem:[%s186] sm:$0xf]
      %v188 = vld [vmem:[%s186 + $0x4] sm:$0xf]
      %v189 = vld [vmem:[%s186 + $0x8] sm:$0xf]
      %v190 = vld [vmem:[%s186 + $0xc] sm:$0xf]
      %v191 = vld [vmem:[%s186 + $0x10] sm:$0xf]
      %v192 = vld [vmem:[%s186 + $0x14] sm:$0xf]
      %v193 = vld [vmem:[%s186 + $0x18] sm:$0xf]
      %v194 = vld [vmem:[%s186 + $0x1c] sm:$0xf]
      %v203 = vunpack.c.l.b16 %v187
      %v204 = vunpack.c.l.b16 %v188
      %v205 = vunpack.c.l.b16 %v189
      %v206 = vunpack.c.l.b16 %v190
      %v207 = vunpack.c.l.b16 %v191
      %v208 = vunpack.c.l.b16 %v192
      %v209 = vunpack.c.l.b16 %v193
      %v210 = vunpack.c.l.b16 %v194
      %v211 = vpack.c.b16 %v204, %v203
      %v212 = vpack.c.b16 %v206, %v205
      %v213 = vpack.c.b16 %v208, %v207
      %v214 = vpack.c.b16 %v210, %v209
      %vm219 = vcmask 523264
      %v221 = vsel %vm219, %v176, 0
      %223 = vmatpush.bf16.msra.mxu0 0
      %224 = vmatpush.bf16.msra.mxu0 0
      %225 = vmatpush.bf16.msra.mxu0 0
      %226 = vmatpush.bf16.msra.mxu0 0
      %227 = vmatpush.bf16.msra.mxu0 %v214
      %228 = vmatpush.bf16.msra.mxu0 %v213
      %229 = vmatpush.bf16.msra.mxu0 %v212
      %230 = vmatpush.bf16.msra.mxu0 %v211
      %231 = vmatmul.bf16.gmra.mxu0 %v221
      %v232 = vpop.f32.mrf.mxu0
      %v233 = vadd.f32 0.0, %v232
      %v234 = vpop.f32.mrf.mxu0
      %235 = vdwg.mxu0
      %v236 = vshrl.u32 %v176, 16
      %v238 = vshll.u32 %v176, 16
      %v240 = vrot.slane %v238, 1
      %v241 = vor.u32 %v236, %v240
      %v250 = vunpack.c.l.b16 %v178
      %v251 = vunpack.c.l.b16 %v179
      %v252 = vunpack.c.l.b16 %v180
      %v253 = vunpack.c.l.b16 %v181
      %v254 = vunpack.c.l.b16 %v182
      %v255 = vunpack.c.l.b16 %v183
      %v256 = vunpack.c.l.b16 %v184
      %v257 = vunpack.c.l.b16 %v185
      %v258 = vpack.c.b16 %v251, %v250
      %v259 = vpack.c.b16 %v253, %v252
      %v260 = vpack.c.b16 %v255, %v254
      %v261 = vpack.c.b16 %v257, %v256
      %v267 = vsel %vm219, %v241, 0
      %269 = vmatpush.bf16.msra.mxu0 0
      %270 = vmatpush.bf16.msra.mxu0 0
      %271 = vmatpush.bf16.msra.mxu0 0
      %272 = vmatpush.bf16.msra.mxu0 0
      %273 = vmatpush.bf16.msra.mxu0 %v261
      %274 = vmatpush.bf16.msra.mxu0 %v260
      %275 = vmatpush.bf16.msra.mxu0 %v259
      %276 = vmatpush.bf16.msra.mxu0 %v258
      %277 = vmatmul.bf16.gmra.mxu0 %v267
      %v278 = vpop.f32.mrf.mxu0
      %v279 = vadd.f32 %v233, %v278
      %v280 = vpop.f32.mrf.mxu0
      %281 = vdwg.mxu0
      %v283 = vperm.slane %v175, 0
      %v285 = vadd.f32 %v279, %v283
      %v286 = vmax.f32 %v285, 0.0
      %v287 = vld [vmem:[%s1] sm:$0xf]
      %v288 = vld [vmem:[%s1 + $0x4] sm:$0xf]
      %v289 = vld [vmem:[%s1 + $0x8] sm:$0xf]
      %v290 = vld [vmem:[%s1 + $0xc] sm:$0xf]
      %v291 = vld [vmem:[%s1 + $0x10] sm:$0xf]
      %v292 = vld [vmem:[%s1 + $0x14] sm:$0xf]
      %v293 = vld [vmem:[%s1 + $0x18] sm:$0xf]
      %v294 = vld [vmem:[%s1 + $0x1c] sm:$0xf]
      %s295 = scalar_lea.vmem %s1, 64
      %v296 = vld [vmem:[%s295] sm:$0xf]
      %v297 = vld [vmem:[%s295 + $0x4] sm:$0xf]
      %v298 = vld [vmem:[%s295 + $0x8] sm:$0xf]
      %v299 = vld [vmem:[%s295 + $0xc] sm:$0xf]
      %v300 = vld [vmem:[%s295 + $0x10] sm:$0xf]
      %v301 = vld [vmem:[%s295 + $0x14] sm:$0xf]
      %v302 = vld [vmem:[%s295 + $0x18] sm:$0xf]
      %v303 = vld [vmem:[%s295 + $0x1c] sm:$0xf]
      %v312 = vunpack.c.l.b16 %v296
      %v313 = vunpack.c.l.b16 %v297
      %v314 = vunpack.c.l.b16 %v298
      %v315 = vunpack.c.l.b16 %v299
      %v316 = vunpack.c.l.b16 %v300
      %v317 = vunpack.c.l.b16 %v301
      %v318 = vunpack.c.l.b16 %v302
      %v319 = vunpack.c.l.b16 %v303
      %v320 = vpack.c.b16 %v313, %v312
      %v321 = vpack.c.b16 %v315, %v314
      %v322 = vpack.c.b16 %v317, %v316
      %v323 = vpack.c.b16 %v319, %v318
      %328 = vmatpush.bf16.msra.mxu0 0
      %329 = vmatpush.bf16.msra.mxu0 0
      %330 = vmatpush.bf16.msra.mxu0 0
      %331 = vmatpush.bf16.msra.mxu0 0
      %332 = vmatpush.bf16.msra.mxu0 %v323
      %333 = vmatpush.bf16.msra.mxu0 %v322
      %334 = vmatpush.bf16.msra.mxu0 %v321
      %335 = vmatpush.bf16.msra.mxu0 %v320
      %336 = vmatmul.bf16.gmra.mxu0 %v267
      %v337 = vpop.f32.mrf.mxu0
      %v338 = vadd.f32 0.0, %v337
      %v339 = vpop.f32.mrf.mxu0
      %340 = vdwg.mxu0
      %v342 = vrot.slane %v176, 1
      %v351 = vunpack.c.l.b16 %v287
      %v352 = vunpack.c.l.b16 %v288
      %v353 = vunpack.c.l.b16 %v289
      %v354 = vunpack.c.l.b16 %v290
      %v355 = vunpack.c.l.b16 %v291
      %v356 = vunpack.c.l.b16 %v292
      %v357 = vunpack.c.l.b16 %v293
      %v358 = vunpack.c.l.b16 %v294
      %v359 = vpack.c.b16 %v352, %v351
      %v360 = vpack.c.b16 %v354, %v353
      %v361 = vpack.c.b16 %v356, %v355
      %v362 = vpack.c.b16 %v358, %v357
      %v368 = vsel %vm219, %v342, 0
      %370 = vmatpush.bf16.msra.mxu0 0
      %371 = vmatpush.bf16.msra.mxu0 0
      %372 = vmatpush.bf16.msra.mxu0 0
      %373 = vmatpush.bf16.msra.mxu0 0
      %374 = vmatpush.bf16.msra.mxu0 %v362
      %375 = vmatpush.bf16.msra.mxu0 %v361
      %376 = vmatpush.bf16.msra.mxu0 %v360
      %377 = vmatpush.bf16.msra.mxu0 %v359
      %378 = vmatmul.bf16.gmra.mxu0 %v368
      %v379 = vpop.f32.mrf.mxu0
      %v380 = vadd.f32 %v338, %v379
      %v381 = vpop.f32.mrf.mxu0
      %382 = vdwg.mxu0
      %v383 = vadd.f32 %v380, %v283
      %v384 = vmax.f32 %v383, 0.0
      %386 = vrot.lane.b32.xlu0 %v384, 32
      %v387 = vpop.permute.xlu0 %386
      %vm389 = vcmask 261120
      %v390 = vsel %vm389, %v286, %v387
      %vm391 = vcmask 519168
      %392 = vst.msk [vmem:[%s165] sm:$0xf] %vm391, %v390
      %p393 = scmp.lt.s32.totalorder %s14, 1
      %s394 = scalar_select %p393, %s14, 1
      %s395 = smul.addr %s394, 4
      %s396 = scalar_lea.vmem %s3, %s395
      // Predicated region
      $region33: #{generator_forward.7} parent=31 // pred_check
        %p397 = pneg %p100
      $region34: #{generator_forward.7} parent=31 // pred_check_branch
        %399 = sbr.rel (%p397) target = $region36
      $region35: #{generator_forward.7} parent=31 // pred_region
        _
      $region36: #{generator_forward.7} parent=31 // pred_fallthru
        _
    $region32: #{generator_forward.7} parent=5 // pred_fallthru
      _
    %p400 = scmp.le.s32.totalorder 2, %s9
    // Predicated region
    $region37: #{generator_forward.7} parent=5 // pred_check
      %p401 = pneg %p400
    $region38: #{generator_forward.7} parent=5 // pred_check_branch
      %403 = sbr.rel (%p401) target = $region40
    $region39: #{generator_forward.7} parent=5 // pred_region
      %s404 = ssub.s32 %s9, 2
      // Predicated region
      $region41: #{generator_forward.7} parent=39 // pred_check
        %p405 = pneg %p106
      $region42: #{generator_forward.7} parent=39 // pred_check_branch
        %407 = sbr.rel (%p405) target = $region44
      $region43: #{generator_forward.7} parent=39 // pred_region
        %p408 = scmp.lt.s32.totalorder %s15, 1
        %s409 = scalar_select %p408, %s15, 1
        %s410 = smul.addr %s409, 4
        %s411 = scalar_lea.vmem %s3, %s410
      $region44: #{generator_forward.7} parent=39 // pred_fallthru
        _
    $region40: #{generator_forward.7} parent=5 // pred_fallthru
      _
  $region6: #{generator_forward.7} parent=0 // loop_footer
    %s13 = sadd.s32 1, %s9
  $region7: #{generator_forward.7} parent=0 // loop_footer_branch
    %8 = sbr.rel target = $region3
  $region8: #{generator_forward.7} parent=0 // loop_exit
    _

// kernel: generator_forward.9
$region0: #{generator_forward.9}
  #allocation0 [shape = 'u32[]', space=smem, size = 0x4, offset = 0x4, fixed_abs, tag = 'smem constant byte address 0x4 - core index']
  #allocation1 [shape = 'u32[72,128]{1,0:T(1,128)}', space=vmem, size = 0x9000, scoped, tag = 'internal scratch']
  %s0 = inlined_call_operand.vmem [shape: f32[2,8,32], index: 0, kind: input, shape index: {}]
  %s1 = inlined_call_operand.vmem [shape: bf16[4,32,16], index: 1, kind: input, shape index: {}]
  %s2 = inlined_call_operand.vmem [shape: f32[1,16], index: 2, kind: input, shape index: {}]
  %s3 = inlined_call_operand.vmem [shape: bf16[16,4], index: 3, kind: input, shape index: {}]
  %s4 = inlined_call_operand.vmem [shape: f32[1,4], index: 4, kind: input, shape index: {}]
  %s5 = inlined_call_operand.vmem [shape: f32[2,8,8], index: 5, kind: output, shape index: {}]
  %s6 = sld [smem:[#allocation0]]
  $region53: #{generator_forward.9} parent=0
    _
  %s8 = ssub.s32 1, %s6
  %s9 = scalar_select 0, %s8, %s6
  loop: start=0, step=1, limit=4
  $region2: #{generator_forward.9} parent=0 // loop_pre_header
    _
  $region3: #{generator_forward.9} parent=0 // loop_header
    %s11 = sphi 0, %s15
    %p12 = scmp.ge.s32.totalorder %s11, 4
    %s21 = sphi 0, %s23
    %s24 = sphi 0, %s21
    %s25 = sphi 0, %s24
    %s41 = sphi 0, %s25
    %s45 = sphi 0, %s45
    %s47 = sphi 0, %s45
    %s48 = sphi 0, %s47
    %s62 = sphi 0, %s48
    %s66 = sphi 0, %s66
    %s68 = sphi 0, %s66
    %s69 = sphi 0, %s68
    %s83 = sphi 0, %s69
    %s87 = sphi 0, %s87
    %s89 = sphi 0, %s87
    %s90 = sphi 0, %s89
    %s104 = sphi 0, %s90
    %s108 = sphi 0, %s108
    %s110 = sphi 0, %s108
    %s111 = sphi 0, %s110
    %s125 = sphi 0, %s111
    %s131 = sphi 0, %s133
    %s134 = sphi 0, %s131
    %s135 = sphi 0, %s134
    %s151 = sphi 0, %s135
  $region4: #{generator_forward.9} parent=0 // loop_header_branch
    %14 = sbr.rel (%p12) target = $region8
  $region5: #{generator_forward.9} parent=0 // loop_body
    %s16 = ssub.s32 %s11, 1
    %s17 = ssub.s32 %s11, 2
    %s18 = sadd.s32 %s11, 1
    %s19 = ssub.s32 %s11, %s18
    %p20 = scmp.eq.s32.totalorder %s19, 0
    %s22 = sadd.s32 %s21, 1
    %s23 = scalar_select %p20, %s21, %s22
    %p26 = pneg %p20
    %p27 = scmp.eq.s32.totalorder %s11, 1
    %p28 = por %p26, %p27
    %p29 = scmp.ne.s32.totalorder %s21, %s24
    %p30 = scmp.eq.s32.totalorder %s11, 0
    %p31 = por %p29, %p30
    %p32 = scmp.ne.s32.totalorder %s21, %s24
    %p33 = scmp.eq.s32.totalorder %s16, 1
    %p34 = por %p32, %p33
    %p35 = scmp.ne.s32.totalorder %s24, %s25
    %p36 = scmp.eq.s32.totalorder %s16, 0
    %p37 = por %p35, %p36
    %p38 = scmp.ne.s32.totalorder %s24, %s25
    %p39 = scmp.eq.s32.totalorder %s17, 1
    %p40 = por %p38, %p39
    %p42 = scmp.ne.s32.totalorder %s25, %s41
    %p43 = scmp.eq.s32.totalorder %s17, 0
    %p44 = por %p42, %p43
    %s46 = sadd.s32 %s45, 1
    %p49 = scmp.eq.s32.totalorder %s11, 1
    %p50 = scmp.ne.s32.totalorder %s45, %s47
    %p51 = scmp.eq.s32.totalorder %s11, 0
    %p52 = por %p50, %p51
    %p53 = scmp.ne.s32.totalorder %s45, %s47
    %p54 = scmp.eq.s32.totalorder %s16, 1
    %p55 = por %p53, %p54
    %p56 = scmp.ne.s32.totalorder %s47, %s48
    %p57 = scmp.eq.s32.totalorder %s16, 0
    %p58 = por %p56, %p57
    %p59 = scmp.ne.s32.totalorder %s47, %s48
    %p60 = scmp.eq.s32.totalorder %s17, 1
    %p61 = por %p59, %p60
    %p63 = scmp.ne.s32.totalorder %s48, %s62
    %p64 = scmp.eq.s32.totalorder %s17, 0
    %p65 = por %p63, %p64
    %s67 = sadd.s32 %s66, 1
    %p70 = scmp.eq.s32.totalorder %s11, 1
    %p71 = scmp.ne.s32.totalorder %s66, %s68
    %p72 = scmp.eq.s32.totalorder %s11, 0
    %p73 = por %p71, %p72
    %p74 = scmp.ne.s32.totalorder %s66, %s68
    %p75 = scmp.eq.s32.totalorder %s16, 1
    %p76 = por %p74, %p75
    %p77 = scmp.ne.s32.totalorder %s68, %s69
    %p78 = scmp.eq.s32.totalorder %s16, 0
    %p79 = por %p77, %p78
    %p80 = scmp.ne.s32.totalorder %s68, %s69
    %p81 = scmp.eq.s32.totalorder %s17, 1
    %p82 = por %p80, %p81
    %p84 = scmp.ne.s32.totalorder %s69, %s83
    %p85 = scmp.eq.s32.totalorder %s17, 0
    %p86 = por %p84, %p85
    %s88 = sadd.s32 %s87, 1
    %p91 = scmp.eq.s32.totalorder %s11, 1
    %p92 = scmp.ne.s32.totalorder %s87, %s89
    %p93 = scmp.eq.s32.totalorder %s11, 0
    %p94 = por %p92, %p93
    %p95 = scmp.ne.s32.totalorder %s87, %s89
    %p96 = scmp.eq.s32.totalorder %s16, 1
    %p97 = por %p95, %p96
    %p98 = scmp.ne.s32.totalorder %s89, %s90
    %p99 = scmp.eq.s32.totalorder %s16, 0
    %p100 = por %p98, %p99
    %p101 = scmp.ne.s32.totalorder %s89, %s90
    %p102 = scmp.eq.s32.totalorder %s17, 1
    %p103 = por %p101, %p102
    %p105 = scmp.ne.s32.totalorder %s90, %s104
    %p106 = scmp.eq.s32.totalorder %s17, 0
    %p107 = por %p105, %p106
    %s109 = sadd.s32 %s108, 1
    %p112 = scmp.eq.s32.totalorder %s11, 1
    %p113 = scmp.ne.s32.totalorder %s108, %s110
    %p114 = scmp.eq.s32.totalorder %s11, 0
    %p115 = por %p113, %p114
    %p116 = scmp.ne.s32.totalorder %s108, %s110
    %p117 = scmp.eq.s32.totalorder %s16, 1
    %p118 = por %p116, %p117
    %p119 = scmp.ne.s32.totalorder %s110, %s111
    %p120 = scmp.eq.s32.totalorder %s16, 0
    %p121 = por %p119, %p120
    %p122 = scmp.ne.s32.totalorder %s110, %s111
    %p123 = scmp.eq.s32.totalorder %s17, 1
    %p124 = por %p122, %p123
    %p126 = scmp.ne.s32.totalorder %s111, %s125
    %p127 = scmp.eq.s32.totalorder %s17, 0
    %p128 = por %p126, %p127
    %s129 = ssub.s32 %s11, %s18
    %p130 = scmp.eq.s32.totalorder %s129, 0
    %s132 = sadd.s32 %s131, 1
    %s133 = scalar_select %p130, %s131, %s132
    %p136 = pneg %p130
    %p137 = scmp.eq.s32.totalorder %s11, 1
    %p138 = por %p136, %p137
    %p139 = scmp.ne.s32.totalorder %s131, %s134
    %p140 = scmp.eq.s32.totalorder %s11, 0
    %p141 = por %p139, %p140
    %p142 = scmp.ne.s32.totalorder %s131, %s134
    %p143 = scmp.eq.s32.totalorder %s16, 1
    %p144 = por %p142, %p143
    %p145 = scmp.ne.s32.totalorder %s134, %s135
    %p146 = scmp.eq.s32.totalorder %s16, 0
    %p147 = por %p145, %p146
    %p148 = scmp.ne.s32.totalorder %s134, %s135
    %p149 = scmp.eq.s32.totalorder %s17, 1
    %p150 = por %p148, %p149
    %p152 = scmp.ne.s32.totalorder %s135, %s151
    %p153 = scmp.eq.s32.totalorder %s17, 0
    %p154 = por %p152, %p153
    %p155 = scmp.le.s32.totalorder 1, %s11
    %p156 = scmp.lt.s32.totalorder %s11, 3
    %p157 = pnand %p155, %p156
    %p158 = pneg %p157
    // Predicated region
    $region9: #{generator_forward.9} parent=5 // pred_check
      _
    $region10: #{generator_forward.9} parent=5 // pred_check_branch
      %160 = sbr.rel (%p157) target = $region12
    $region11: #{generator_forward.9} parent=5 // pred_region
      %s161 = ssub.s32 %s11, 1
      // Predicated region
      $region13: #{generator_forward.9} parent=11 // pred_check
        %p162 = pneg %p58
      $region14: #{generator_forward.9} parent=11 // pred_check_branch
        %164 = sbr.rel (%p162) target = $region16
      $region15: #{generator_forward.9} parent=11 // pred_region
        _
      $region16: #{generator_forward.9} parent=11 // pred_fallthru
        _
      // Predicated region
      $region17: #{generator_forward.9} parent=11 // pred_check
        %p165 = pneg %p79
      $region18: #{generator_forward.9} parent=11 // pred_check_branch
        %167 = sbr.rel (%p165) target = $region20
      $region19: #{generator_forward.9} parent=11 // pred_region
        _
      $region20: #{generator_forward.9} parent=11 // pred_fallthru
        _
      // Predicated region
      $region21: #{generator_forward.9} parent=11 // pred_check
        %p168 = pneg %p100
      $region22: #{generator_forward.9} parent=11 // pred_check_branch
        %170 = sbr.rel (%p168) target = $region24
      $region23: #{generator_forward.9} parent=11 // pred_region
        _
      $region24: #{generator_forward.9} parent=11 // pred_fallthru
        _
      // Predicated region
      $region25: #{generator_forward.9} parent=11 // pred_check
        %p171 = pneg %p121
      $region26: #{generator_forward.9} parent=11 // pred_check_branch
        %173 = sbr.rel (%p171) target = $region28
      $region27: #{generator_forward.9} parent=11 // pred_region
        _
      $region28: #{generator_forward.9} parent=11 // pred_fallthru
        _
    $region12: #{generator_forward.9} parent=5 // pred_fallthru
      _
    %p174 = scmp.lt.s32.totalorder %s11, 2
    // Predicated region
    $region29: #{generator_forward.9} parent=5 // pred_check
      %p175 = pneg %p174
    $region30: #{generator_forward.9} parent=5 // pred_check_branch
      %177 = sbr.rel (%p175) target = $region32
    $region31: #{generator_forward.9} parent=5 // pred_region
      // Predicated region
      $region33: #{generator_forward.9} parent=31 // pred_check
        %p178 = pneg %p31
      $region34: #{generator_forward.9} parent=31 // pred_check_branch
        %180 = sbr.rel (%p178) target = $region36
      $region35: #{generator_forward.9} parent=31 // pred_region
        %p181 = scmp.lt.s32.totalorder %s11, 1
        %s182 = scalar_select %p181, %s11, 1
        %s183 = smul.addr %s182, 8
        %s184 = scalar_lea.vmem %s0, %s183
      $region36: #{generator_forward.9} parent=31 // pred_fallthru
        _
    $region32: #{generator_forward.9} parent=5 // pred_fallthru
      _
    %p185 = scmp.le.s32.totalorder 1, %s11
    %p186 = scmp.lt.s32.totalorder %s11, 3
    %p187 = pnand %p185, %p186
    %p188 = pneg %p187
    // Predicated region
    $region37: #{generator_forward.9} parent=5 // pred_check
      _
    $region38: #{generator_forward.9} parent=5 // pred_check_branch
      %190 = sbr.rel (%p187) target = $region40
    $region39: #{generator_forward.9} parent=5 // pred_region
      %s191 = ssub.s32 %s11, 1
      %p192 = scmp.lt.s32.totalorder %s16, 1
      %s193 = scalar_select %p192, %s16, 1
      %s194 = smul.addr %s193, 8
      %s195 = scalar_lea.vmem %s0, %s194
      %p196 = pneg %p37
      %p197 = pneg %p34
      %p198 = pneg %p58
      %p199 = pneg %p55
      %p200 = pneg %p79
      %p201 = pneg %p76
      %p202 = pneg %p100
      %p203 = pneg %p97
      %p204 = pneg %p121
      %p205 = pneg %p118
      %p206 = pneg %p147
      %p207 = pneg %p144
      %p208 = scmp.lt.s32.totalorder %s16, 1
      %s209 = scalar_select %p208, %s16, 1
      %s210 = smul.addr %s209, 8
      %s211 = scalar_lea.vmem %s5, %s210
      %p212 = scmp.lt.s32.totalorder %s16, 1
      %s213 = scalar_select %p212, %s16, 1
      %s214 = smul.addr %s213, 8
      %s215 = scalar_lea.vmem %s0, %s214
      %p216 = scmp.lt.s32.totalorder %s16, 1
      %s217 = scalar_select %p216, %s16, 1
      %s218 = smul.addr %s217, 8
      %s219 = scalar_lea.vmem %s5, %s218
      %v221 = vld [vmem:[%s215] sm:$0xff]
      %v223 = vrot.slane %v221, 7
      %vm225 = vcmask 1040384
      %v226 = vsel %vm225, 0.0, %v223
      %v227 = vsel %vm225, %v223, 0.0
      %v228 = vld [vmem:[%s2] sm:$0x1]
      %v229 = vld [vmem:[%s3] sm:$0xf]
      %v230 = vld [vmem:[%s3 + $0x4] sm:$0xf]
      %v231 = vld [vmem:[%s4] sm:$0x1]
      %v232 = vpack.c.bf16 %v227, %v226
      %v233 = vpack.c.bf16 %v226, %v226
      %s234 = scalar_lea.vmem %s1, 16
      %v235 = vld [vmem:[%s234] sm:$0xf]
      %v236 = vld [vmem:[%s234 + $0x4] sm:$0xf]
      %v237 = vld [vmem:[%s234 + $0x8] sm:$0xf]
      %v238 = vld [vmem:[%s234 + $0xc] sm:$0xf]
      %s239 = scalar_lea.vmem %s1, 48
      %v240 = vld [vmem:[%s239] sm:$0xf]
      %v241 = vld [vmem:[%s239 + $0x4] sm:$0xf]
      %v242 = vld [vmem:[%s239 + $0x8] sm:$0xf]
      %v243 = vld [vmem:[%s239 + $0xc] sm:$0xf]
      %v248 = vunpack.c.l.b16 %v240
      %v249 = vunpack.c.l.b16 %v241
      %v250 = vunpack.c.l.b16 %v242
      %v251 = vunpack.c.l.b16 %v243
      %v252 = vpack.c.b16 %v249, %v248
      %v253 = vpack.c.b16 %v251, %v250
      %vm256 = vcmask 261120
      %v258 = vsel %vm256, %v233, 0
      %260 = vmatpush.bf16.msra.mxu0 0
      %261 = vmatpush.bf16.msra.mxu0 0
      %262 = vmatpush.bf16.msra.mxu0 0
      %263 = vmatpush.bf16.msra.mxu0 0
      %264 = vmatpush.bf16.msra.mxu0 0
      %265 = vmatpush.bf16.msra.mxu0 0
      %266 = vmatpush.bf16.msra.mxu0 %v253
      %267 = vmatpush.bf16.msra.mxu0 %v252
      %268 = vmatmul.bf16.gmra.mxu0 %v258
      %v269 = vpop.f32.mrf.mxu0
      %v270 = vadd.f32 0.0, %v269
      %v271 = vpop.f32.mrf.mxu0
      %272 = vdwg.mxu0
      %v274 = vshrl.u32 %v232, 16
      %v276 = vshll.u32 %v232, 16
      %v278 = vrot.slane %v276, 1
      %v279 = vor.u32 %v274, %v278
      %v284 = vunpack.c.l.b16 %v235
      %v285 = vunpack.c.l.b16 %v236
      %v286 = vunpack.c.l.b16 %v237
      %v287 = vunpack.c.l.b16 %v238
      %v288 = vpack.c.b16 %v285, %v284
      %v289 = vpack.c.b16 %v287, %v286
      %v293 = vsel %vm256, %v279, 0
      %295 = vmatpush.bf16.msra.mxu0 0
      %296 = vmatpush.bf16.msra.mxu0 0
      %297 = vmatpush.bf16.msra.mxu0 0
      %298 = vmatpush.bf16.msra.mxu0 0
      %299 = vmatpush.bf16.msra.mxu0 0
      %300 = vmatpush.bf16.msra.mxu0 0
      %301 = vmatpush.bf16.msra.mxu0 %v289
      %302 = vmatpush.bf16.msra.mxu0 %v288
      %303 = vmatmul.bf16.gmra.mxu0 %v293
      %v304 = vpop.f32.mrf.mxu0
      %v305 = vadd.f32 %v270, %v304
      %v306 = vpop.f32.mrf.mxu0
      %307 = vdwg.mxu0
      %v309 = vperm.slane %v228, 0
      %v311 = vadd.f32 %v305, %v309
      %v312 = vmax.f32 %v311, 0.0
      %v313 = vpack.c.bf16 %v312, %v312
      %v315 = vperm.slane %v231, 0
      %v319 = vunpack.c.l.b16 %v229
      %v320 = vunpack.c.l.b16 %v230
      %v321 = vpack.c.b16 %v320, %v319
      %vm323 = vcmask 130048
      %v325 = vsel %vm323, %v313, 0
      %327 = vmatpush.bf16.msra.mxu0 0
      %328 = vmatpush.bf16.msra.mxu0 0
      %329 = vmatpush.bf16.msra.mxu0 0
      %330 = vmatpush.bf16.msra.mxu0 0
      %331 = vmatpush.bf16.msra.mxu0 0
      %332 = vmatpush.bf16.msra.mxu0 0
      %333 = vmatpush.bf16.msra.mxu0 0
      %334 = vmatpush.bf16.msra.mxu0 %v321
      %335 = vmatmul.bf16.gmra.mxu0 %v325
      %v336 = vpop.f32.mrf.mxu0
      %v337 = vadd.f32 %v315, %v336
      %v338 = vpop.f32.mrf.mxu0
      %339 = vdwg.mxu0
      %v340 = vld [vmem:[%s1] sm:$0xf]
      %v341 = vld [vmem:[%s1 + $0x4] sm:$0xf]
      %v342 = vld [vmem:[%s1 + $0x8] sm:$0xf]
      %v343 = vld [vmem:[%s1 + $0xc] sm:$0xf]
      %s344 = scalar_lea.vmem %s1, 32
      %v345 = vld [vmem:[%s344] sm:$0xf]
      %v346 = vld [vmem:[%s344 + $0x4] sm:$0xf]
      %v347 = vld [vmem:[%s344 + $0x8] sm:$0xf]
      %v348 = vld [vmem:[%s344 + $0xc] sm:$0xf]
      %v353 = vunpack.c.l.b16 %v345
      %v354 = vunpack.c.l.b16 %v346
      %v355 = vunpack.c.l.b16 %v347
      %v356 = vunpack.c.l.b16 %v348
      %v357 = vpack.c.b16 %v354, %v353
      %v358 = vpack.c.b16 %v356, %v355
      %361 = vmatpush.bf16.msra.mxu0 0
      %362 = vmatpush.bf16.msra.mxu0 0
      %363 = vmatpush.bf16.msra.mxu0 0
      %364 = vmatpush.bf16.msra.mxu0 0
      %365 = vmatpush.bf16.msra.mxu0 0
      %366 = vmatpush.bf16.msra.mxu0 0
      %367 = vmatpush.bf16.msra.mxu0 %v358
      %368 = vmatpush.bf16.msra.mxu0 %v357
      %369 = vmatmul.bf16.gmra.mxu0 %v293
      %v370 = vpop.f32.mrf.mxu0
      %v371 = vadd.f32 0.0, %v370
      %v372 = vpop.f32.mrf.mxu0
      %373 = vdwg.mxu0
      %v375 = vrot.slane %v232, 1
      %v380 = vunpack.c.l.b16 %v340
      %v381 = vunpack.c.l.b16 %v341
      %v382 = vunpack.c.l.b16 %v342
      %v383 = vunpack.c.l.b16 %v343
      %v384 = vpack.c.b16 %v381, %v380
      %v385 = vpack.c.b16 %v383, %v382
      %v389 = vsel %vm256, %v375, 0
      %391 = vmatpush.bf16.msra.mxu0 0
      %392 = vmatpush.bf16.msra.mxu0 0
      %393 = vmatpush.bf16.msra.mxu0 0
      %394 = vmatpush.bf16.msra.mxu0 0
      %395 = vmatpush.bf16.msra.mxu0 0
      %396 = vmatpush.bf16.msra.mxu0 0
      %397 = vmatpush.bf16.msra.mxu0 %v385
      %398 = vmatpush.bf16.msra.mxu0 %v384
      %399 = vmatmul.bf16.gmra.mxu0 %v389
      %v400 = vpop.f32.mrf.mxu0
      %v401 = vadd.f32 %v371, %v400
      %v402 = vpop.f32.mrf.mxu0
      %403 = vdwg.mxu0
      %v404 = vadd.f32 %v401, %v309
      %v405 = vmax.f32 %v404, 0.0
      %v406 = vpack.c.bf16 %v405, %v405
      %v408 = vsel %vm323, %v406, 0
      %410 = vmatpush.bf16.msra.mxu0 0
      %411 = vmatpush.bf16.msra.mxu0 0
      %412 = vmatpush.bf16.msra.mxu0 0
      %413 = vmatpush.bf16.msra.mxu0 0
      %414 = vmatpush.bf16.msra.mxu0 0
      %415 = vmatpush.bf16.msra.mxu0 0
      %416 = vmatpush.bf16.msra.mxu0 0
      %417 = vmatpush.bf16.msra.mxu0 %v321
      %418 = vmatmul.bf16.gmra.mxu0 %v408
      %v419 = vpop.f32.mrf.mxu0
      %v420 = vadd.f32 %v315, %v419
      %v421 = vpop.f32.mrf.mxu0
      %422 = vdwg.mxu0
      %424 = vrot.lane.b32.xlu0 %v420, 4
      %v425 = vpop.permute.xlu0 %424
      %vm427 = vcmask 31744
      %v428 = vsel %vm427, %v337, %v425
      %vm429 = vcmask 64512
      %430 = vst.msk [vmem:[%s219] sm:$0xff] %vm429, %v428
      %p431 = scmp.lt.s32.totalorder %s16, 1
      %s432 = scalar_select %p431, %s16, 1
      %s433 = smul.addr %s432, 8
      %s434 = scalar_lea.vmem %s5, %s433
      // Predicated region
      $region41: #{generator_forward.9} parent=39 // pred_check
        %p435 = pneg %p144
      $region42: #{generator_forward.9} parent=39 // pred_check_branch
        %437 = sbr.rel (%p435) target = $region44
      $region43: #{generator_forward.9} parent=39 // pred_region
        _
      $region44: #{generator_forward.9} parent=39 // pred_fallthru
        _
    $region40: #{generator_forward.9} parent=5 // pred_fallthru
      _
    %p438 = scmp.le.s32.totalorder 2, %s11
    // Predicated region
    $region45: #{generator_forward.9} parent=5 // pred_check
      %p439 = pneg %p438
    $region46: #{generator_forward.9} parent=5 // pred_check_branch
      %441 = sbr.rel (%p439) target = $region48
    $region47: #{generator_forward.9} parent=5 // pred_region
      %s442 = ssub.s32 %s11, 2
      // Predicated region
      $region49: #{generator_forward.9} parent=47 // pred_check
        %p443 = pneg %p150
      $region50: #{generator_forward.9} parent=47 // pred_check_branch
        %445 = sbr.rel (%p443) target = $region52
      $region51: #{generator_forward.9} parent=47 // pred_region
        %p446 = scmp.lt.s32.totalorder %s17, 1
        %s447 = scalar_select %p446, %s17, 1
        %s448 = smul.addr %s447, 8
        %s449 = scalar_lea.vmem %s5, %s448
      $region52: #{generator_forward.9} parent=47 // pred_fallthru
        _
    $region48: #{generator_forward.9} parent=5 // pred_fallthru
      _
  $region6: #{generator_forward.9} parent=0 // loop_footer
    %s15 = sadd.s32 1, %s11
  $region7: #{generator_forward.9} parent=0 // loop_footer_branch
    %10 = sbr.rel target = $region3
  $region8: #{generator_forward.9} parent=0 // loop_exit
    _

// kernel: generator_forward.8
$region0: #{generator_forward.8}
  #allocation0 [shape = 'u32[]', space=smem, size = 0x4, offset = 0x4, fixed_abs, tag = 'smem constant byte address 0x4 - core index']
  #allocation1 [shape = 'u32[72,128]{1,0:T(1,128)}', space=vmem, size = 0x9000, scoped, tag = 'internal scratch']
  #allocation2 [shape = 'f32[8,32]{1,0:T(8,128)}', space=vmem, size = 0x1000, scoped, tag = 'scratch operand']
  #allocation3 [shape = 'f32[8,32]{1,0:T(8,128)}', space=vmem, size = 0x1000, scoped, tag = 'scratch operand']
  #allocation4 [shape = 'f32[8,32]{1,0:T(8,128)}', space=vmem, size = 0x1000, scoped, tag = 'scratch operand']
  %s0 = inlined_call_operand.vmem [shape: f32[2,8,32], index: 0, kind: input, shape index: {}]
  %s1 = inlined_call_operand.vmem [shape: bf16[32,32], index: 1, kind: input, shape index: {}]
  %s2 = inlined_call_operand.vmem [shape: bf16[32,32], index: 2, kind: input, shape index: {}]
  %s3 = inlined_call_operand.vmem [shape: bf16[32,32], index: 3, kind: input, shape index: {}]
  %s4 = inlined_call_operand.vmem [shape: bf16[32,32], index: 4, kind: input, shape index: {}]
  %s5 = inlined_call_operand.vmem [shape: bf16[32,32], index: 5, kind: input, shape index: {}]
  %s6 = inlined_call_operand.vmem [shape: bf16[32,32], index: 6, kind: input, shape index: {}]
  %s7 = inlined_call_operand.vmem [shape: f32[1,32], index: 7, kind: input, shape index: {}]
  %s8 = inlined_call_operand.vmem [shape: f32[1,32], index: 8, kind: input, shape index: {}]
  %s9 = inlined_call_operand.vmem [shape: f32[1,32], index: 9, kind: input, shape index: {}]
  %s10 = inlined_call_operand.vmem [shape: f32[1,32], index: 10, kind: input, shape index: {}]
  %s11 = inlined_call_operand.vmem [shape: f32[2,8,32], index: 11, kind: output, shape index: {}]
  %s12 = sld [smem:[#allocation0]]
  $region77: #{generator_forward.8} parent=0
    _
  %s14 = ssub.s32 1, %s12
  %s15 = scalar_select 0, %s14, %s12
  loop: start=0, step=1, limit=4
  $region2: #{generator_forward.8} parent=0 // loop_pre_header
    _
  $region3: #{generator_forward.8} parent=0 // loop_header
    %s17 = sphi 0, %s21
    %p18 = scmp.ge.s32.totalorder %s17, 4
    %s27 = sphi 0, %s29
    %s30 = sphi 0, %s27
    %s31 = sphi 0, %s30
    %s47 = sphi 0, %s31
    %s51 = sphi 0, %s51
    %s53 = sphi 0, %s51
    %s54 = sphi 0, %s53
    %s68 = sphi 0, %s54
    %s72 = sphi 0, %s72
    %s74 = sphi 0, %s72
    %s75 = sphi 0, %s74
    %s89 = sphi 0, %s75
    %s93 = sphi 0, %s93
    %s95 = sphi 0, %s93
    %s96 = sphi 0, %s95
    %s110 = sphi 0, %s96
    %s114 = sphi 0, %s114
    %s116 = sphi 0, %s114
    %s117 = sphi 0, %s116
    %s131 = sphi 0, %s117
    %s135 = sphi 0, %s135
    %s137 = sphi 0, %s135
    %s138 = sphi 0, %s137
    %s152 = sphi 0, %s138
    %s156 = sphi 0, %s156
    %s158 = sphi 0, %s156
    %s159 = sphi 0, %s158
    %s173 = sphi 0, %s159
    %s177 = sphi 0, %s177
    %s179 = sphi 0, %s177
    %s180 = sphi 0, %s179
    %s194 = sphi 0, %s180
    %s198 = sphi 0, %s198
    %s200 = sphi 0, %s198
    %s201 = sphi 0, %s200
    %s215 = sphi 0, %s201
    %s219 = sphi 0, %s219
    %s221 = sphi 0, %s219
    %s222 = sphi 0, %s221
    %s236 = sphi 0, %s222
    %s240 = sphi 0, %s240
    %s242 = sphi 0, %s240
    %s243 = sphi 0, %s242
    %s257 = sphi 0, %s243
    %s263 = sphi 0, %s265
    %s266 = sphi 0, %s263
    %s267 = sphi 0, %s266
    %s283 = sphi 0, %s267
  $region4: #{generator_forward.8} parent=0 // loop_header_branch
    %20 = sbr.rel (%p18) target = $region8
  $region5: #{generator_forward.8} parent=0 // loop_body
    %s22 = ssub.s32 %s17, 1
    %s23 = ssub.s32 %s17, 2
    %s24 = sadd.s32 %s17, 1
    %s25 = ssub.s32 %s17, %s24
    %p26 = scmp.eq.s32.totalorder %s25, 0
    %s28 = sadd.s32 %s27, 1
    %s29 = scalar_select %p26, %s27, %s28
    %p32 = pneg %p26
    %p33 = scmp.eq.s32.totalorder %s17, 1
    %p34 = por %p32, %p33
    %p35 = scmp.ne.s32.totalorder %s27, %s30
    %p36 = scmp.eq.s32.totalorder %s17, 0
    %p37 = por %p35, %p36
    %p38 = scmp.ne.s32.totalorder %s27, %s30
    %p39 = scmp.eq.s32.totalorder %s22, 1
    %p40 = por %p38, %p39
    %p41 = scmp.ne.s32.totalorder %s30, %s31
    %p42 = scmp.eq.s32.totalorder %s22, 0
    %p43 = por %p41, %p42
    %p44 = scmp.ne.s32.totalorder %s30, %s31
    %p45 = scmp.eq.s32.totalorder %s23, 1
    %p46 = por %p44, %p45
    %p48 = scmp.ne.s32.totalorder %s31, %s47
    %p49 = scmp.eq.s32.totalorder %s23, 0
    %p50 = por %p48, %p49
    %s52 = sadd.s32 %s51, 1
    %p55 = scmp.eq.s32.totalorder %s17, 1
    %p56 = scmp.ne.s32.totalorder %s51, %s53
    %p57 = scmp.eq.s32.totalorder %s17, 0
    %p58 = por %p56, %p57
    %p59 = scmp.ne.s32.totalorder %s51, %s53
    %p60 = scmp.eq.s32.totalorder %s22, 1
    %p61 = por %p59, %p60
    %p62 = scmp.ne.s32.totalorder %s53, %s54
    %p63 = scmp.eq.s32.totalorder %s22, 0
    %p64 = por %p62, %p63
    %p65 = scmp.ne.s32.totalorder %s53, %s54
    %p66 = scmp.eq.s32.totalorder %s23, 1
    %p67 = por %p65, %p66
    %p69 = scmp.ne.s32.totalorder %s54, %s68
    %p70 = scmp.eq.s32.totalorder %s23, 0
    %p71 = por %p69, %p70
    %s73 = sadd.s32 %s72, 1
    %p76 = scmp.eq.s32.totalorder %s17, 1
    %p77 = scmp.ne.s32.totalorder %s72, %s74
    %p78 = scmp.eq.s32.totalorder %s17, 0
    %p79 = por %p77, %p78
    %p80 = scmp.ne.s32.totalorder %s72, %s74
    %p81 = scmp.eq.s32.totalorder %s22, 1
    %p82 = por %p80, %p81
    %p83 = scmp.ne.s32.totalorder %s74, %s75
    %p84 = scmp.eq.s32.totalorder %s22, 0
    %p85 = por %p83, %p84
    %p86 = scmp.ne.s32.totalorder %s74, %s75
    %p87 = scmp.eq.s32.totalorder %s23, 1
    %p88 = por %p86, %p87
    %p90 = scmp.ne.s32.totalorder %s75, %s89
    %p91 = scmp.eq.s32.totalorder %s23, 0
    %p92 = por %p90, %p91
    %s94 = sadd.s32 %s93, 1
    %p97 = scmp.eq.s32.totalorder %s17, 1
    %p98 = scmp.ne.s32.totalorder %s93, %s95
    %p99 = scmp.eq.s32.totalorder %s17, 0
    %p100 = por %p98, %p99
    %p101 = scmp.ne.s32.totalorder %s93, %s95
    %p102 = scmp.eq.s32.totalorder %s22, 1
    %p103 = por %p101, %p102
    %p104 = scmp.ne.s32.totalorder %s95, %s96
    %p105 = scmp.eq.s32.totalorder %s22, 0
    %p106 = por %p104, %p105
    %p107 = scmp.ne.s32.totalorder %s95, %s96
    %p108 = scmp.eq.s32.totalorder %s23, 1
    %p109 = por %p107, %p108
    %p111 = scmp.ne.s32.totalorder %s96, %s110
    %p112 = scmp.eq.s32.totalorder %s23, 0
    %p113 = por %p111, %p112
    %s115 = sadd.s32 %s114, 1
    %p118 = scmp.eq.s32.totalorder %s17, 1
    %p119 = scmp.ne.s32.totalorder %s114, %s116
    %p120 = scmp.eq.s32.totalorder %s17, 0
    %p121 = por %p119, %p120
    %p122 = scmp.ne.s32.totalorder %s114, %s116
    %p123 = scmp.eq.s32.totalorder %s22, 1
    %p124 = por %p122, %p123
    %p125 = scmp.ne.s32.totalorder %s116, %s117
    %p126 = scmp.eq.s32.totalorder %s22, 0
    %p127 = por %p125, %p126
    %p128 = scmp.ne.s32.totalorder %s116, %s117
    %p129 = scmp.eq.s32.totalorder %s23, 1
    %p130 = por %p128, %p129
    %p132 = scmp.ne.s32.totalorder %s117, %s131
    %p133 = scmp.eq.s32.totalorder %s23, 0
    %p134 = por %p132, %p133
    %s136 = sadd.s32 %s135, 1
    %p139 = scmp.eq.s32.totalorder %s17, 1
    %p140 = scmp.ne.s32.totalorder %s135, %s137
    %p141 = scmp.eq.s32.totalorder %s17, 0
    %p142 = por %p140, %p141
    %p143 = scmp.ne.s32.totalorder %s135, %s137
    %p144 = scmp.eq.s32.totalorder %s22, 1
    %p145 = por %p143, %p144
    %p146 = scmp.ne.s32.totalorder %s137, %s138
    %p147 = scmp.eq.s32.totalorder %s22, 0
    %p148 = por %p146, %p147
    %p149 = scmp.ne.s32.totalorder %s137, %s138
    %p150 = scmp.eq.s32.totalorder %s23, 1
    %p151 = por %p149, %p150
    %p153 = scmp.ne.s32.totalorder %s138, %s152
    %p154 = scmp.eq.s32.totalorder %s23, 0
    %p155 = por %p153, %p154
    %s157 = sadd.s32 %s156, 1
    %p160 = scmp.eq.s32.totalorder %s17, 1
    %p161 = scmp.ne.s32.totalorder %s156, %s158
    %p162 = scmp.eq.s32.totalorder %s17, 0
    %p163 = por %p161, %p162
    %p164 = scmp.ne.s32.totalorder %s156, %s158
    %p165 = scmp.eq.s32.totalorder %s22, 1
    %p166 = por %p164, %p165
    %p167 = scmp.ne.s32.totalorder %s158, %s159
    %p168 = scmp.eq.s32.totalorder %s22, 0
    %p169 = por %p167, %p168
    %p170 = scmp.ne.s32.totalorder %s158, %s159
    %p171 = scmp.eq.s32.totalorder %s23, 1
    %p172 = por %p170, %p171
    %p174 = scmp.ne.s32.totalorder %s159, %s173
    %p175 = scmp.eq.s32.totalorder %s23, 0
    %p176 = por %p174, %p175
    %s178 = sadd.s32 %s177, 1
    %p181 = scmp.eq.s32.totalorder %s17, 1
    %p182 = scmp.ne.s32.totalorder %s177, %s179
    %p183 = scmp.eq.s32.totalorder %s17, 0
    %p184 = por %p182, %p183
    %p185 = scmp.ne.s32.totalorder %s177, %s179
    %p186 = scmp.eq.s32.totalorder %s22, 1
    %p187 = por %p185, %p186
    %p188 = scmp.ne.s32.totalorder %s179, %s180
    %p189 = scmp.eq.s32.totalorder %s22, 0
    %p190 = por %p188, %p189
    %p191 = scmp.ne.s32.totalorder %s179, %s180
    %p192 = scmp.eq.s32.totalorder %s23, 1
    %p193 = por %p191, %p192
    %p195 = scmp.ne.s32.totalorder %s180, %s194
    %p196 = scmp.eq.s32.totalorder %s23, 0
    %p197 = por %p195, %p196
    %s199 = sadd.s32 %s198, 1
    %p202 = scmp.eq.s32.totalorder %s17, 1
    %p203 = scmp.ne.s32.totalorder %s198, %s200
    %p204 = scmp.eq.s32.totalorder %s17, 0
    %p205 = por %p203, %p204
    %p206 = scmp.ne.s32.totalorder %s198, %s200
    %p207 = scmp.eq.s32.totalorder %s22, 1
    %p208 = por %p206, %p207
    %p209 = scmp.ne.s32.totalorder %s200, %s201
    %p210 = scmp.eq.s32.totalorder %s22, 0
    %p211 = por %p209, %p210
    %p212 = scmp.ne.s32.totalorder %s200, %s201
    %p213 = scmp.eq.s32.totalorder %s23, 1
    %p214 = por %p212, %p213
    %p216 = scmp.ne.s32.totalorder %s201, %s215
    %p217 = scmp.eq.s32.totalorder %s23, 0
    %p218 = por %p216, %p217
    %s220 = sadd.s32 %s219, 1
    %p223 = scmp.eq.s32.totalorder %s17, 1
    %p224 = scmp.ne.s32.totalorder %s219, %s221
    %p225 = scmp.eq.s32.totalorder %s17, 0
    %p226 = por %p224, %p225
    %p227 = scmp.ne.s32.totalorder %s219, %s221
    %p228 = scmp.eq.s32.totalorder %s22, 1
    %p229 = por %p227, %p228
    %p230 = scmp.ne.s32.totalorder %s221, %s222
    %p231 = scmp.eq.s32.totalorder %s22, 0
    %p232 = por %p230, %p231
    %p233 = scmp.ne.s32.totalorder %s221, %s222
    %p234 = scmp.eq.s32.totalorder %s23, 1
    %p235 = por %p233, %p234
    %p237 = scmp.ne.s32.totalorder %s222, %s236
    %p238 = scmp.eq.s32.totalorder %s23, 0
    %p239 = por %p237, %p238
    %s241 = sadd.s32 %s240, 1
    %p244 = scmp.eq.s32.totalorder %s17, 1
    %p245 = scmp.ne.s32.totalorder %s240, %s242
    %p246 = scmp.eq.s32.totalorder %s17, 0
    %p247 = por %p245, %p246
    %p248 = scmp.ne.s32.totalorder %s240, %s242
    %p249 = scmp.eq.s32.totalorder %s22, 1
    %p250 = por %p248, %p249
    %p251 = scmp.ne.s32.totalorder %s242, %s243
    %p252 = scmp.eq.s32.totalorder %s22, 0
    %p253 = por %p251, %p252
    %p254 = scmp.ne.s32.totalorder %s242, %s243
    %p255 = scmp.eq.s32.totalorder %s23, 1
    %p256 = por %p254, %p255
    %p258 = scmp.ne.s32.totalorder %s243, %s257
    %p259 = scmp.eq.s32.totalorder %s23, 0
    %p260 = por %p258, %p259
    %s261 = ssub.s32 %s17, %s24
    %p262 = scmp.eq.s32.totalorder %s261, 0
    %s264 = sadd.s32 %s263, 1
    %s265 = scalar_select %p262, %s263, %s264
    %p268 = pneg %p262
    %p269 = scmp.eq.s32.totalorder %s17, 1
    %p270 = por %p268, %p269
    %p271 = scmp.ne.s32.totalorder %s263, %s266
    %p272 = scmp.eq.s32.totalorder %s17, 0
    %p273 = por %p271, %p272
    %p274 = scmp.ne.s32.totalorder %s263, %s266
    %p275 = scmp.eq.s32.totalorder %s22, 1
    %p276 = por %p274, %p275
    %p277 = scmp.ne.s32.totalorder %s266, %s267
    %p278 = scmp.eq.s32.totalorder %s22, 0
    %p279 = por %p277, %p278
    %p280 = scmp.ne.s32.totalorder %s266, %s267
    %p281 = scmp.eq.s32.totalorder %s23, 1
    %p282 = por %p280, %p281
    %p284 = scmp.ne.s32.totalorder %s267, %s283
    %p285 = scmp.eq.s32.totalorder %s23, 0
    %p286 = por %p284, %p285
    %p287 = scmp.le.s32.totalorder 1, %s17
    %p288 = scmp.lt.s32.totalorder %s17, 3
    %p289 = pnand %p287, %p288
    %p290 = pneg %p289
    // Predicated region
    $region9: #{generator_forward.8} parent=5 // pred_check
      _
    $region10: #{generator_forward.8} parent=5 // pred_check_branch
      %292 = sbr.rel (%p289) target = $region12
    $region11: #{generator_forward.8} parent=5 // pred_region
      %s293 = ssub.s32 %s17, 1
      // Predicated region
      $region13: #{generator_forward.8} parent=11 // pred_check
        %p294 = pneg %p64
      $region14: #{generator_forward.8} parent=11 // pred_check_branch
        %296 = sbr.rel (%p294) target = $region16
      $region15: #{generator_forward.8} parent=11 // pred_region
        _
      $region16: #{generator_forward.8} parent=11 // pred_fallthru
        _
      // Predicated region
      $region17: #{generator_forward.8} parent=11 // pred_check
        %p297 = pneg %p85
      $region18: #{generator_forward.8} parent=11 // pred_check_branch
        %299 = sbr.rel (%p297) target = $region20
      $region19: #{generator_forward.8} parent=11 // pred_region
        _
      $region20: #{generator_forward.8} parent=11 // pred_fallthru
        _
      // Predicated region
      $region21: #{generator_forward.8} parent=11 // pred_check
        %p300 = pneg %p106
      $region22: #{generator_forward.8} parent=11 // pred_check_branch
        %302 = sbr.rel (%p300) target = $region24
      $region23: #{generator_forward.8} parent=11 // pred_region
        _
      $region24: #{generator_forward.8} parent=11 // pred_fallthru
        _
      // Predicated region
      $region25: #{generator_forward.8} parent=11 // pred_check
        %p303 = pneg %p127
      $region26: #{generator_forward.8} parent=11 // pred_check_branch
        %305 = sbr.rel (%p303) target = $region28
      $region27: #{generator_forward.8} parent=11 // pred_region
        _
      $region28: #{generator_forward.8} parent=11 // pred_fallthru
        _
      // Predicated region
      $region29: #{generator_forward.8} parent=11 // pred_check
        %p306 = pneg %p148
      $region30: #{generator_forward.8} parent=11 // pred_check_branch
        %308 = sbr.rel (%p306) target = $region32
      $region31: #{generator_forward.8} parent=11 // pred_region
        _
      $region32: #{generator_forward.8} parent=11 // pred_fallthru
        _
      // Predicated region
      $region33: #{generator_forward.8} parent=11 // pred_check
        %p309 = pneg %p169
      $region34: #{generator_forward.8} parent=11 // pred_check_branch
        %311 = sbr.rel (%p309) target = $region36
      $region35: #{generator_forward.8} parent=11 // pred_region
        _
      $region36: #{generator_forward.8} parent=11 // pred_fallthru
        _
      // Predicated region
      $region37: #{generator_forward.8} parent=11 // pred_check
        %p312 = pneg %p190
      $region38: #{generator_forward.8} parent=11 // pred_check_branch
        %314 = sbr.rel (%p312) target = $region40
      $region39: #{generator_forward.8} parent=11 // pred_region
        _
      $region40: #{generator_forward.8} parent=11 // pred_fallthru
        _
      // Predicated region
      $region41: #{generator_forward.8} parent=11 // pred_check
        %p315 = pneg %p211
      $region42: #{generator_forward.8} parent=11 // pred_check_branch
        %317 = sbr.rel (%p315) target = $region44
      $region43: #{generator_forward.8} parent=11 // pred_region
        _
      $region44: #{generator_forward.8} parent=11 // pred_fallthru
        _
      // Predicated region
      $region45: #{generator_forward.8} parent=11 // pred_check
        %p318 = pneg %p232
      $region46: #{generator_forward.8} parent=11 // pred_check_branch
        %320 = sbr.rel (%p318) target = $region48
      $region47: #{generator_forward.8} parent=11 // pred_region
        _
      $region48: #{generator_forward.8} parent=11 // pred_fallthru
        _
      // Predicated region
      $region49: #{generator_forward.8} parent=11 // pred_check
        %p321 = pneg %p253
      $region50: #{generator_forward.8} parent=11 // pred_check_branch
        %323 = sbr.rel (%p321) target = $region52
      $region51: #{generator_forward.8} parent=11 // pred_region
        _
      $region52: #{generator_forward.8} parent=11 // pred_fallthru
        _
    $region12: #{generator_forward.8} parent=5 // pred_fallthru
      _
    %p324 = scmp.lt.s32.totalorder %s17, 2
    // Predicated region
    $region53: #{generator_forward.8} parent=5 // pred_check
      %p325 = pneg %p324
    $region54: #{generator_forward.8} parent=5 // pred_check_branch
      %327 = sbr.rel (%p325) target = $region56
    $region55: #{generator_forward.8} parent=5 // pred_region
      // Predicated region
      $region57: #{generator_forward.8} parent=55 // pred_check
        %p328 = pneg %p37
      $region58: #{generator_forward.8} parent=55 // pred_check_branch
        %330 = sbr.rel (%p328) target = $region60
      $region59: #{generator_forward.8} parent=55 // pred_region
        %p331 = scmp.lt.s32.totalorder %s17, 1
        %s332 = scalar_select %p331, %s17, 1
        %s333 = smul.addr %s332, 8
        %s334 = scalar_lea.vmem %s0, %s333
      $region60: #{generator_forward.8} parent=55 // pred_fallthru
        _
    $region56: #{generator_forward.8} parent=5 // pred_fallthru
      _
    %p335 = scmp.le.s32.totalorder 1, %s17
    %p336 = scmp.lt.s32.totalorder %s17, 3
    %p337 = pnand %p335, %p336
    %p338 = pneg %p337
    // Predicated region
    $region61: #{generator_forward.8} parent=5 // pred_check
      _
    $region62: #{generator_forward.8} parent=5 // pred_check_branch
      %340 = sbr.rel (%p337) target = $region64
    $region63: #{generator_forward.8} parent=5 // pred_region
      %s341 = ssub.s32 %s17, 1
      %p342 = scmp.lt.s32.totalorder %s22, 1
      %s343 = scalar_select %p342, %s22, 1
      %s344 = smul.addr %s343, 8
      %s345 = scalar_lea.vmem %s0, %s344
      %p346 = pneg %p43
      %p347 = pneg %p40
      %p348 = pneg %p64
      %p349 = pneg %p61
      %p350 = pneg %p85
      %p351 = pneg %p82
      %p352 = pneg %p106
      %p353 = pneg %p103
      %p354 = pneg %p127
      %p355 = pneg %p124
      %p356 = pneg %p148
      %p357 = pneg %p145
      %p358 = pneg %p169
      %p359 = pneg %p166
      %p360 = pneg %p190
      %p361 = pneg %p187
      %p362 = pneg %p211
      %p363 = pneg %p208
      %p364 = pneg %p232
      %p365 = pneg %p229
      %p366 = pneg %p253
      %p367 = pneg %p250
      %p368 = pneg %p279
      %p369 = pneg %p276
      %p370 = scmp.lt.s32.totalorder %s22, 1
      %s371 = scalar_select %p370, %s22, 1
      %s372 = smul.addr %s371, 8
      %s373 = scalar_lea.vmem %s11, %s372
      %p374 = scmp.lt.s32.totalorder %s22, 1
      %s375 = scalar_select %p374, %s22, 1
      %s376 = smul.addr %s375, 8
      %s377 = scalar_lea.vmem %s0, %s376
      %p378 = scmp.lt.s32.totalorder %s22, 1
      %s379 = scalar_select %p378, %s22, 1
      %s380 = smul.addr %s379, 8
      %s381 = scalar_lea.vmem %s11, %s380
      %v383 = vld [vmem:[%s377] sm:$0xff]
      %v384 = vpack.c.bf16 %v383, %v383
      %v385 = vld [vmem:[%s1] sm:$0xf]
      %v386 = vld [vmem:[%s1 + $0x4] sm:$0xf]
      %v387 = vld [vmem:[%s1 + $0x8] sm:$0xf]
      %v388 = vld [vmem:[%s1 + $0xc] sm:$0xf]
      %v389 = vld [vmem:[%s7] sm:$0x1]
      %v391 = vperm.slane %v389, 0
      %v397 = vunpack.c.l.b16 %v385
      %v398 = vunpack.c.l.b16 %v386
      %v399 = vunpack.c.l.b16 %v387
      %v400 = vunpack.c.l.b16 %v388
      %v401 = vpack.c.b16 %v398, %v397
      %v402 = vpack.c.b16 %v400, %v399
      %vm405 = vcmask 261120
      %v407 = vsel %vm405, %v384, 0
      %409 = vmatpush.bf16.msra.mxu0 0
      %410 = vmatpush.bf16.msra.mxu0 0
      %411 = vmatpush.bf16.msra.mxu0 0
      %412 = vmatpush.bf16.msra.mxu0 0
      %413 = vmatpush.bf16.msra.mxu0 0
      %414 = vmatpush.bf16.msra.mxu0 0
      %415 = vmatpush.bf16.msra.mxu0 %v402
      %416 = vmatpush.bf16.msra.mxu0 %v401
      %417 = vmatmul.bf16.gmra.mxu0 %v407
      %v418 = vpop.f32.mrf.mxu0
      %v419 = vadd.f32 %v391, %v418
      %v420 = vpop.f32.mrf.mxu0
      %421 = vdwg.mxu0
      %422 = vst.msk [vmem:[#allocation2] sm:$0xff] %vm405, %v419
      %v423 = vld [vmem:[%s2] sm:$0xf]
      %v424 = vld [vmem:[%s2 + $0x4] sm:$0xf]
      %v425 = vld [vmem:[%s2 + $0x8] sm:$0xf]
      %v426 = vld [vmem:[%s2 + $0xc] sm:$0xf]
      %v427 = vld [vmem:[%s8] sm:$0x1]
      %v429 = vperm.slane %v427, 0
      %v435 = vunpack.c.l.b16 %v423
      %v436 = vunpack.c.l.b16 %v424
      %v437 = vunpack.c.l.b16 %v425
      %v438 = vunpack.c.l.b16 %v426
      %v439 = vpack.c.b16 %v436, %v435
      %v440 = vpack.c.b16 %v438, %v437
      %443 = vmatpush.bf16.msra.mxu0 0
      %444 = vmatpush.bf16.msra.mxu0 0
      %445 = vmatpush.bf16.msra.mxu0 0
      %446 = vmatpush.bf16.msra.mxu0 0
      %447 = vmatpush.bf16.msra.mxu0 0
      %448 = vmatpush.bf16.msra.mxu0 0
      %449 = vmatpush.bf16.msra.mxu0 %v440
      %450 = vmatpush.bf16.msra.mxu0 %v439
      %451 = vmatmul.bf16.gmra.mxu0 %v407
      %v452 = vpop.f32.mrf.mxu0
      %v453 = vadd.f32 %v429, %v452
      %v454 = vpop.f32.mrf.mxu0
      %455 = vdwg.mxu0
      %456 = vst.msk [vmem:[#allocation3] sm:$0xff] %vm405, %v453
      %v457 = vld [vmem:[%s3] sm:$0xf]
      %v458 = vld [vmem:[%s3 + $0x4] sm:$0xf]
      %v459 = vld [vmem:[%s3 + $0x8] sm:$0xf]
      %v460 = vld [vmem:[%s3 + $0xc] sm:$0xf]
      %v461 = vld [vmem:[%s9] sm:$0x1]
      %v463 = vperm.slane %v461, 0
      %v469 = vunpack.c.l.b16 %v457
      %v470 = vunpack.c.l.b16 %v458
      %v471 = vunpack.c.l.b16 %v459
      %v472 = vunpack.c.l.b16 %v460
      %v473 = vpack.c.b16 %v470, %v469
      %v474 = vpack.c.b16 %v472, %v471
      %477 = vmatpush.bf16.msra.mxu0 0
      %478 = vmatpush.bf16.msra.mxu0 0
      %479 = vmatpush.bf16.msra.mxu0 0
      %480 = vmatpush.bf16.msra.mxu0 0
      %481 = vmatpush.bf16.msra.mxu0 0
      %482 = vmatpush.bf16.msra.mxu0 0
      %483 = vmatpush.bf16.msra.mxu0 %v474
      %484 = vmatpush.bf16.msra.mxu0 %v473
      %485 = vmatmul.bf16.gmra.mxu0 %v407
      %v486 = vpop.f32.mrf.mxu0
      %v487 = vadd.f32 %v463, %v486
      %v488 = vpop.f32.mrf.mxu0
      %489 = vdwg.mxu0
      %490 = vst.msk [vmem:[#allocation4] sm:$0xff] %vm405, %v487
      %v491 = vld [vmem:[%s4] sm:$0xf]
      %v492 = vld [vmem:[%s4 + $0x4] sm:$0xf]
      %v493 = vld [vmem:[%s4 + $0x8] sm:$0xf]
      %v494 = vld [vmem:[%s4 + $0xc] sm:$0xf]
      %v495 = vld [vmem:[%s5] sm:$0xf]
      %v496 = vld [vmem:[%s5 + $0x4] sm:$0xf]
      %v497 = vld [vmem:[%s5 + $0x8] sm:$0xf]
      %v498 = vld [vmem:[%s5 + $0xc] sm:$0xf]
      %v499 = vld [vmem:[%s6] sm:$0xf]
      %v500 = vld [vmem:[%s6 + $0x4] sm:$0xf]
      %v501 = vld [vmem:[%s6 + $0x8] sm:$0xf]
      %v502 = vld [vmem:[%s6 + $0xc] sm:$0xf]
      %v503 = vld [vmem:[%s10] sm:$0x1]
      %v508 = vunpack.c.l.b16 %v491
      %v509 = vunpack.c.l.b16 %v492
      %v510 = vunpack.c.l.b16 %v493
      %v511 = vunpack.c.l.b16 %v494
      %v512 = vpack.c.b16 %v509, %v508
      %v513 = vpack.c.b16 %v511, %v510
      %v517 = vsel %vm405, 0, 0
      %519 = vmatpush.bf16.msra.mxu0 0
      %520 = vmatpush.bf16.msra.mxu0 0
      %521 = vmatpush.bf16.msra.mxu0 0
      %522 = vmatpush.bf16.msra.mxu0 0
      %523 = vmatpush.bf16.msra.mxu0 0
      %524 = vmatpush.bf16.msra.mxu0 0
      %525 = vmatpush.bf16.msra.mxu0 %v513
      %526 = vmatpush.bf16.msra.mxu0 %v512
      %527 = vmatmul.bf16.gmra.mxu0 %v517
      %v528 = vpop.f32.mrf.mxu0
      %v529 = vadd.f32 0.0, %v528
      %v530 = vpop.f32.mrf.mxu0
      %531 = vdwg.mxu0
      %v536 = vunpack.c.l.b16 %v495
      %v537 = vunpack.c.l.b16 %v496
      %v538 = vunpack.c.l.b16 %v497
      %v539 = vunpack.c.l.b16 %v498
      %v540 = vpack.c.b16 %v537, %v536
      %v541 = vpack.c.b16 %v539, %v538
      %544 = vmatpush.bf16.msra.mxu0 0
      %545 = vmatpush.bf16.msra.mxu0 0
      %546 = vmatpush.bf16.msra.mxu0 0
      %547 = vmatpush.bf16.msra.mxu0 0
      %548 = vmatpush.bf16.msra.mxu0 0
      %549 = vmatpush.bf16.msra.mxu0 0
      %550 = vmatpush.bf16.msra.mxu0 %v541
      %551 = vmatpush.bf16.msra.mxu0 %v540
      %552 = vmatmul.bf16.gmra.mxu0 %v517
      %v553 = vpop.f32.mrf.mxu0
      %v554 = vadd.f32 0.0, %v553
      %v555 = vpop.f32.mrf.mxu0
      %556 = vdwg.mxu0
      %v557 = vld [vmem:[#allocation2] sm:$0x1]
      %v558 = vadd.f32 %v557, %v529
      %v559 = vxor.u32 %v558, 2147483648
      %v560 = vmul.f32 %v559, 1.442695
      %v561 = vpow.pop %v560
      %v562 = vadd.f32 %v561, 1.0
      %v563 = vrcp.pop %v562
      %v564 = vmul.f32 %v562, %v563
      %v565 = vsub.f32 1.0, %v564
      %v566 = vmul.f32 %v563, %v565
      %v567 = vadd.f32 %v563, %v566
      %vm568 = vweird.f32 %v562
      %vm569 = vweird.f32 %v563
      %vm570 = vmor %vm568, %vm569
      %v571 = vsel %vm570, %v563, %v567
      %v572 = vand.u32 2147483647, %v562
      %vm573 = vcmp.eq.f32.partialorder %v572, 8.507059e+37
      %v574 = vand.u32 %v562, 2147483648
      %v575 = vor.u32 1.1754944e-38, %v574
      %v576 = vsel %vm573, %v575, %v571
      %v577 = vmul.f32 1.0, %v576
      %v578 = vld [vmem:[#allocation3] sm:$0x1]
      %v579 = vadd.f32 %v578, %v554
      %v580 = vxor.u32 %v579, 2147483648
      %v581 = vmul.f32 %v580, 1.442695
      %v582 = vpow.pop %v581
      %v583 = vadd.f32 %v582, 1.0
      %v584 = vrcp.pop %v583
      %v585 = vmul.f32 %v583, %v584
      %v586 = vsub.f32 1.0, %v585
      %v587 = vmul.f32 %v584, %v586
      %v588 = vadd.f32 %v584, %v587
      %vm589 = vweird.f32 %v583
      %vm590 = vweird.f32 %v584
      %vm591 = vmor %vm589, %vm590
      %v592 = vsel %vm591, %v584, %v588
      %v593 = vand.u32 2147483647, %v583
      %vm594 = vcmp.eq.f32.partialorder %v593, 8.507059e+37
      %v595 = vand.u32 %v583, 2147483648
      %v596 = vor.u32 1.1754944e-38, %v595
      %v597 = vsel %vm594, %v596, %v592
      %v598 = vmul.f32 1.0, %v597
      %v599 = vld [vmem:[#allocation4] sm:$0x1]
      %v604 = vunpack.c.l.b16 %v499
      %v605 = vunpack.c.l.b16 %v500
      %v606 = vunpack.c.l.b16 %v501
      %v607 = vunpack.c.l.b16 %v502
      %v608 = vpack.c.b16 %v605, %v604
      %v609 = vpack.c.b16 %v607, %v606
      %612 = vmatpush.bf16.msra.mxu0 0
      %613 = vmatpush.bf16.msra.mxu0 0
      %614 = vmatpush.bf16.msra.mxu0 0
      %615 = vmatpush.bf16.msra.mxu0 0
      %616 = vmatpush.bf16.msra.mxu0 0
      %617 = vmatpush.bf16.msra.mxu0 0
      %618 = vmatpush.bf16.msra.mxu0 %v609
      %619 = vmatpush.bf16.msra.mxu0 %v608
      %620 = vmatmul.bf16.gmra.mxu0 %v517
      %v621 = vpop.f32.mrf.mxu0
      %v622 = vadd.f32 %v503, %v621
      %v623 = vpop.f32.mrf.mxu0
      %624 = vdwg.mxu0
      %v625 = vmul.f32 %v577, %v622
      %v626 = vadd.f32 %v599, %v625
      %v627 = vtanh.pop %v626
      %v628 = vsub.f32 1.0, %v598
      %v629 = vmul.f32 %v628, %v627
      %v630 = vmul.f32 %v598, 0.0
      %v631 = vadd.f32 %v629, %v630
      %v632 = vmax.f32 %v631, 0.0
      %vm633 = vcmask 253952
      %634 = vst.msk [vmem:[%s381] sm:$0x1] %vm633, %v632
      %v635 = vpack.c.bf16 %v631, %v631
      %v637 = vsel %vm405, %v635, 0
      %639 = vmatpush.bf16.msra.mxu0 0
      %640 = vmatpush.bf16.msra.mxu0 0
      %641 = vmatpush.bf16.msra.mxu0 0
      %642 = vmatpush.bf16.msra.mxu0 0
      %643 = vmatpush.bf16.msra.mxu0 0
      %644 = vmatpush.bf16.msra.mxu0 0
      %645 = vmatpush.bf16.msra.mxu0 %v513
      %646 = vmatpush.bf16.msra.mxu0 %v512
      %647 = vmatmul.bf16.gmra.mxu0 %v637
      %v648 = vpop.f32.mrf.mxu0
      %v649 = vadd.f32 0.0, %v648
      %v650 = vpop.f32.mrf.mxu0
      %651 = vdwg.mxu0
      %652 = vmatpush.bf16.msra.mxu0 0
      %653 = vmatpush.bf16.msra.mxu0 0
      %654 = vmatpush.bf16.msra.mxu0 0
      %655 = vmatpush.bf16.msra.mxu0 0
      %656 = vmatpush.bf16.msra.mxu0 0
      %657 = vmatpush.bf16.msra.mxu0 0
      %658 = vmatpush.bf16.msra.mxu0 %v541
      %659 = vmatpush.bf16.msra.mxu0 %v540
      %660 = vmatmul.bf16.gmra.mxu0 %v637
      %v661 = vpop.f32.mrf.mxu0
      %v662 = vadd.f32 0.0, %v661
      %v663 = vpop.f32.mrf.mxu0
      %664 = vdwg.mxu0
      %v665 = vld [vmem:[#allocation2 + $0x1] sm:$0x1]
      %v666 = vadd.f32 %v665, %v649
      %v667 = vxor.u32 %v666, 2147483648
      %v668 = vmul.f32 %v667, 1.442695
      %v669 = vpow.pop %v668
      %v670 = vadd.f32 %v669, 1.0
      %v671 = vrcp.pop %v670
      %v672 = vmul.f32 %v670, %v671
      %v673 = vsub.f32 1.0, %v672
      %v674 = vmul.f32 %v671, %v673
      %v675 = vadd.f32 %v671, %v674
      %vm676 = vweird.f32 %v670
      %vm677 = vweird.f32 %v671
      %vm678 = vmor %vm676, %vm677
      %v679 = vsel %vm678, %v671, %v675
      %v680 = vand.u32 2147483647, %v670
      %vm681 = vcmp.eq.f32.partialorder %v680, 8.507059e+37
      %v682 = vand.u32 %v670, 2147483648
      %v683 = vor.u32 1.1754944e-38, %v682
      %v684 = vsel %vm681, %v683, %v679
      %v685 = vmul.f32 1.0, %v684
      %v686 = vld [vmem:[#allocation3 + $0x1] sm:$0x1]
      %v687 = vadd.f32 %v686, %v662
      %v688 = vxor.u32 %v687, 2147483648
      %v689 = vmul.f32 %v688, 1.442695
      %v690 = vpow.pop %v689
      %v691 = vadd.f32 %v690, 1.0
      %v692 = vrcp.pop %v691
      %v693 = vmul.f32 %v691, %v692
      %v694 = vsub.f32 1.0, %v693
      %v695 = vmul.f32 %v692, %v694
      %v696 = vadd.f32 %v692, %v695
      %vm697 = vweird.f32 %v691
      %vm698 = vweird.f32 %v692
      %vm699 = vmor %vm697, %vm698
      %v700 = vsel %vm699, %v692, %v696
      %v701 = vand.u32 2147483647, %v691
      %vm702 = vcmp.eq.f32.partialorder %v701, 8.507059e+37
      %v703 = vand.u32 %v691, 2147483648
      %v704 = vor.u32 1.1754944e-38, %v703
      %v705 = vsel %vm702, %v704, %v700
      %v706 = vmul.f32 1.0, %v705
      %v707 = vld [vmem:[#allocation4 + $0x1] sm:$0x1]
      %708 = vmatpush.bf16.msra.mxu0 0
      %709 = vmatpush.bf16.msra.mxu0 0
      %710 = vmatpush.bf16.msra.mxu0 0
      %711 = vmatpush.bf16.msra.mxu0 0
      %712 = vmatpush.bf16.msra.mxu0 0
      %713 = vmatpush.bf16.msra.mxu0 0
      %714 = vmatpush.bf16.msra.mxu0 %v609
      %715 = vmatpush.bf16.msra.mxu0 %v608
      %716 = vmatmul.bf16.gmra.mxu0 %v637
      %v717 = vpop.f32.mrf.mxu0
      %v718 = vadd.f32 %v503, %v717
      %v719 = vpop.f32.mrf.mxu0
      %720 = vdwg.mxu0
      %v721 = vmul.f32 %v685, %v718
      %v722 = vadd.f32 %v707, %v721
      %v723 = vtanh.pop %v722
      %v724 = vsub.f32 1.0, %v706
      %v725 = vmul.f32 %v724, %v723
      %v726 = vmul.f32 %v706, %v631
      %v727 = vadd.f32 %v725, %v726
      %v728 = vmax.f32 %v727, 0.0
      %729 = vst.msk [vmem:[%s381 + $0x1] sm:$0x1] %vm633, %v728
      %v730 = vpack.c.bf16 %v727, %v727
      %v732 = vsel %vm405, %v730, 0
      %734 = vmatpush.bf16.msra.mxu0 0
      %735 = vmatpush.bf16.msra.mxu0 0
      %736 = vmatpush.bf16.msra.mxu0 0
      %737 = vmatpush.bf16.msra.mxu0 0
      %738 = vmatpush.bf16.msra.mxu0 0
      %739 = vmatpush.bf16.msra.mxu0 0
      %740 = vmatpush.bf16.msra.mxu0 %v513
      %741 = vmatpush.bf16.msra.mxu0 %v512
      %742 = vmatmul.bf16.gmra.mxu0 %v732
      %v743 = vpop.f32.mrf.mxu0
      %v744 = vadd.f32 0.0, %v743
      %v745 = vpop.f32.mrf.mxu0
      %746 = vdwg.mxu0
      %747 = vmatpush.bf16.msra.mxu0 0
      %748 = vmatpush.bf16.msra.mxu0 0
      %749 = vmatpush.bf16.msra.mxu0 0
      %750 = vmatpush.bf16.msra.mxu0 0
      %751 = vmatpush.bf16.msra.mxu0 0
      %752 = vmatpush.bf16.msra.mxu0 0
      %753 = vmatpush.bf16.msra.mxu0 %v541
      %754 = vmatpush.bf16.msra.mxu0 %v540
      %755 = vmatmul.bf16.gmra.mxu0 %v732
      %v756 = vpop.f32.mrf.mxu0
      %v757 = vadd.f32 0.0, %v756
      %v758 = vpop.f32.mrf.mxu0
      %759 = vdwg.mxu0
      %v760 = vld [vmem:[#allocation2 + $0x2] sm:$0x1]
      %v761 = vadd.f32 %v760, %v744
      %v762 = vxor.u32 %v761, 2147483648
      %v763 = vmul.f32 %v762, 1.442695
      %v764 = vpow.pop %v763
      %v765 = vadd.f32 %v764, 1.0
      %v766 = vrcp.pop %v765
      %v767 = vmul.f32 %v765, %v766
      %v768 = vsub.f32 1.0, %v767
      %v769 = vmul.f32 %v766, %v768
      %v770 = vadd.f32 %v766, %v769
      %vm771 = vweird.f32 %v765
      %vm772 = vweird.f32 %v766
      %vm773 = vmor %vm771, %vm772
      %v774 = vsel %vm773, %v766, %v770
      %v775 = vand.u32 2147483647, %v765
      %vm776 = vcmp.eq.f32.partialorder %v775, 8.507059e+37
      %v777 = vand.u32 %v765, 2147483648
      %v778 = vor.u32 1.1754944e-38, %v777
      %v779 = vsel %vm776, %v778, %v774
      %v780 = vmul.f32 1.0, %v779
      %v781 = vld [vmem:[#allocation3 + $0x2] sm:$0x1]
      %v782 = vadd.f32 %v781, %v757
      %v783 = vxor.u32 %v782, 2147483648
      %v784 = vmul.f32 %v783, 1.442695
      %v785 = vpow.pop %v784
      %v786 = vadd.f32 %v785, 1.0
      %v787 = vrcp.pop %v786
      %v788 = vmul.f32 %v786, %v787
      %v789 = vsub.f32 1.0, %v788
      %v790 = vmul.f32 %v787, %v789
      %v791 = vadd.f32 %v787, %v790
      %vm792 = vweird.f32 %v786
      %vm793 = vweird.f32 %v787
      %vm794 = vmor %vm792, %vm793
      %v795 = vsel %vm794, %v787, %v791
      %v796 = vand.u32 2147483647, %v786
      %vm797 = vcmp.eq.f32.partialorder %v796, 8.507059e+37
      %v798 = vand.u32 %v786, 2147483648
      %v799 = vor.u32 1.1754944e-38, %v798
      %v800 = vsel %vm797, %v799, %v795
      %v801 = vmul.f32 1.0, %v800
      %v802 = vld [vmem:[#allocation4 + $0x2] sm:$0x1]
      %803 = vmatpush.bf16.msra.mxu0 0
      %804 = vmatpush.bf16.msra.mxu0 0
      %805 = vmatpush.bf16.msra.mxu0 0
      %806 = vmatpush.bf16.msra.mxu0 0
      %807 = vmatpush.bf16.msra.mxu0 0
      %808 = vmatpush.bf16.msra.mxu0 0
      %809 = vmatpush.bf16.msra.mxu0 %v609
      %810 = vmatpush.bf16.msra.mxu0 %v608
      %811 = vmatmul.bf16.gmra.mxu0 %v732
      %v812 = vpop.f32.mrf.mxu0
      %v813 = vadd.f32 %v503, %v812
      %v814 = vpop.f32.mrf.mxu0
      %815 = vdwg.mxu0
      %v816 = vmul.f32 %v780, %v813
      %v817 = vadd.f32 %v802, %v816
      %v818 = vtanh.pop %v817
      %v819 = vsub.f32 1.0, %v801
      %v820 = vmul.f32 %v819, %v818
      %v821 = vmul.f32 %v801, %v727
      %v822 = vadd.f32 %v820, %v821
      %v823 = vmax.f32 %v822, 0.0
      %824 = vst.msk [vmem:[%s381 + $0x2] sm:$0x1] %vm633, %v823
      %v825 = vpack.c.bf16 %v822, %v822
      %v827 = vsel %vm405, %v825, 0
      %829 = vmatpush.bf16.msra.mxu0 0
      %830 = vmatpush.bf16.msra.mxu0 0
      %831 = vmatpush.bf16.msra.mxu0 0
      %832 = vmatpush.bf16.msra.mxu0 0
      %833 = vmatpush.bf16.msra.mxu0 0
      %834 = vmatpush.bf16.msra.mxu0 0
      %835 = vmatpush.bf16.msra.mxu0 %v513
      %836 = vmatpush.bf16.msra.mxu0 %v512
      %837 = vmatmul.bf16.gmra.mxu0 %v827
      %v838 = vpop.f32.mrf.mxu0
      %v839 = vadd.f32 0.0, %v838
      %v840 = vpop.f32.mrf.mxu0
      %841 = vdwg.mxu0
      %842 = vmatpush.bf16.msra.mxu0 0
      %843 = vmatpush.bf16.msra.mxu0 0
      %844 = vmatpush.bf16.msra.mxu0 0
      %845 = vmatpush.bf16.msra.mxu0 0
      %846 = vmatpush.bf16.msra.mxu0 0
      %847 = vmatpush.bf16.msra.mxu0 0
      %848 = vmatpush.bf16.msra.mxu0 %v541
      %849 = vmatpush.bf16.msra.mxu0 %v540
      %850 = vmatmul.bf16.gmra.mxu0 %v827
      %v851 = vpop.f32.mrf.mxu0
      %v852 = vadd.f32 0.0, %v851
      %v853 = vpop.f32.mrf.mxu0
      %854 = vdwg.mxu0
      %v855 = vld [vmem:[#allocation2 + $0x3] sm:$0x1]
      %v856 = vadd.f32 %v855, %v839
      %v857 = vxor.u32 %v856, 2147483648
      %v858 = vmul.f32 %v857, 1.442695
      %v859 = vpow.pop %v858
      %v860 = vadd.f32 %v859, 1.0
      %v861 = vrcp.pop %v860
      %v862 = vmul.f32 %v860, %v861
      %v863 = vsub.f32 1.0, %v862
      %v864 = vmul.f32 %v861, %v863
      %v865 = vadd.f32 %v861, %v864
      %vm866 = vweird.f32 %v860
      %vm867 = vweird.f32 %v861
      %vm868 = vmor %vm866, %vm867
      %v869 = vsel %vm868, %v861, %v865
      %v870 = vand.u32 2147483647, %v860
      %vm871 = vcmp.eq.f32.partialorder %v870, 8.507059e+37
      %v872 = vand.u32 %v860, 2147483648
      %v873 = vor.u32 1.1754944e-38, %v872
      %v874 = vsel %vm871, %v873, %v869
      %v875 = vmul.f32 1.0, %v874
      %v876 = vld [vmem:[#allocation3 + $0x3] sm:$0x1]
      %v877 = vadd.f32 %v876, %v852
      %v878 = vxor.u32 %v877, 2147483648
      %v879 = vmul.f32 %v878, 1.442695
      %v880 = vpow.pop %v879
      %v881 = vadd.f32 %v880, 1.0
      %v882 = vrcp.pop %v881
      %v883 = vmul.f32 %v881, %v882
      %v884 = vsub.f32 1.0, %v883
      %v885 = vmul.f32 %v882, %v884
      %v886 = vadd.f32 %v882, %v885
      %vm887 = vweird.f32 %v881
      %vm888 = vweird.f32 %v882
      %vm889 = vmor %vm887, %vm888
      %v890 = vsel %vm889, %v882, %v886
      %v891 = vand.u32 2147483647, %v881
      %vm892 = vcmp.eq.f32.partialorder %v891, 8.507059e+37
      %v893 = vand.u32 %v881, 2147483648
      %v894 = vor.u32 1.1754944e-38, %v893
      %v895 = vsel %vm892, %v894, %v890
      %v896 = vmul.f32 1.0, %v895
      %v897 = vld [vmem:[#allocation4 + $0x3] sm:$0x1]
      %898 = vmatpush.bf16.msra.mxu0 0
      %899 = vmatpush.bf16.msra.mxu0 0
      %900 = vmatpush.bf16.msra.mxu0 0
      %901 = vmatpush.bf16.msra.mxu0 0
      %902 = vmatpush.bf16.msra.mxu0 0
      %903 = vmatpush.bf16.msra.mxu0 0
      %904 = vmatpush.bf16.msra.mxu0 %v609
      %905 = vmatpush.bf16.msra.mxu0 %v608
      %906 = vmatmul.bf16.gmra.mxu0 %v827
      %v907 = vpop.f32.mrf.mxu0
      %v908 = vadd.f32 %v503, %v907
      %v909 = vpop.f32.mrf.mxu0
      %910 = vdwg.mxu0
      %v911 = vmul.f32 %v875, %v908
      %v912 = vadd.f32 %v897, %v911
      %v913 = vtanh.pop %v912
      %v914 = vsub.f32 1.0, %v896
      %v915 = vmul.f32 %v914, %v913
      %v916 = vmul.f32 %v896, %v822
      %v917 = vadd.f32 %v915, %v916
      %v918 = vmax.f32 %v917, 0.0
      %919 = vst.msk [vmem:[%s381 + $0x3] sm:$0x1] %vm633, %v918
      %v920 = vpack.c.bf16 %v917, %v917
      %v922 = vsel %vm405, %v920, 0
      %924 = vmatpush.bf16.msra.mxu0 0
      %925 = vmatpush.bf16.msra.mxu0 0
      %926 = vmatpush.bf16.msra.mxu0 0
      %927 = vmatpush.bf16.msra.mxu0 0
      %928 = vmatpush.bf16.msra.mxu0 0
      %929 = vmatpush.bf16.msra.mxu0 0
      %930 = vmatpush.bf16.msra.mxu0 %v513
      %931 = vmatpush.bf16.msra.mxu0 %v512
      %932 = vmatmul.bf16.gmra.mxu0 %v922
      %v933 = vpop.f32.mrf.mxu0
      %v934 = vadd.f32 0.0, %v933
      %v935 = vpop.f32.mrf.mxu0
      %936 = vdwg.mxu0
      %937 = vmatpush.bf16.msra.mxu0 0
      %938 = vmatpush.bf16.msra.mxu0 0
      %939 = vmatpush.bf16.msra.mxu0 0
      %940 = vmatpush.bf16.msra.mxu0 0
      %941 = vmatpush.bf16.msra.mxu0 0
      %942 = vmatpush.bf16.msra.mxu0 0
      %943 = vmatpush.bf16.msra.mxu0 %v541
      %944 = vmatpush.bf16.msra.mxu0 %v540
      %945 = vmatmul.bf16.gmra.mxu0 %v922
      %v946 = vpop.f32.mrf.mxu0
      %v947 = vadd.f32 0.0, %v946
      %v948 = vpop.f32.mrf.mxu0
      %949 = vdwg.mxu0
      %v950 = vld [vmem:[#allocation2 + $0x4] sm:$0x1]
      %v951 = vadd.f32 %v950, %v934
      %v952 = vxor.u32 %v951, 2147483648
      %v953 = vmul.f32 %v952, 1.442695
      %v954 = vpow.pop %v953
      %v955 = vadd.f32 %v954, 1.0
      %v956 = vrcp.pop %v955
      %v957 = vmul.f32 %v955, %v956
      %v958 = vsub.f32 1.0, %v957
      %v959 = vmul.f32 %v956, %v958
      %v960 = vadd.f32 %v956, %v959
      %vm961 = vweird.f32 %v955
      %vm962 = vweird.f32 %v956
      %vm963 = vmor %vm961, %vm962
      %v964 = vsel %vm963, %v956, %v960
      %v965 = vand.u32 2147483647, %v955
      %vm966 = vcmp.eq.f32.partialorder %v965, 8.507059e+37
      %v967 = vand.u32 %v955, 2147483648
      %v968 = vor.u32 1.1754944e-38, %v967
      %v969 = vsel %vm966, %v968, %v964
      %v970 = vmul.f32 1.0, %v969
      %v971 = vld [vmem:[#allocation3 + $0x4] sm:$0x1]
      %v972 = vadd.f32 %v971, %v947
      %v973 = vxor.u32 %v972, 2147483648
      %v974 = vmul.f32 %v973, 1.442695
      %v975 = vpow.pop %v974
      %v976 = vadd.f32 %v975, 1.0
      %v977 = vrcp.pop %v976
      %v978 = vmul.f32 %v976, %v977
      %v979 = vsub.f32 1.0, %v978
      %v980 = vmul.f32 %v977, %v979
      %v981 = vadd.f32 %v977, %v980
      %vm982 = vweird.f32 %v976
      %vm983 = vweird.f32 %v977
      %vm984 = vmor %vm982, %vm983
      %v985 = vsel %vm984, %v977, %v981
      %v986 = vand.u32 2147483647, %v976
      %vm987 = vcmp.eq.f32.partialorder %v986, 8.507059e+37
      %v988 = vand.u32 %v976, 2147483648
      %v989 = vor.u32 1.1754944e-38, %v988
      %v990 = vsel %vm987, %v989, %v985
      %v991 = vmul.f32 1.0, %v990
      %v992 = vld [vmem:[#allocation4 + $0x4] sm:$0x1]
      %993 = vmatpush.bf16.msra.mxu0 0
      %994 = vmatpush.bf16.msra.mxu0 0
      %995 = vmatpush.bf16.msra.mxu0 0
      %996 = vmatpush.bf16.msra.mxu0 0
      %997 = vmatpush.bf16.msra.mxu0 0
      %998 = vmatpush.bf16.msra.mxu0 0
      %999 = vmatpush.bf16.msra.mxu0 %v609
      %1000 = vmatpush.bf16.msra.mxu0 %v608
      %1001 = vmatmul.bf16.gmra.mxu0 %v922
      %v1002 = vpop.f32.mrf.mxu0
      %v1003 = vadd.f32 %v503, %v1002
      %v1004 = vpop.f32.mrf.mxu0
      %1005 = vdwg.mxu0
      %v1006 = vmul.f32 %v970, %v1003
      %v1007 = vadd.f32 %v992, %v1006
      %v1008 = vtanh.pop %v1007
      %v1009 = vsub.f32 1.0, %v991
      %v1010 = vmul.f32 %v1009, %v1008
      %v1011 = vmul.f32 %v991, %v917
      %v1012 = vadd.f32 %v1010, %v1011
      %v1013 = vmax.f32 %v1012, 0.0
      %1014 = vst.msk [vmem:[%s381 + $0x4] sm:$0x1] %vm633, %v1013
      %v1015 = vpack.c.bf16 %v1012, %v1012
      %v1017 = vsel %vm405, %v1015, 0
      %1019 = vmatpush.bf16.msra.mxu0 0
      %1020 = vmatpush.bf16.msra.mxu0 0
      %1021 = vmatpush.bf16.msra.mxu0 0
      %1022 = vmatpush.bf16.msra.mxu0 0
      %1023 = vmatpush.bf16.msra.mxu0 0
      %1024 = vmatpush.bf16.msra.mxu0 0
      %1025 = vmatpush.bf16.msra.mxu0 %v513
      %1026 = vmatpush.bf16.msra.mxu0 %v512
      %1027 = vmatmul.bf16.gmra.mxu0 %v1017
      %v1028 = vpop.f32.mrf.mxu0
      %v1029 = vadd.f32 0.0, %v1028
      %v1030 = vpop.f32.mrf.mxu0
      %1031 = vdwg.mxu0
      %1032 = vmatpush.bf16.msra.mxu0 0
      %1033 = vmatpush.bf16.msra.mxu0 0
      %1034 = vmatpush.bf16.msra.mxu0 0
      %1035 = vmatpush.bf16.msra.mxu0 0
      %1036 = vmatpush.bf16.msra.mxu0 0
      %1037 = vmatpush.bf16.msra.mxu0 0
      %1038 = vmatpush.bf16.msra.mxu0 %v541
      %1039 = vmatpush.bf16.msra.mxu0 %v540
      %1040 = vmatmul.bf16.gmra.mxu0 %v1017
      %v1041 = vpop.f32.mrf.mxu0
      %v1042 = vadd.f32 0.0, %v1041
      %v1043 = vpop.f32.mrf.mxu0
      %1044 = vdwg.mxu0
      %v1045 = vld [vmem:[#allocation2 + $0x5] sm:$0x1]
      %v1046 = vadd.f32 %v1045, %v1029
      %v1047 = vxor.u32 %v1046, 2147483648
      %v1048 = vmul.f32 %v1047, 1.442695
      %v1049 = vpow.pop %v1048
      %v1050 = vadd.f32 %v1049, 1.0
      %v1051 = vrcp.pop %v1050
      %v1052 = vmul.f32 %v1050, %v1051
      %v1053 = vsub.f32 1.0, %v1052
      %v1054 = vmul.f32 %v1051, %v1053
      %v1055 = vadd.f32 %v1051, %v1054
      %vm1056 = vweird.f32 %v1050
      %vm1057 = vweird.f32 %v1051
      %vm1058 = vmor %vm1056, %vm1057
      %v1059 = vsel %vm1058, %v1051, %v1055
      %v1060 = vand.u32 2147483647, %v1050
      %vm1061 = vcmp.eq.f32.partialorder %v1060, 8.507059e+37
      %v1062 = vand.u32 %v1050, 2147483648
      %v1063 = vor.u32 1.1754944e-38, %v1062
      %v1064 = vsel %vm1061, %v1063, %v1059
      %v1065 = vmul.f32 1.0, %v1064
      %v1066 = vld [vmem:[#allocation3 + $0x5] sm:$0x1]
      %v1067 = vadd.f32 %v1066, %v1042
      %v1068 = vxor.u32 %v1067, 2147483648
      %v1069 = vmul.f32 %v1068, 1.442695
      %v1070 = vpow.pop %v1069
      %v1071 = vadd.f32 %v1070, 1.0
      %v1072 = vrcp.pop %v1071
      %v1073 = vmul.f32 %v1071, %v1072
      %v1074 = vsub.f32 1.0, %v1073
      %v1075 = vmul.f32 %v1072, %v1074
      %v1076 = vadd.f32 %v1072, %v1075
      %vm1077 = vweird.f32 %v1071
      %vm1078 = vweird.f32 %v1072
      %vm1079 = vmor %vm1077, %vm1078
      %v1080 = vsel %vm1079, %v1072, %v1076
      %v1081 = vand.u32 2147483647, %v1071
      %vm1082 = vcmp.eq.f32.partialorder %v1081, 8.507059e+37
      %v1083 = vand.u32 %v1071, 2147483648
      %v1084 = vor.u32 1.1754944e-38, %v1083
      %v1085 = vsel %vm1082, %v1084, %v1080
      %v1086 = vmul.f32 1.0, %v1085
      %v1087 = vld [vmem:[#allocation4 + $0x5] sm:$0x1]
      %1088 = vmatpush.bf16.msra.mxu0 0
      %1089 = vmatpush.bf16.msra.mxu0 0
      %1090 = vmatpush.bf16.msra.mxu0 0
      %1091 = vmatpush.bf16.msra.mxu0 0
      %1092 = vmatpush.bf16.msra.mxu0 0
      %1093 = vmatpush.bf16.msra.mxu0 0
      %1094 = vmatpush.bf16.msra.mxu0 %v609
      %1095 = vmatpush.bf16.msra.mxu0 %v608
      %1096 = vmatmul.bf16.gmra.mxu0 %v1017
      %v1097 = vpop.f32.mrf.mxu0
      %v1098 = vadd.f32 %v503, %v1097
      %v1099 = vpop.f32.mrf.mxu0
      %1100 = vdwg.mxu0
      %v1101 = vmul.f32 %v1065, %v1098
      %v1102 = vadd.f32 %v1087, %v1101
      %v1103 = vtanh.pop %v1102
      %v1104 = vsub.f32 1.0, %v1086
      %v1105 = vmul.f32 %v1104, %v1103
      %v1106 = vmul.f32 %v1086, %v1012
      %v1107 = vadd.f32 %v1105, %v1106
      %v1108 = vmax.f32 %v1107, 0.0
      %1109 = vst.msk [vmem:[%s381 + $0x5] sm:$0x1] %vm633, %v1108
      %v1110 = vpack.c.bf16 %v1107, %v1107
      %v1112 = vsel %vm405, %v1110, 0
      %1114 = vmatpush.bf16.msra.mxu0 0
      %1115 = vmatpush.bf16.msra.mxu0 0
      %1116 = vmatpush.bf16.msra.mxu0 0
      %1117 = vmatpush.bf16.msra.mxu0 0
      %1118 = vmatpush.bf16.msra.mxu0 0
      %1119 = vmatpush.bf16.msra.mxu0 0
      %1120 = vmatpush.bf16.msra.mxu0 %v513
      %1121 = vmatpush.bf16.msra.mxu0 %v512
      %1122 = vmatmul.bf16.gmra.mxu0 %v1112
      %v1123 = vpop.f32.mrf.mxu0
      %v1124 = vadd.f32 0.0, %v1123
      %v1125 = vpop.f32.mrf.mxu0
      %1126 = vdwg.mxu0
      %1127 = vmatpush.bf16.msra.mxu0 0
      %1128 = vmatpush.bf16.msra.mxu0 0
      %1129 = vmatpush.bf16.msra.mxu0 0
      %1130 = vmatpush.bf16.msra.mxu0 0
      %1131 = vmatpush.bf16.msra.mxu0 0
      %1132 = vmatpush.bf16.msra.mxu0 0
      %1133 = vmatpush.bf16.msra.mxu0 %v541
      %1134 = vmatpush.bf16.msra.mxu0 %v540
      %1135 = vmatmul.bf16.gmra.mxu0 %v1112
      %v1136 = vpop.f32.mrf.mxu0
      %v1137 = vadd.f32 0.0, %v1136
      %v1138 = vpop.f32.mrf.mxu0
      %1139 = vdwg.mxu0
      %v1140 = vld [vmem:[#allocation2 + $0x6] sm:$0x1]
      %v1141 = vadd.f32 %v1140, %v1124
      %v1142 = vxor.u32 %v1141, 2147483648
      %v1143 = vmul.f32 %v1142, 1.442695
      %v1144 = vpow.pop %v1143
      %v1145 = vadd.f32 %v1144, 1.0
      %v1146 = vrcp.pop %v1145
      %v1147 = vmul.f32 %v1145, %v1146
      %v1148 = vsub.f32 1.0, %v1147
      %v1149 = vmul.f32 %v1146, %v1148
      %v1150 = vadd.f32 %v1146, %v1149
      %vm1151 = vweird.f32 %v1145
      %vm1152 = vweird.f32 %v1146
      %vm1153 = vmor %vm1151, %vm1152
      %v1154 = vsel %vm1153, %v1146, %v1150
      %v1155 = vand.u32 2147483647, %v1145
      %vm1156 = vcmp.eq.f32.partialorder %v1155, 8.507059e+37
      %v1157 = vand.u32 %v1145, 2147483648
      %v1158 = vor.u32 1.1754944e-38, %v1157
      %v1159 = vsel %vm1156, %v1158, %v1154
      %v1160 = vmul.f32 1.0, %v1159
      %v1161 = vld [vmem:[#allocation3 + $0x6] sm:$0x1]
      %v1162 = vadd.f32 %v1161, %v1137
      %v1163 = vxor.u32 %v1162, 2147483648
      %v1164 = vmul.f32 %v1163, 1.442695
      %v1165 = vpow.pop %v1164
      %v1166 = vadd.f32 %v1165, 1.0
      %v1167 = vrcp.pop %v1166
      %v1168 = vmul.f32 %v1166, %v1167
      %v1169 = vsub.f32 1.0, %v1168
      %v1170 = vmul.f32 %v1167, %v1169
      %v1171 = vadd.f32 %v1167, %v1170
      %vm1172 = vweird.f32 %v1166
      %vm1173 = vweird.f32 %v1167
      %vm1174 = vmor %vm1172, %vm1173
      %v1175 = vsel %vm1174, %v1167, %v1171
      %v1176 = vand.u32 2147483647, %v1166
      %vm1177 = vcmp.eq.f32.partialorder %v1176, 8.507059e+37
      %v1178 = vand.u32 %v1166, 2147483648
      %v1179 = vor.u32 1.1754944e-38, %v1178
      %v1180 = vsel %vm1177, %v1179, %v1175
      %v1181 = vmul.f32 1.0, %v1180
      %v1182 = vld [vmem:[#allocation4 + $0x6] sm:$0x1]
      %1183 = vmatpush.bf16.msra.mxu0 0
      %1184 = vmatpush.bf16.msra.mxu0 0
      %1185 = vmatpush.bf16.msra.mxu0 0
      %1186 = vmatpush.bf16.msra.mxu0 0
      %1187 = vmatpush.bf16.msra.mxu0 0
      %1188 = vmatpush.bf16.msra.mxu0 0
      %1189 = vmatpush.bf16.msra.mxu0 %v609
      %1190 = vmatpush.bf16.msra.mxu0 %v608
      %1191 = vmatmul.bf16.gmra.mxu0 %v1112
      %v1192 = vpop.f32.mrf.mxu0
      %v1193 = vadd.f32 %v503, %v1192
      %v1194 = vpop.f32.mrf.mxu0
      %1195 = vdwg.mxu0
      %v1196 = vmul.f32 %v1160, %v1193
      %v1197 = vadd.f32 %v1182, %v1196
      %v1198 = vtanh.pop %v1197
      %v1199 = vsub.f32 1.0, %v1181
      %v1200 = vmul.f32 %v1199, %v1198
      %v1201 = vmul.f32 %v1181, %v1107
      %v1202 = vadd.f32 %v1200, %v1201
      %v1203 = vmax.f32 %v1202, 0.0
      %1204 = vst.msk [vmem:[%s381 + $0x6] sm:$0x1] %vm633, %v1203
      %v1205 = vpack.c.bf16 %v1202, %v1202
      %v1207 = vsel %vm405, %v1205, 0
      %1209 = vmatpush.bf16.msra.mxu0 0
      %1210 = vmatpush.bf16.msra.mxu0 0
      %1211 = vmatpush.bf16.msra.mxu0 0
      %1212 = vmatpush.bf16.msra.mxu0 0
      %1213 = vmatpush.bf16.msra.mxu0 0
      %1214 = vmatpush.bf16.msra.mxu0 0
      %1215 = vmatpush.bf16.msra.mxu0 %v513
      %1216 = vmatpush.bf16.msra.mxu0 %v512
      %1217 = vmatmul.bf16.gmra.mxu0 %v1207
      %v1218 = vpop.f32.mrf.mxu0
      %v1219 = vadd.f32 0.0, %v1218
      %v1220 = vpop.f32.mrf.mxu0
      %1221 = vdwg.mxu0
      %1222 = vmatpush.bf16.msra.mxu0 0
      %1223 = vmatpush.bf16.msra.mxu0 0
      %1224 = vmatpush.bf16.msra.mxu0 0
      %1225 = vmatpush.bf16.msra.mxu0 0
      %1226 = vmatpush.bf16.msra.mxu0 0
      %1227 = vmatpush.bf16.msra.mxu0 0
      %1228 = vmatpush.bf16.msra.mxu0 %v541
      %1229 = vmatpush.bf16.msra.mxu0 %v540
      %1230 = vmatmul.bf16.gmra.mxu0 %v1207
      %v1231 = vpop.f32.mrf.mxu0
      %v1232 = vadd.f32 0.0, %v1231
      %v1233 = vpop.f32.mrf.mxu0
      %1234 = vdwg.mxu0
      %v1235 = vld [vmem:[#allocation2 + $0x7] sm:$0x1]
      %v1236 = vadd.f32 %v1235, %v1219
      %v1237 = vxor.u32 %v1236, 2147483648
      %v1238 = vmul.f32 %v1237, 1.442695
      %v1239 = vpow.pop %v1238
      %v1240 = vadd.f32 %v1239, 1.0
      %v1241 = vrcp.pop %v1240
      %v1242 = vmul.f32 %v1240, %v1241
      %v1243 = vsub.f32 1.0, %v1242
      %v1244 = vmul.f32 %v1241, %v1243
      %v1245 = vadd.f32 %v1241, %v1244
      %vm1246 = vweird.f32 %v1240
      %vm1247 = vweird.f32 %v1241
      %vm1248 = vmor %vm1246, %vm1247
      %v1249 = vsel %vm1248, %v1241, %v1245
      %v1250 = vand.u32 2147483647, %v1240
      %vm1251 = vcmp.eq.f32.partialorder %v1250, 8.507059e+37
      %v1252 = vand.u32 %v1240, 2147483648
      %v1253 = vor.u32 1.1754944e-38, %v1252
      %v1254 = vsel %vm1251, %v1253, %v1249
      %v1255 = vmul.f32 1.0, %v1254
      %v1256 = vld [vmem:[#allocation3 + $0x7] sm:$0x1]
      %v1257 = vadd.f32 %v1256, %v1232
      %v1258 = vxor.u32 %v1257, 2147483648
      %v1259 = vmul.f32 %v1258, 1.442695
      %v1260 = vpow.pop %v1259
      %v1261 = vadd.f32 %v1260, 1.0
      %v1262 = vrcp.pop %v1261
      %v1263 = vmul.f32 %v1261, %v1262
      %v1264 = vsub.f32 1.0, %v1263
      %v1265 = vmul.f32 %v1262, %v1264
      %v1266 = vadd.f32 %v1262, %v1265
      %vm1267 = vweird.f32 %v1261
      %vm1268 = vweird.f32 %v1262
      %vm1269 = vmor %vm1267, %vm1268
      %v1270 = vsel %vm1269, %v1262, %v1266
      %v1271 = vand.u32 2147483647, %v1261
      %vm1272 = vcmp.eq.f32.partialorder %v1271, 8.507059e+37
      %v1273 = vand.u32 %v1261, 2147483648
      %v1274 = vor.u32 1.1754944e-38, %v1273
      %v1275 = vsel %vm1272, %v1274, %v1270
      %v1276 = vmul.f32 1.0, %v1275
      %v1277 = vld [vmem:[#allocation4 + $0x7] sm:$0x1]
      %1278 = vmatpush.bf16.msra.mxu0 0
      %1279 = vmatpush.bf16.msra.mxu0 0
      %1280 = vmatpush.bf16.msra.mxu0 0
      %1281 = vmatpush.bf16.msra.mxu0 0
      %1282 = vmatpush.bf16.msra.mxu0 0
      %1283 = vmatpush.bf16.msra.mxu0 0
      %1284 = vmatpush.bf16.msra.mxu0 %v609
      %1285 = vmatpush.bf16.msra.mxu0 %v608
      %1286 = vmatmul.bf16.gmra.mxu0 %v1207
      %v1287 = vpop.f32.mrf.mxu0
      %v1288 = vadd.f32 %v503, %v1287
      %v1289 = vpop.f32.mrf.mxu0
      %1290 = vdwg.mxu0
      %v1291 = vmul.f32 %v1255, %v1288
      %v1292 = vadd.f32 %v1277, %v1291
      %v1293 = vtanh.pop %v1292
      %v1294 = vsub.f32 1.0, %v1276
      %v1295 = vmul.f32 %v1294, %v1293
      %v1296 = vmul.f32 %v1276, %v1202
      %v1297 = vadd.f32 %v1295, %v1296
      %v1298 = vmax.f32 %v1297, 0.0
      %1299 = vst.msk [vmem:[%s381 + $0x7] sm:$0x1] %vm633, %v1298
      %p1300 = scmp.lt.s32.totalorder %s22, 1
      %s1301 = scalar_select %p1300, %s22, 1
      %s1302 = smul.addr %s1301, 8
      %s1303 = scalar_lea.vmem %s11, %s1302
      // Predicated region
      $region65: #{generator_forward.8} parent=63 // pred_check
        %p1304 = pneg %p276
      $region66: #{generator_forward.8} parent=63 // pred_check_branch
        %1306 = sbr.rel (%p1304) target = $region68
      $region67: #{generator_forward.8} parent=63 // pred_region
        _
      $region68: #{generator_forward.8} parent=63 // pred_fallthru
        _
    $region64: #{generator_forward.8} parent=5 // pred_fallthru
      _
    %p1307 = scmp.le.s32.totalorder 2, %s17
    // Predicated region
    $region69: #{generator_forward.8} parent=5 // pred_check
      %p1308 = pneg %p1307
    $region70: #{generator_forward.8} parent=5 // pred_check_branch
      %1310 = sbr.rel (%p1308) target = $region72
    $region71: #{generator_forward.8} parent=5 // pred_region
      %s1311 = ssub.s32 %s17, 2
      // Predicated region
      $region73: #{generator_forward.8} parent=71 // pred_check
        %p1312 = pneg %p282
      $region74: #{generator_forward.8} parent=71 // pred_check_branch
        %1314 = sbr.rel (%p1312) target = $region76
      $region75: #{generator_forward.8} parent=71 // pred_region
        %p1315 = scmp.lt.s32.totalorder %s23, 1
        %s1316 = scalar_select %p1315, %s23, 1
        %s1317 = smul.addr %s1316, 8
        %s1318 = scalar_lea.vmem %s11, %s1317
      $region76: #{generator_forward.8} parent=71 // pred_fallthru
        _
    $region72: #{generator_forward.8} parent=5 // pred_fallthru
      _
  $region6: #{generator_forward.8} parent=0 // loop_footer
    %s21 = sadd.s32 1, %s17
  $region7: #{generator_forward.8} parent=0 // loop_footer_branch
    %16 = sbr.rel target = $region3
  $region8: #{generator_forward.8} parent=0 // loop_exit
    _

</llo_original>
